<compile_context>
chip_gen: v7x
topology: tpu7x:2x2x1
jax: 0.10.0
libtpu: 0.0.40
codegen_flags: <defaults>
</compile_context>

<pallas_src>
import functools
import math

import jax
import jax.numpy as jnp
from jax import lax
from jax.experimental import pallas as pl
from jax.experimental.pallas import tpu as pltpu


# ----------------------------------------------------------------------------
# Fused kernel: stacked LSTM (time loop in-kernel) + final FC epilogue.
# ----------------------------------------------------------------------------
def make_fused_kernel(num_layers, hidden_dim, seq_len):
    H = hidden_dim
    T = seq_len

    def kernel(*refs):
        # refs layout:
        #   x_ref, [w_ih_t, w_hh_t, bias] * num_layers, fc_w_t, fc_b, out_ref
        x_ref = refs[0]
        layer_refs = refs[1:1 + 3 * num_layers]
        fcw_ref = refs[1 + 3 * num_layers]   # (H, O)
        fcb_ref = refs[2 + 3 * num_layers]   # (1, O)
        out_ref = refs[3 + 3 * num_layers]   # (B_pad, O)

        B = x_ref.shape[1]

        # Hoist all weights / biases into values once (kept in vregs across the
        # whole recurrence -- no per-step loads, no in-kernel transposes).
        w_ih = [layer_refs[3 * l][...] for l in range(num_layers)]      # (D_in, 4H)
        w_hh = [layer_refs[3 * l + 1][...] for l in range(num_layers)]  # (H, 4H)
        bias = [layer_refs[3 * l + 2][...] for l in range(num_layers)]  # (1, 4H)

        zeros = jnp.zeros((B, H), jnp.float32)
        init_carry = tuple(zeros for _ in range(2 * num_layers))  # h0,c0,h1,c1,...

        def step(t, carry):
            inp = x_ref[t]  # (B, D_in) -- dynamic index along leading (time) axis
            new_carry = []
            for l in range(num_layers):
                h = carry[2 * l]
                c = carry[2 * l + 1]
                gates = (
                    jnp.dot(inp, w_ih[l], preferred_element_type=jnp.float32)
                    + jnp.dot(h, w_hh[l], preferred_element_type=jnp.float32)
                    + bias[l]
                )  # (B, 4H)
                i_g = jax.nn.sigmoid(gates[:, 0:H])
                f_g = jax.nn.sigmoid(gates[:, H:2 * H])
                g_g = jnp.tanh(gates[:, 2 * H:3 * H])
                o_g = jax.nn.sigmoid(gates[:, 3 * H:4 * H])
                c_new = f_g * c + i_g * g_g
                h_new = o_g * jnp.tanh(c_new)
                new_carry.append(h_new)
                new_carry.append(c_new)
                inp = h_new  # feed next layer
            return tuple(new_carry)

        final = lax.fori_loop(0, T, step, init_carry, unroll=True)
        h_last = final[2 * (num_layers - 1)]  # last layer's h at t = T-1

        # FC epilogue: out = h_last @ fc_w^T + fc_b  (fc_w already transposed)
        out_ref[...] = (
            jnp.dot(h_last, fcw_ref[...], preferred_element_type=jnp.float32)
            + fcb_ref[...]
        )

    return kernel


# ----------------------------------------------------------------------------
# Model wrapper (layout prep in plain JAX, one pallas_call)
# ----------------------------------------------------------------------------
def init_params(key, input_dim, hidden_dim, num_layers, out_dim=10):
    """Deterministic init mimicking torch uniform(-1/sqrt(H), 1/sqrt(H))."""
    params = {"layers": []}
    bound = 1.0 / math.sqrt(hidden_dim)
    for l in range(num_layers):
        d_in = input_dim if l == 0 else hidden_dim
        key, k1, k2, k3, k4 = jax.random.split(key, 5)
        params["layers"].append({
            "w_ih": jax.random.uniform(k1, (4 * hidden_dim, d_in),
                                       minval=-bound, maxval=bound, dtype=jnp.float32),
            "w_hh": jax.random.uniform(k2, (4 * hidden_dim, hidden_dim),
                                       minval=-bound, maxval=bound, dtype=jnp.float32),
            "b_ih": jax.random.uniform(k3, (4 * hidden_dim,),
                                       minval=-bound, maxval=bound, dtype=jnp.float32),
            "b_hh": jax.random.uniform(k4, (4 * hidden_dim,),
                                       minval=-bound, maxval=bound, dtype=jnp.float32),
        })
    key, k5, k6 = jax.random.split(key, 3)
    fcb = 1.0 / math.sqrt(hidden_dim)
    params["fc_w"] = jax.random.uniform(k5, (out_dim, hidden_dim),
                                        minval=-fcb, maxval=fcb, dtype=jnp.float32)
    params["fc_b"] = jax.random.uniform(k6, (out_dim,),
                                        minval=-fcb, maxval=fcb, dtype=jnp.float32)
    return params


@jax.jit
def simple_lstm_forward(params, x_btd):
    """x_btd: (B, T, input_dim) batch-first, like nn.LSTM(batch_first=True)."""
    B, T, D = x_btd.shape
    num_layers = len(params["layers"])
    H = params["layers"][0]["w_hh"].shape[1]
    O = params["fc_w"].shape[0]

    # Pad batch to a full sublane group (multiple of 8).
    B_pad = max(8, ((B + 7) // 8) * 8)

    x_tbd = jnp.transpose(x_btd, (1, 0, 2)).astype(jnp.float32)  # (T, B, D)
    if B_pad != B:
        x_tbd = jnp.pad(x_tbd, ((0, 0), (0, B_pad - B), (0, 0)))

    inputs = [x_tbd]
    in_specs = [pl.BlockSpec((T, B_pad, D), lambda i: (0, 0, 0))]

    for layer in params["layers"]:
        w_ih_t = layer["w_ih"].T.astype(jnp.float32)              # (D_in, 4H)
        w_hh_t = layer["w_hh"].T.astype(jnp.float32)              # (H, 4H)
        b = (layer["b_ih"] + layer["b_hh"]).reshape(1, -1).astype(jnp.float32)  # (1, 4H)
        inputs += [w_ih_t, w_hh_t, b]
        in_specs += [
            pl.BlockSpec(w_ih_t.shape, lambda i: (0, 0)),
            pl.BlockSpec(w_hh_t.shape, lambda i: (0, 0)),
            pl.BlockSpec(b.shape, lambda i: (0, 0)),
        ]

    fc_w_t = params["fc_w"].T.astype(jnp.float32)                 # (H, O)
    fc_b = params["fc_b"].reshape(1, -1).astype(jnp.float32)      # (1, O)
    inputs += [fc_w_t, fc_b]
    in_specs += [
        pl.BlockSpec(fc_w_t.shape, lambda i: (0, 0)),
        pl.BlockSpec(fc_b.shape, lambda i: (0, 0)),
    ]

    out = pl.pallas_call(
        make_fused_kernel(num_layers, H, T),
        out_shape=jax.ShapeDtypeStruct((B_pad, O), jnp.float32),
        grid=(1,),
        in_specs=in_specs,
        out_specs=pl.BlockSpec((B_pad, O), lambda i: (0, 0)),
        compiler_params=pltpu.CompilerParams(
            dimension_semantics=("arbitrary",)),
    )(*inputs)

    return out[:B]


# ----------------------------------------------------------------------------
# Pure-JAX reference (for correctness check)
# ----------------------------------------------------------------------------
def reference_forward(params, x_btd):
    h_seq = jnp.transpose(x_btd, (1, 0, 2)).astype(jnp.float32)  # (T, B, D)
    B = x_btd.shape[0]
    for layer in params["layers"]:
        H = layer["w_hh"].shape[1]
        b = layer["b_ih"] + layer["b_hh"]

        def step(carry, x_t):
            h, c = carry
            gates = x_t @ layer["w_ih"].T + h @ layer["w_hh"].T + b
            i_g = jax.nn.sigmoid(gates[:, 0:H])
            f_g = jax.nn.sigmoid(gates[:, H:2 * H])
            g_g = jnp.tanh(gates[:, 2 * H:3 * H])
            o_g = jax.nn.sigmoid(gates[:, 3 * H:4 * H])
            c_new = f_g * c + i_g * g_g
            h_new = o_g * jnp.tanh(c_new)
            return (h_new, c_new), h_new

        init = (jnp.zeros((B, H), jnp.float32), jnp.zeros((B, H), jnp.float32))
        _, h_seq = jax.lax.scan(step, init, h_seq)
    h_last = h_seq[-1]
    return h_last @ params["fc_w"].T + params["fc_b"]


if __name__ == "__main__":
    # Small shapes consistent with the module's forward: x is (batch, seq, input_dim)
    batch, seq_len = 2, 8
    input_dim, hidden_dim, num_layers, num_heads = 16, 32, 2, 4  # num_heads unused in forward

    key = jax.random.PRNGKey(0)
    kx, kp = jax.random.split(key)
    x = jax.random.normal(kx, (batch, seq_len, input_dim), dtype=jnp.float32)
    params = init_params(kp, input_dim, hidden_dim, num_layers, out_dim=10)

    out = simple_lstm_forward(params, x)
    out = jax.block_until_ready(out)

    ref = reference_forward(params, x)
    assert out.shape == (batch, 10), out.shape
    assert jnp.allclose(out, ref, atol=1e-3, rtol=1e-3), (
        f"max abs diff {jnp.max(jnp.abs(out - ref))}")

    print("KERNEL_OK")
</pallas_src>

<mosaic_0001>
module attributes {stable_mosaic.version = 11 : i64} {
  func.func @kernel(%arg0: i32, %arg1: memref<8x8x16xf32, #tpu.memory_space<vmem>>, %arg2: memref<16x128xf32, #tpu.memory_space<vmem>>, %arg3: memref<32x128xf32, #tpu.memory_space<vmem>>, %arg4: memref<1x128xf32, #tpu.memory_space<vmem>>, %arg5: memref<32x128xf32, #tpu.memory_space<vmem>>, %arg6: memref<32x128xf32, #tpu.memory_space<vmem>>, %arg7: memref<1x128xf32, #tpu.memory_space<vmem>>, %arg8: memref<32x10xf32, #tpu.memory_space<vmem>>, %arg9: memref<1x10xf32, #tpu.memory_space<vmem>>, %arg10: memref<8x10xf32, #tpu.memory_space<vmem>>) attributes {dimension_semantics = [#tpu.dimension_semantics<arbitrary>], iteration_bounds = array<i64: 1>, scalar_prefetch = 0 : i64, scratch_operands = 0 : i64, tpu.core_type = #tpu.core_type<tc>, window_params = [{pipeline_mode = #tpu.pipeline_mode<synchronous>, transform_indices = @transform_0, window_bounds = array<i64: 8, 8, 16>}, {pipeline_mode = #tpu.pipeline_mode<synchronous>, transform_indices = @transform_1, window_bounds = array<i64: 16, 128>}, {pipeline_mode = #tpu.pipeline_mode<synchronous>, transform_indices = @transform_2, window_bounds = array<i64: 32, 128>}, {pipeline_mode = #tpu.pipeline_mode<synchronous>, transform_indices = @transform_3, window_bounds = array<i64: 1, 128>}, {pipeline_mode = #tpu.pipeline_mode<synchronous>, transform_indices = @transform_4, window_bounds = array<i64: 32, 128>}, {pipeline_mode = #tpu.pipeline_mode<synchronous>, transform_indices = @transform_5, window_bounds = array<i64: 32, 128>}, {pipeline_mode = #tpu.pipeline_mode<synchronous>, transform_indices = @transform_6, window_bounds = array<i64: 1, 128>}, {pipeline_mode = #tpu.pipeline_mode<synchronous>, transform_indices = @transform_7, window_bounds = array<i64: 32, 10>}, {pipeline_mode = #tpu.pipeline_mode<synchronous>, transform_indices = @transform_8, window_bounds = array<i64: 1, 10>}, {pipeline_mode = #tpu.pipeline_mode<synchronous>, transform_indices = @transform_9, window_bounds = array<i64: 8, 10>}]} {
    %c0 = arith.constant 0 : index
    %c0_0 = arith.constant 0 : index
    %0 = vector.load %arg2[%c0, %c0_0] : memref<16x128xf32, #tpu.memory_space<vmem>>, vector<16x128xf32>
    %c0_1 = arith.constant 0 : index
    %c0_2 = arith.constant 0 : index
    %1 = vector.load %arg5[%c0_1, %c0_2] : memref<32x128xf32, #tpu.memory_space<vmem>>, vector<32x128xf32>
    %c0_3 = arith.constant 0 : index
    %c0_4 = arith.constant 0 : index
    %2 = vector.load %arg3[%c0_3, %c0_4] : memref<32x128xf32, #tpu.memory_space<vmem>>, vector<32x128xf32>
    %c0_5 = arith.constant 0 : index
    %c0_6 = arith.constant 0 : index
    %3 = vector.load %arg6[%c0_5, %c0_6] : memref<32x128xf32, #tpu.memory_space<vmem>>, vector<32x128xf32>
    %c0_7 = arith.constant 0 : index
    %c0_8 = arith.constant 0 : index
    %4 = vector.load %arg4[%c0_7, %c0_8] : memref<1x128xf32, #tpu.memory_space<vmem>>, vector<1x128xf32>
    %c0_9 = arith.constant 0 : index
    %c0_10 = arith.constant 0 : index
    %5 = vector.load %arg7[%c0_9, %c0_10] : memref<1x128xf32, #tpu.memory_space<vmem>>, vector<1x128xf32>
    %cst = arith.constant 0.000000e+00 : f32
    %6 = vector.broadcast %cst : f32 to vector<8x32xf32>
    %c0_i32 = arith.constant 0 : i32
    %7 = arith.index_cast %c0_i32 : i32 to index
    %c0_11 = arith.constant 0 : index
    %c0_12 = arith.constant 0 : index
    %8 = vector.load %arg1[%7, %c0_11, %c0_12] : memref<8x8x16xf32, #tpu.memory_space<vmem>>, vector<1x8x16xf32>
    %9 = vector.shape_cast %8 : vector<1x8x16xf32> to vector<8x16xf32>
    %cst_13 = arith.constant dense<0.000000e+00> : vector<8x128xf32>
    %10 = tpu.matmul %9, %0, %cst_13 {dimension_numbers = #tpu.dot_dimension_numbers<[1], [0], [0], [1], [0, 0, 1, 1], [], []>} : vector<8x16xf32>, vector<16x128xf32>, vector<8x128xf32> -> vector<8x128xf32>
    %cst_14 = arith.constant dense<0.000000e+00> : vector<8x128xf32>
    %11 = tpu.matmul %6, %2, %cst_14 {dimension_numbers = #tpu.dot_dimension_numbers<[1], [0], [0], [1], [0, 0, 1, 1], [], []>} : vector<8x32xf32>, vector<32x128xf32>, vector<8x128xf32> -> vector<8x128xf32>
    %12 = arith.addf %10, %11 : vector<8x128xf32>
    %13 = vector.broadcast %4 : vector<1x128xf32> to vector<8x128xf32>
    %14 = arith.addf %12, %13 : vector<8x128xf32>
    %15 = vector.extract_strided_slice %14 {offsets = [0, 0], sizes = [8, 32], strides = [1, 1]} : vector<8x128xf32> to vector<8x32xf32>
    %16 = arith.negf %15 : vector<8x32xf32>
    %17 = math.exp %16 : vector<8x32xf32>
    %cst_15 = arith.constant 1.000000e+00 : f32
    %18 = vector.broadcast %cst_15 : f32 to vector<8x32xf32>
    %19 = arith.addf %18, %17 : vector<8x32xf32>
    %20 = arith.divf %18, %19 : vector<8x32xf32>
    %21 = vector.extract_strided_slice %14 {offsets = [0, 32], sizes = [8, 32], strides = [1, 1]} : vector<8x128xf32> to vector<8x32xf32>
    %22 = arith.negf %21 : vector<8x32xf32>
    %23 = math.exp %22 : vector<8x32xf32>
    %cst_16 = arith.constant 1.000000e+00 : f32
    %24 = vector.broadcast %cst_16 : f32 to vector<8x32xf32>
    %25 = arith.addf %24, %23 : vector<8x32xf32>
    %26 = arith.divf %24, %25 : vector<8x32xf32>
    %27 = vector.extract_strided_slice %14 {offsets = [0, 64], sizes = [8, 32], strides = [1, 1]} : vector<8x128xf32> to vector<8x32xf32>
    %28 = math.tanh %27 : vector<8x32xf32>
    %29 = vector.extract_strided_slice %14 {offsets = [0, 96], sizes = [8, 32], strides = [1, 1]} : vector<8x128xf32> to vector<8x32xf32>
    %30 = arith.negf %29 : vector<8x32xf32>
    %31 = math.exp %30 : vector<8x32xf32>
    %cst_17 = arith.constant 1.000000e+00 : f32
    %32 = vector.broadcast %cst_17 : f32 to vector<8x32xf32>
    %33 = arith.addf %32, %31 : vector<8x32xf32>
    %34 = arith.divf %32, %33 : vector<8x32xf32>
    %35 = arith.mulf %26, %6 : vector<8x32xf32>
    %36 = arith.mulf %20, %28 : vector<8x32xf32>
    %37 = arith.addf %35, %36 : vector<8x32xf32>
    %38 = math.tanh %37 : vector<8x32xf32>
    %39 = arith.mulf %34, %38 : vector<8x32xf32>
    %cst_18 = arith.constant dense<0.000000e+00> : vector<8x128xf32>
    %40 = tpu.matmul %39, %1, %cst_18 {dimension_numbers = #tpu.dot_dimension_numbers<[1], [0], [0], [1], [0, 0, 1, 1], [], []>} : vector<8x32xf32>, vector<32x128xf32>, vector<8x128xf32> -> vector<8x128xf32>
    %cst_19 = arith.constant dense<0.000000e+00> : vector<8x128xf32>
    %41 = tpu.matmul %6, %3, %cst_19 {dimension_numbers = #tpu.dot_dimension_numbers<[1], [0], [0], [1], [0, 0, 1, 1], [], []>} : vector<8x32xf32>, vector<32x128xf32>, vector<8x128xf32> -> vector<8x128xf32>
    %42 = arith.addf %40, %41 : vector<8x128xf32>
    %43 = vector.broadcast %5 : vector<1x128xf32> to vector<8x128xf32>
    %44 = arith.addf %42, %43 : vector<8x128xf32>
    %45 = vector.extract_strided_slice %44 {offsets = [0, 0], sizes = [8, 32], strides = [1, 1]} : vector<8x128xf32> to vector<8x32xf32>
    %46 = arith.negf %45 : vector<8x32xf32>
    %47 = math.exp %46 : vector<8x32xf32>
    %cst_20 = arith.constant 1.000000e+00 : f32
    %48 = vector.broadcast %cst_20 : f32 to vector<8x32xf32>
    %49 = arith.addf %48, %47 : vector<8x32xf32>
    %50 = arith.divf %48, %49 : vector<8x32xf32>
    %51 = vector.extract_strided_slice %44 {offsets = [0, 32], sizes = [8, 32], strides = [1, 1]} : vector<8x128xf32> to vector<8x32xf32>
    %52 = arith.negf %51 : vector<8x32xf32>
    %53 = math.exp %52 : vector<8x32xf32>
    %cst_21 = arith.constant 1.000000e+00 : f32
    %54 = vector.broadcast %cst_21 : f32 to vector<8x32xf32>
    %55 = arith.addf %54, %53 : vector<8x32xf32>
    %56 = arith.divf %54, %55 : vector<8x32xf32>
    %57 = vector.extract_strided_slice %44 {offsets = [0, 64], sizes = [8, 32], strides = [1, 1]} : vector<8x128xf32> to vector<8x32xf32>
    %58 = math.tanh %57 : vector<8x32xf32>
    %59 = vector.extract_strided_slice %44 {offsets = [0, 96], sizes = [8, 32], strides = [1, 1]} : vector<8x128xf32> to vector<8x32xf32>
    %60 = arith.negf %59 : vector<8x32xf32>
    %61 = math.exp %60 : vector<8x32xf32>
    %cst_22 = arith.constant 1.000000e+00 : f32
    %62 = vector.broadcast %cst_22 : f32 to vector<8x32xf32>
    %63 = arith.addf %62, %61 : vector<8x32xf32>
    %64 = arith.divf %62, %63 : vector<8x32xf32>
    %65 = arith.mulf %56, %6 : vector<8x32xf32>
    %66 = arith.mulf %50, %58 : vector<8x32xf32>
    %67 = arith.addf %65, %66 : vector<8x32xf32>
    %68 = math.tanh %67 : vector<8x32xf32>
    %69 = arith.mulf %64, %68 : vector<8x32xf32>
    %c1_i32 = arith.constant 1 : i32
    %70 = arith.index_cast %c1_i32 : i32 to index
    %c0_23 = arith.constant 0 : index
    %c0_24 = arith.constant 0 : index
    %71 = vector.load %arg1[%70, %c0_23, %c0_24] : memref<8x8x16xf32, #tpu.memory_space<vmem>>, vector<1x8x16xf32>
    %72 = vector.shape_cast %71 : vector<1x8x16xf32> to vector<8x16xf32>
    %cst_25 = arith.constant dense<0.000000e+00> : vector<8x128xf32>
    %73 = tpu.matmul %72, %0, %cst_25 {dimension_numbers = #tpu.dot_dimension_numbers<[1], [0], [0], [1], [0, 0, 1, 1], [], []>} : vector<8x16xf32>, vector<16x128xf32>, vector<8x128xf32> -> vector<8x128xf32>
    %cst_26 = arith.constant dense<0.000000e+00> : vector<8x128xf32>
    %74 = tpu.matmul %39, %2, %cst_26 {dimension_numbers = #tpu.dot_dimension_numbers<[1], [0], [0], [1], [0, 0, 1, 1], [], []>} : vector<8x32xf32>, vector<32x128xf32>, vector<8x128xf32> -> vector<8x128xf32>
    %75 = arith.addf %73, %74 : vector<8x128xf32>
    %76 = vector.broadcast %4 : vector<1x128xf32> to vector<8x128xf32>
    %77 = arith.addf %75, %76 : vector<8x128xf32>
    %78 = vector.extract_strided_slice %77 {offsets = [0, 0], sizes = [8, 32], strides = [1, 1]} : vector<8x128xf32> to vector<8x32xf32>
    %79 = arith.negf %78 : vector<8x32xf32>
    %80 = math.exp %79 : vector<8x32xf32>
    %cst_27 = arith.constant 1.000000e+00 : f32
    %81 = vector.broadcast %cst_27 : f32 to vector<8x32xf32>
    %82 = arith.addf %81, %80 : vector<8x32xf32>
    %83 = arith.divf %81, %82 : vector<8x32xf32>
    %84 = vector.extract_strided_slice %77 {offsets = [0, 32], sizes = [8, 32], strides = [1, 1]} : vector<8x128xf32> to vector<8x32xf32>
    %85 = arith.negf %84 : vector<8x32xf32>
    %86 = math.exp %85 : vector<8x32xf32>
    %cst_28 = arith.constant 1.000000e+00 : f32
    %87 = vector.broadcast %cst_28 : f32 to vector<8x32xf32>
    %88 = arith.addf %87, %86 : vector<8x32xf32>
    %89 = arith.divf %87, %88 : vector<8x32xf32>
    %90 = vector.extract_strided_slice %77 {offsets = [0, 64], sizes = [8, 32], strides = [1, 1]} : vector<8x128xf32> to vector<8x32xf32>
    %91 = math.tanh %90 : vector<8x32xf32>
    %92 = vector.extract_strided_slice %77 {offsets = [0, 96], sizes = [8, 32], strides = [1, 1]} : vector<8x128xf32> to vector<8x32xf32>
    %93 = arith.negf %92 : vector<8x32xf32>
    %94 = math.exp %93 : vector<8x32xf32>
    %cst_29 = arith.constant 1.000000e+00 : f32
    %95 = vector.broadcast %cst_29 : f32 to vector<8x32xf32>
    %96 = arith.addf %95, %94 : vector<8x32xf32>
    %97 = arith.divf %95, %96 : vector<8x32xf32>
    %98 = arith.mulf %89, %37 : vector<8x32xf32>
    %99 = arith.mulf %83, %91 : vector<8x32xf32>
    %100 = arith.addf %98, %99 : vector<8x32xf32>
    %101 = math.tanh %100 : vector<8x32xf32>
    %102 = arith.mulf %97, %101 : vector<8x32xf32>
    %cst_30 = arith.constant dense<0.000000e+00> : vector<8x128xf32>
    %103 = tpu.matmul %102, %1, %cst_30 {dimension_numbers = #tpu.dot_dimension_numbers<[1], [0], [0], [1], [0, 0, 1, 1], [], []>} : vector<8x32xf32>, vector<32x128xf32>, vector<8x128xf32> -> vector<8x128xf32>
    %cst_31 = arith.constant dense<0.000000e+00> : vector<8x128xf32>
    %104 = tpu.matmul %69, %3, %cst_31 {dimension_numbers = #tpu.dot_dimension_numbers<[1], [0], [0], [1], [0, 0, 1, 1], [], []>} : vector<8x32xf32>, vector<32x128xf32>, vector<8x128xf32> -> vector<8x128xf32>
    %105 = arith.addf %103, %104 : vector<8x128xf32>
    %106 = vector.broadcast %5 : vector<1x128xf32> to vector<8x128xf32>
    %107 = arith.addf %105, %106 : vector<8x128xf32>
    %108 = vector.extract_strided_slice %107 {offsets = [0, 0], sizes = [8, 32], strides = [1, 1]} : vector<8x128xf32> to vector<8x32xf32>
    %109 = arith.negf %108 : vector<8x32xf32>
    %110 = math.exp %109 : vector<8x32xf32>
    %cst_32 = arith.constant 1.000000e+00 : f32
    %111 = vector.broadcast %cst_32 : f32 to vector<8x32xf32>
    %112 = arith.addf %111, %110 : vector<8x32xf32>
    %113 = arith.divf %111, %112 : vector<8x32xf32>
    %114 = vector.extract_strided_slice %107 {offsets = [0, 32], sizes = [8, 32], strides = [1, 1]} : vector<8x128xf32> to vector<8x32xf32>
    %115 = arith.negf %114 : vector<8x32xf32>
    %116 = math.exp %115 : vector<8x32xf32>
    %cst_33 = arith.constant 1.000000e+00 : f32
    %117 = vector.broadcast %cst_33 : f32 to vector<8x32xf32>
    %118 = arith.addf %117, %116 : vector<8x32xf32>
    %119 = arith.divf %117, %118 : vector<8x32xf32>
    %120 = vector.extract_strided_slice %107 {offsets = [0, 64], sizes = [8, 32], strides = [1, 1]} : vector<8x128xf32> to vector<8x32xf32>
    %121 = math.tanh %120 : vector<8x32xf32>
    %122 = vector.extract_strided_slice %107 {offsets = [0, 96], sizes = [8, 32], strides = [1, 1]} : vector<8x128xf32> to vector<8x32xf32>
    %123 = arith.negf %122 : vector<8x32xf32>
    %124 = math.exp %123 : vector<8x32xf32>
    %cst_34 = arith.constant 1.000000e+00 : f32
    %125 = vector.broadcast %cst_34 : f32 to vector<8x32xf32>
    %126 = arith.addf %125, %124 : vector<8x32xf32>
    %127 = arith.divf %125, %126 : vector<8x32xf32>
    %128 = arith.mulf %119, %67 : vector<8x32xf32>
    %129 = arith.mulf %113, %121 : vector<8x32xf32>
    %130 = arith.addf %128, %129 : vector<8x32xf32>
    %131 = math.tanh %130 : vector<8x32xf32>
    %132 = arith.mulf %127, %131 : vector<8x32xf32>
    %c2_i32 = arith.constant 2 : i32
    %133 = arith.index_cast %c2_i32 : i32 to index
    %c0_35 = arith.constant 0 : index
    %c0_36 = arith.constant 0 : index
    %134 = vector.load %arg1[%133, %c0_35, %c0_36] : memref<8x8x16xf32, #tpu.memory_space<vmem>>, vector<1x8x16xf32>
    %135 = vector.shape_cast %134 : vector<1x8x16xf32> to vector<8x16xf32>
    %cst_37 = arith.constant dense<0.000000e+00> : vector<8x128xf32>
    %136 = tpu.matmul %135, %0, %cst_37 {dimension_numbers = #tpu.dot_dimension_numbers<[1], [0], [0], [1], [0, 0, 1, 1], [], []>} : vector<8x16xf32>, vector<16x128xf32>, vector<8x128xf32> -> vector<8x128xf32>
    %cst_38 = arith.constant dense<0.000000e+00> : vector<8x128xf32>
    %137 = tpu.matmul %102, %2, %cst_38 {dimension_numbers = #tpu.dot_dimension_numbers<[1], [0], [0], [1], [0, 0, 1, 1], [], []>} : vector<8x32xf32>, vector<32x128xf32>, vector<8x128xf32> -> vector<8x128xf32>
    %138 = arith.addf %136, %137 : vector<8x128xf32>
    %139 = vector.broadcast %4 : vector<1x128xf32> to vector<8x128xf32>
    %140 = arith.addf %138, %139 : vector<8x128xf32>
    %141 = vector.extract_strided_slice %140 {offsets = [0, 0], sizes = [8, 32], strides = [1, 1]} : vector<8x128xf32> to vector<8x32xf32>
    %142 = arith.negf %141 : vector<8x32xf32>
    %143 = math.exp %142 : vector<8x32xf32>
    %cst_39 = arith.constant 1.000000e+00 : f32
    %144 = vector.broadcast %cst_39 : f32 to vector<8x32xf32>
    %145 = arith.addf %144, %143 : vector<8x32xf32>
    %146 = arith.divf %144, %145 : vector<8x32xf32>
    %147 = vector.extract_strided_slice %140 {offsets = [0, 32], sizes = [8, 32], strides = [1, 1]} : vector<8x128xf32> to vector<8x32xf32>
    %148 = arith.negf %147 : vector<8x32xf32>
    %149 = math.exp %148 : vector<8x32xf32>
    %cst_40 = arith.constant 1.000000e+00 : f32
    %150 = vector.broadcast %cst_40 : f32 to vector<8x32xf32>
    %151 = arith.addf %150, %149 : vector<8x32xf32>
    %152 = arith.divf %150, %151 : vector<8x32xf32>
    %153 = vector.extract_strided_slice %140 {offsets = [0, 64], sizes = [8, 32], strides = [1, 1]} : vector<8x128xf32> to vector<8x32xf32>
    %154 = math.tanh %153 : vector<8x32xf32>
    %155 = vector.extract_strided_slice %140 {offsets = [0, 96], sizes = [8, 32], strides = [1, 1]} : vector<8x128xf32> to vector<8x32xf32>
    %156 = arith.negf %155 : vector<8x32xf32>
    %157 = math.exp %156 : vector<8x32xf32>
    %cst_41 = arith.constant 1.000000e+00 : f32
    %158 = vector.broadcast %cst_41 : f32 to vector<8x32xf32>
    %159 = arith.addf %158, %157 : vector<8x32xf32>
    %160 = arith.divf %158, %159 : vector<8x32xf32>
    %161 = arith.mulf %152, %100 : vector<8x32xf32>
    %162 = arith.mulf %146, %154 : vector<8x32xf32>
    %163 = arith.addf %161, %162 : vector<8x32xf32>
    %164 = math.tanh %163 : vector<8x32xf32>
    %165 = arith.mulf %160, %164 : vector<8x32xf32>
    %cst_42 = arith.constant dense<0.000000e+00> : vector<8x128xf32>
    %166 = tpu.matmul %165, %1, %cst_42 {dimension_numbers = #tpu.dot_dimension_numbers<[1], [0], [0], [1], [0, 0, 1, 1], [], []>} : vector<8x32xf32>, vector<32x128xf32>, vector<8x128xf32> -> vector<8x128xf32>
    %cst_43 = arith.constant dense<0.000000e+00> : vector<8x128xf32>
    %167 = tpu.matmul %132, %3, %cst_43 {dimension_numbers = #tpu.dot_dimension_numbers<[1], [0], [0], [1], [0, 0, 1, 1], [], []>} : vector<8x32xf32>, vector<32x128xf32>, vector<8x128xf32> -> vector<8x128xf32>
    %168 = arith.addf %166, %167 : vector<8x128xf32>
    %169 = vector.broadcast %5 : vector<1x128xf32> to vector<8x128xf32>
    %170 = arith.addf %168, %169 : vector<8x128xf32>
    %171 = vector.extract_strided_slice %170 {offsets = [0, 0], sizes = [8, 32], strides = [1, 1]} : vector<8x128xf32> to vector<8x32xf32>
    %172 = arith.negf %171 : vector<8x32xf32>
    %173 = math.exp %172 : vector<8x32xf32>
    %cst_44 = arith.constant 1.000000e+00 : f32
    %174 = vector.broadcast %cst_44 : f32 to vector<8x32xf32>
    %175 = arith.addf %174, %173 : vector<8x32xf32>
    %176 = arith.divf %174, %175 : vector<8x32xf32>
    %177 = vector.extract_strided_slice %170 {offsets = [0, 32], sizes = [8, 32], strides = [1, 1]} : vector<8x128xf32> to vector<8x32xf32>
    %178 = arith.negf %177 : vector<8x32xf32>
    %179 = math.exp %178 : vector<8x32xf32>
    %cst_45 = arith.constant 1.000000e+00 : f32
    %180 = vector.broadcast %cst_45 : f32 to vector<8x32xf32>
    %181 = arith.addf %180, %179 : vector<8x32xf32>
    %182 = arith.divf %180, %181 : vector<8x32xf32>
    %183 = vector.extract_strided_slice %170 {offsets = [0, 64], sizes = [8, 32], strides = [1, 1]} : vector<8x128xf32> to vector<8x32xf32>
    %184 = math.tanh %183 : vector<8x32xf32>
    %185 = vector.extract_strided_slice %170 {offsets = [0, 96], sizes = [8, 32], strides = [1, 1]} : vector<8x128xf32> to vector<8x32xf32>
    %186 = arith.negf %185 : vector<8x32xf32>
    %187 = math.exp %186 : vector<8x32xf32>
    %cst_46 = arith.constant 1.000000e+00 : f32
    %188 = vector.broadcast %cst_46 : f32 to vector<8x32xf32>
    %189 = arith.addf %188, %187 : vector<8x32xf32>
    %190 = arith.divf %188, %189 : vector<8x32xf32>
    %191 = arith.mulf %182, %130 : vector<8x32xf32>
    %192 = arith.mulf %176, %184 : vector<8x32xf32>
    %193 = arith.addf %191, %192 : vector<8x32xf32>
    %194 = math.tanh %193 : vector<8x32xf32>
    %195 = arith.mulf %190, %194 : vector<8x32xf32>
    %c3_i32 = arith.constant 3 : i32
    %196 = arith.index_cast %c3_i32 : i32 to index
    %c0_47 = arith.constant 0 : index
    %c0_48 = arith.constant 0 : index
    %197 = vector.load %arg1[%196, %c0_47, %c0_48] : memref<8x8x16xf32, #tpu.memory_space<vmem>>, vector<1x8x16xf32>
    %198 = vector.shape_cast %197 : vector<1x8x16xf32> to vector<8x16xf32>
    %cst_49 = arith.constant dense<0.000000e+00> : vector<8x128xf32>
    %199 = tpu.matmul %198, %0, %cst_49 {dimension_numbers = #tpu.dot_dimension_numbers<[1], [0], [0], [1], [0, 0, 1, 1], [], []>} : vector<8x16xf32>, vector<16x128xf32>, vector<8x128xf32> -> vector<8x128xf32>
    %cst_50 = arith.constant dense<0.000000e+00> : vector<8x128xf32>
    %200 = tpu.matmul %165, %2, %cst_50 {dimension_numbers = #tpu.dot_dimension_numbers<[1], [0], [0], [1], [0, 0, 1, 1], [], []>} : vector<8x32xf32>, vector<32x128xf32>, vector<8x128xf32> -> vector<8x128xf32>
    %201 = arith.addf %199, %200 : vector<8x128xf32>
    %202 = vector.broadcast %4 : vector<1x128xf32> to vector<8x128xf32>
    %203 = arith.addf %201, %202 : vector<8x128xf32>
    %204 = vector.extract_strided_slice %203 {offsets = [0, 0], sizes = [8, 32], strides = [1, 1]} : vector<8x128xf32> to vector<8x32xf32>
    %205 = arith.negf %204 : vector<8x32xf32>
    %206 = math.exp %205 : vector<8x32xf32>
    %cst_51 = arith.constant 1.000000e+00 : f32
    %207 = vector.broadcast %cst_51 : f32 to vector<8x32xf32>
    %208 = arith.addf %207, %206 : vector<8x32xf32>
    %209 = arith.divf %207, %208 : vector<8x32xf32>
    %210 = vector.extract_strided_slice %203 {offsets = [0, 32], sizes = [8, 32], strides = [1, 1]} : vector<8x128xf32> to vector<8x32xf32>
    %211 = arith.negf %210 : vector<8x32xf32>
    %212 = math.exp %211 : vector<8x32xf32>
    %cst_52 = arith.constant 1.000000e+00 : f32
    %213 = vector.broadcast %cst_52 : f32 to vector<8x32xf32>
    %214 = arith.addf %213, %212 : vector<8x32xf32>
    %215 = arith.divf %213, %214 : vector<8x32xf32>
    %216 = vector.extract_strided_slice %203 {offsets = [0, 64], sizes = [8, 32], strides = [1, 1]} : vector<8x128xf32> to vector<8x32xf32>
    %217 = math.tanh %216 : vector<8x32xf32>
    %218 = vector.extract_strided_slice %203 {offsets = [0, 96], sizes = [8, 32], strides = [1, 1]} : vector<8x128xf32> to vector<8x32xf32>
    %219 = arith.negf %218 : vector<8x32xf32>
    %220 = math.exp %219 : vector<8x32xf32>
    %cst_53 = arith.constant 1.000000e+00 : f32
    %221 = vector.broadcast %cst_53 : f32 to vector<8x32xf32>
    %222 = arith.addf %221, %220 : vector<8x32xf32>
    %223 = arith.divf %221, %222 : vector<8x32xf32>
    %224 = arith.mulf %215, %163 : vector<8x32xf32>
    %225 = arith.mulf %209, %217 : vector<8x32xf32>
    %226 = arith.addf %224, %225 : vector<8x32xf32>
    %227 = math.tanh %226 : vector<8x32xf32>
    %228 = arith.mulf %223, %227 : vector<8x32xf32>
    %cst_54 = arith.constant dense<0.000000e+00> : vector<8x128xf32>
    %229 = tpu.matmul %228, %1, %cst_54 {dimension_numbers = #tpu.dot_dimension_numbers<[1], [0], [0], [1], [0, 0, 1, 1], [], []>} : vector<8x32xf32>, vector<32x128xf32>, vector<8x128xf32> -> vector<8x128xf32>
    %cst_55 = arith.constant dense<0.000000e+00> : vector<8x128xf32>
    %230 = tpu.matmul %195, %3, %cst_55 {dimension_numbers = #tpu.dot_dimension_numbers<[1], [0], [0], [1], [0, 0, 1, 1], [], []>} : vector<8x32xf32>, vector<32x128xf32>, vector<8x128xf32> -> vector<8x128xf32>
    %231 = arith.addf %229, %230 : vector<8x128xf32>
    %232 = vector.broadcast %5 : vector<1x128xf32> to vector<8x128xf32>
    %233 = arith.addf %231, %232 : vector<8x128xf32>
    %234 = vector.extract_strided_slice %233 {offsets = [0, 0], sizes = [8, 32], strides = [1, 1]} : vector<8x128xf32> to vector<8x32xf32>
    %235 = arith.negf %234 : vector<8x32xf32>
    %236 = math.exp %235 : vector<8x32xf32>
    %cst_56 = arith.constant 1.000000e+00 : f32
    %237 = vector.broadcast %cst_56 : f32 to vector<8x32xf32>
    %238 = arith.addf %237, %236 : vector<8x32xf32>
    %239 = arith.divf %237, %238 : vector<8x32xf32>
    %240 = vector.extract_strided_slice %233 {offsets = [0, 32], sizes = [8, 32], strides = [1, 1]} : vector<8x128xf32> to vector<8x32xf32>
    %241 = arith.negf %240 : vector<8x32xf32>
    %242 = math.exp %241 : vector<8x32xf32>
    %cst_57 = arith.constant 1.000000e+00 : f32
    %243 = vector.broadcast %cst_57 : f32 to vector<8x32xf32>
    %244 = arith.addf %243, %242 : vector<8x32xf32>
    %245 = arith.divf %243, %244 : vector<8x32xf32>
    %246 = vector.extract_strided_slice %233 {offsets = [0, 64], sizes = [8, 32], strides = [1, 1]} : vector<8x128xf32> to vector<8x32xf32>
    %247 = math.tanh %246 : vector<8x32xf32>
    %248 = vector.extract_strided_slice %233 {offsets = [0, 96], sizes = [8, 32], strides = [1, 1]} : vector<8x128xf32> to vector<8x32xf32>
    %249 = arith.negf %248 : vector<8x32xf32>
    %250 = math.exp %249 : vector<8x32xf32>
    %cst_58 = arith.constant 1.000000e+00 : f32
    %251 = vector.broadcast %cst_58 : f32 to vector<8x32xf32>
    %252 = arith.addf %251, %250 : vector<8x32xf32>
    %253 = arith.divf %251, %252 : vector<8x32xf32>
    %254 = arith.mulf %245, %193 : vector<8x32xf32>
    %255 = arith.mulf %239, %247 : vector<8x32xf32>
    %256 = arith.addf %254, %255 : vector<8x32xf32>
    %257 = math.tanh %256 : vector<8x32xf32>
    %258 = arith.mulf %253, %257 : vector<8x32xf32>
    %c4_i32 = arith.constant 4 : i32
    %259 = arith.index_cast %c4_i32 : i32 to index
    %c0_59 = arith.constant 0 : index
    %c0_60 = arith.constant 0 : index
    %260 = vector.load %arg1[%259, %c0_59, %c0_60] : memref<8x8x16xf32, #tpu.memory_space<vmem>>, vector<1x8x16xf32>
    %261 = vector.shape_cast %260 : vector<1x8x16xf32> to vector<8x16xf32>
    %cst_61 = arith.constant dense<0.000000e+00> : vector<8x128xf32>
    %262 = tpu.matmul %261, %0, %cst_61 {dimension_numbers = #tpu.dot_dimension_numbers<[1], [0], [0], [1], [0, 0, 1, 1], [], []>} : vector<8x16xf32>, vector<16x128xf32>, vector<8x128xf32> -> vector<8x128xf32>
    %cst_62 = arith.constant dense<0.000000e+00> : vector<8x128xf32>
    %263 = tpu.matmul %228, %2, %cst_62 {dimension_numbers = #tpu.dot_dimension_numbers<[1], [0], [0], [1], [0, 0, 1, 1], [], []>} : vector<8x32xf32>, vector<32x128xf32>, vector<8x128xf32> -> vector<8x128xf32>
    %264 = arith.addf %262, %263 : vector<8x128xf32>
    %265 = vector.broadcast %4 : vector<1x128xf32> to vector<8x128xf32>
    %266 = arith.addf %264, %265 : vector<8x128xf32>
    %267 = vector.extract_strided_slice %266 {offsets = [0, 0], sizes = [8, 32], strides = [1, 1]} : vector<8x128xf32> to vector<8x32xf32>
    %268 = arith.negf %267 : vector<8x32xf32>
    %269 = math.exp %268 : vector<8x32xf32>
    %cst_63 = arith.constant 1.000000e+00 : f32
    %270 = vector.broadcast %cst_63 : f32 to vector<8x32xf32>
    %271 = arith.addf %270, %269 : vector<8x32xf32>
    %272 = arith.divf %270, %271 : vector<8x32xf32>
    %273 = vector.extract_strided_slice %266 {offsets = [0, 32], sizes = [8, 32], strides = [1, 1]} : vector<8x128xf32> to vector<8x32xf32>
    %274 = arith.negf %273 : vector<8x32xf32>
    %275 = math.exp %274 : vector<8x32xf32>
    %cst_64 = arith.constant 1.000000e+00 : f32
    %276 = vector.broadcast %cst_64 : f32 to vector<8x32xf32>
    %277 = arith.addf %276, %275 : vector<8x32xf32>
    %278 = arith.divf %276, %277 : vector<8x32xf32>
    %279 = vector.extract_strided_slice %266 {offsets = [0, 64], sizes = [8, 32], strides = [1, 1]} : vector<8x128xf32> to vector<8x32xf32>
    %280 = math.tanh %279 : vector<8x32xf32>
    %281 = vector.extract_strided_slice %266 {offsets = [0, 96], sizes = [8, 32], strides = [1, 1]} : vector<8x128xf32> to vector<8x32xf32>
    %282 = arith.negf %281 : vector<8x32xf32>
    %283 = math.exp %282 : vector<8x32xf32>
    %cst_65 = arith.constant 1.000000e+00 : f32
    %284 = vector.broadcast %cst_65 : f32 to vector<8x32xf32>
    %285 = arith.addf %284, %283 : vector<8x32xf32>
    %286 = arith.divf %284, %285 : vector<8x32xf32>
    %287 = arith.mulf %278, %226 : vector<8x32xf32>
    %288 = arith.mulf %272, %280 : vector<8x32xf32>
    %289 = arith.addf %287, %288 : vector<8x32xf32>
    %290 = math.tanh %289 : vector<8x32xf32>
    %291 = arith.mulf %286, %290 : vector<8x32xf32>
    %cst_66 = arith.constant dense<0.000000e+00> : vector<8x128xf32>
    %292 = tpu.matmul %291, %1, %cst_66 {dimension_numbers = #tpu.dot_dimension_numbers<[1], [0], [0], [1], [0, 0, 1, 1], [], []>} : vector<8x32xf32>, vector<32x128xf32>, vector<8x128xf32> -> vector<8x128xf32>
    %cst_67 = arith.constant dense<0.000000e+00> : vector<8x128xf32>
    %293 = tpu.matmul %258, %3, %cst_67 {dimension_numbers = #tpu.dot_dimension_numbers<[1], [0], [0], [1], [0, 0, 1, 1], [], []>} : vector<8x32xf32>, vector<32x128xf32>, vector<8x128xf32> -> vector<8x128xf32>
    %294 = arith.addf %292, %293 : vector<8x128xf32>
    %295 = vector.broadcast %5 : vector<1x128xf32> to vector<8x128xf32>
    %296 = arith.addf %294, %295 : vector<8x128xf32>
    %297 = vector.extract_strided_slice %296 {offsets = [0, 0], sizes = [8, 32], strides = [1, 1]} : vector<8x128xf32> to vector<8x32xf32>
    %298 = arith.negf %297 : vector<8x32xf32>
    %299 = math.exp %298 : vector<8x32xf32>
    %cst_68 = arith.constant 1.000000e+00 : f32
    %300 = vector.broadcast %cst_68 : f32 to vector<8x32xf32>
    %301 = arith.addf %300, %299 : vector<8x32xf32>
    %302 = arith.divf %300, %301 : vector<8x32xf32>
    %303 = vector.extract_strided_slice %296 {offsets = [0, 32], sizes = [8, 32], strides = [1, 1]} : vector<8x128xf32> to vector<8x32xf32>
    %304 = arith.negf %303 : vector<8x32xf32>
    %305 = math.exp %304 : vector<8x32xf32>
    %cst_69 = arith.constant 1.000000e+00 : f32
    %306 = vector.broadcast %cst_69 : f32 to vector<8x32xf32>
    %307 = arith.addf %306, %305 : vector<8x32xf32>
    %308 = arith.divf %306, %307 : vector<8x32xf32>
    %309 = vector.extract_strided_slice %296 {offsets = [0, 64], sizes = [8, 32], strides = [1, 1]} : vector<8x128xf32> to vector<8x32xf32>
    %310 = math.tanh %309 : vector<8x32xf32>
    %311 = vector.extract_strided_slice %296 {offsets = [0, 96], sizes = [8, 32], strides = [1, 1]} : vector<8x128xf32> to vector<8x32xf32>
    %312 = arith.negf %311 : vector<8x32xf32>
    %313 = math.exp %312 : vector<8x32xf32>
    %cst_70 = arith.constant 1.000000e+00 : f32
    %314 = vector.broadcast %cst_70 : f32 to vector<8x32xf32>
    %315 = arith.addf %314, %313 : vector<8x32xf32>
    %316 = arith.divf %314, %315 : vector<8x32xf32>
    %317 = arith.mulf %308, %256 : vector<8x32xf32>
    %318 = arith.mulf %302, %310 : vector<8x32xf32>
    %319 = arith.addf %317, %318 : vector<8x32xf32>
    %320 = math.tanh %319 : vector<8x32xf32>
    %321 = arith.mulf %316, %320 : vector<8x32xf32>
    %c5_i32 = arith.constant 5 : i32
    %322 = arith.index_cast %c5_i32 : i32 to index
    %c0_71 = arith.constant 0 : index
    %c0_72 = arith.constant 0 : index
    %323 = vector.load %arg1[%322, %c0_71, %c0_72] : memref<8x8x16xf32, #tpu.memory_space<vmem>>, vector<1x8x16xf32>
    %324 = vector.shape_cast %323 : vector<1x8x16xf32> to vector<8x16xf32>
    %cst_73 = arith.constant dense<0.000000e+00> : vector<8x128xf32>
    %325 = tpu.matmul %324, %0, %cst_73 {dimension_numbers = #tpu.dot_dimension_numbers<[1], [0], [0], [1], [0, 0, 1, 1], [], []>} : vector<8x16xf32>, vector<16x128xf32>, vector<8x128xf32> -> vector<8x128xf32>
    %cst_74 = arith.constant dense<0.000000e+00> : vector<8x128xf32>
    %326 = tpu.matmul %291, %2, %cst_74 {dimension_numbers = #tpu.dot_dimension_numbers<[1], [0], [0], [1], [0, 0, 1, 1], [], []>} : vector<8x32xf32>, vector<32x128xf32>, vector<8x128xf32> -> vector<8x128xf32>
    %327 = arith.addf %325, %326 : vector<8x128xf32>
    %328 = vector.broadcast %4 : vector<1x128xf32> to vector<8x128xf32>
    %329 = arith.addf %327, %328 : vector<8x128xf32>
    %330 = vector.extract_strided_slice %329 {offsets = [0, 0], sizes = [8, 32], strides = [1, 1]} : vector<8x128xf32> to vector<8x32xf32>
    %331 = arith.negf %330 : vector<8x32xf32>
    %332 = math.exp %331 : vector<8x32xf32>
    %cst_75 = arith.constant 1.000000e+00 : f32
    %333 = vector.broadcast %cst_75 : f32 to vector<8x32xf32>
    %334 = arith.addf %333, %332 : vector<8x32xf32>
    %335 = arith.divf %333, %334 : vector<8x32xf32>
    %336 = vector.extract_strided_slice %329 {offsets = [0, 32], sizes = [8, 32], strides = [1, 1]} : vector<8x128xf32> to vector<8x32xf32>
    %337 = arith.negf %336 : vector<8x32xf32>
    %338 = math.exp %337 : vector<8x32xf32>
    %cst_76 = arith.constant 1.000000e+00 : f32
    %339 = vector.broadcast %cst_76 : f32 to vector<8x32xf32>
    %340 = arith.addf %339, %338 : vector<8x32xf32>
    %341 = arith.divf %339, %340 : vector<8x32xf32>
    %342 = vector.extract_strided_slice %329 {offsets = [0, 64], sizes = [8, 32], strides = [1, 1]} : vector<8x128xf32> to vector<8x32xf32>
    %343 = math.tanh %342 : vector<8x32xf32>
    %344 = vector.extract_strided_slice %329 {offsets = [0, 96], sizes = [8, 32], strides = [1, 1]} : vector<8x128xf32> to vector<8x32xf32>
    %345 = arith.negf %344 : vector<8x32xf32>
    %346 = math.exp %345 : vector<8x32xf32>
    %cst_77 = arith.constant 1.000000e+00 : f32
    %347 = vector.broadcast %cst_77 : f32 to vector<8x32xf32>
    %348 = arith.addf %347, %346 : vector<8x32xf32>
    %349 = arith.divf %347, %348 : vector<8x32xf32>
    %350 = arith.mulf %341, %289 : vector<8x32xf32>
    %351 = arith.mulf %335, %343 : vector<8x32xf32>
    %352 = arith.addf %350, %351 : vector<8x32xf32>
    %353 = math.tanh %352 : vector<8x32xf32>
    %354 = arith.mulf %349, %353 : vector<8x32xf32>
    %cst_78 = arith.constant dense<0.000000e+00> : vector<8x128xf32>
    %355 = tpu.matmul %354, %1, %cst_78 {dimension_numbers = #tpu.dot_dimension_numbers<[1], [0], [0], [1], [0, 0, 1, 1], [], []>} : vector<8x32xf32>, vector<32x128xf32>, vector<8x128xf32> -> vector<8x128xf32>
    %cst_79 = arith.constant dense<0.000000e+00> : vector<8x128xf32>
    %356 = tpu.matmul %321, %3, %cst_79 {dimension_numbers = #tpu.dot_dimension_numbers<[1], [0], [0], [1], [0, 0, 1, 1], [], []>} : vector<8x32xf32>, vector<32x128xf32>, vector<8x128xf32> -> vector<8x128xf32>
    %357 = arith.addf %355, %356 : vector<8x128xf32>
    %358 = vector.broadcast %5 : vector<1x128xf32> to vector<8x128xf32>
    %359 = arith.addf %357, %358 : vector<8x128xf32>
    %360 = vector.extract_strided_slice %359 {offsets = [0, 0], sizes = [8, 32], strides = [1, 1]} : vector<8x128xf32> to vector<8x32xf32>
    %361 = arith.negf %360 : vector<8x32xf32>
    %362 = math.exp %361 : vector<8x32xf32>
    %cst_80 = arith.constant 1.000000e+00 : f32
    %363 = vector.broadcast %cst_80 : f32 to vector<8x32xf32>
    %364 = arith.addf %363, %362 : vector<8x32xf32>
    %365 = arith.divf %363, %364 : vector<8x32xf32>
    %366 = vector.extract_strided_slice %359 {offsets = [0, 32], sizes = [8, 32], strides = [1, 1]} : vector<8x128xf32> to vector<8x32xf32>
    %367 = arith.negf %366 : vector<8x32xf32>
    %368 = math.exp %367 : vector<8x32xf32>
    %cst_81 = arith.constant 1.000000e+00 : f32
    %369 = vector.broadcast %cst_81 : f32 to vector<8x32xf32>
    %370 = arith.addf %369, %368 : vector<8x32xf32>
    %371 = arith.divf %369, %370 : vector<8x32xf32>
    %372 = vector.extract_strided_slice %359 {offsets = [0, 64], sizes = [8, 32], strides = [1, 1]} : vector<8x128xf32> to vector<8x32xf32>
    %373 = math.tanh %372 : vector<8x32xf32>
    %374 = vector.extract_strided_slice %359 {offsets = [0, 96], sizes = [8, 32], strides = [1, 1]} : vector<8x128xf32> to vector<8x32xf32>
    %375 = arith.negf %374 : vector<8x32xf32>
    %376 = math.exp %375 : vector<8x32xf32>
    %cst_82 = arith.constant 1.000000e+00 : f32
    %377 = vector.broadcast %cst_82 : f32 to vector<8x32xf32>
    %378 = arith.addf %377, %376 : vector<8x32xf32>
    %379 = arith.divf %377, %378 : vector<8x32xf32>
    %380 = arith.mulf %371, %319 : vector<8x32xf32>
    %381 = arith.mulf %365, %373 : vector<8x32xf32>
    %382 = arith.addf %380, %381 : vector<8x32xf32>
    %383 = math.tanh %382 : vector<8x32xf32>
    %384 = arith.mulf %379, %383 : vector<8x32xf32>
    %c6_i32 = arith.constant 6 : i32
    %385 = arith.index_cast %c6_i32 : i32 to index
    %c0_83 = arith.constant 0 : index
    %c0_84 = arith.constant 0 : index
    %386 = vector.load %arg1[%385, %c0_83, %c0_84] : memref<8x8x16xf32, #tpu.memory_space<vmem>>, vector<1x8x16xf32>
    %387 = vector.shape_cast %386 : vector<1x8x16xf32> to vector<8x16xf32>
    %cst_85 = arith.constant dense<0.000000e+00> : vector<8x128xf32>
    %388 = tpu.matmul %387, %0, %cst_85 {dimension_numbers = #tpu.dot_dimension_numbers<[1], [0], [0], [1], [0, 0, 1, 1], [], []>} : vector<8x16xf32>, vector<16x128xf32>, vector<8x128xf32> -> vector<8x128xf32>
    %cst_86 = arith.constant dense<0.000000e+00> : vector<8x128xf32>
    %389 = tpu.matmul %354, %2, %cst_86 {dimension_numbers = #tpu.dot_dimension_numbers<[1], [0], [0], [1], [0, 0, 1, 1], [], []>} : vector<8x32xf32>, vector<32x128xf32>, vector<8x128xf32> -> vector<8x128xf32>
    %390 = arith.addf %388, %389 : vector<8x128xf32>
    %391 = vector.broadcast %4 : vector<1x128xf32> to vector<8x128xf32>
    %392 = arith.addf %390, %391 : vector<8x128xf32>
    %393 = vector.extract_strided_slice %392 {offsets = [0, 0], sizes = [8, 32], strides = [1, 1]} : vector<8x128xf32> to vector<8x32xf32>
    %394 = arith.negf %393 : vector<8x32xf32>
    %395 = math.exp %394 : vector<8x32xf32>
    %cst_87 = arith.constant 1.000000e+00 : f32
    %396 = vector.broadcast %cst_87 : f32 to vector<8x32xf32>
    %397 = arith.addf %396, %395 : vector<8x32xf32>
    %398 = arith.divf %396, %397 : vector<8x32xf32>
    %399 = vector.extract_strided_slice %392 {offsets = [0, 32], sizes = [8, 32], strides = [1, 1]} : vector<8x128xf32> to vector<8x32xf32>
    %400 = arith.negf %399 : vector<8x32xf32>
    %401 = math.exp %400 : vector<8x32xf32>
    %cst_88 = arith.constant 1.000000e+00 : f32
    %402 = vector.broadcast %cst_88 : f32 to vector<8x32xf32>
    %403 = arith.addf %402, %401 : vector<8x32xf32>
    %404 = arith.divf %402, %403 : vector<8x32xf32>
    %405 = vector.extract_strided_slice %392 {offsets = [0, 64], sizes = [8, 32], strides = [1, 1]} : vector<8x128xf32> to vector<8x32xf32>
    %406 = math.tanh %405 : vector<8x32xf32>
    %407 = vector.extract_strided_slice %392 {offsets = [0, 96], sizes = [8, 32], strides = [1, 1]} : vector<8x128xf32> to vector<8x32xf32>
    %408 = arith.negf %407 : vector<8x32xf32>
    %409 = math.exp %408 : vector<8x32xf32>
    %cst_89 = arith.constant 1.000000e+00 : f32
    %410 = vector.broadcast %cst_89 : f32 to vector<8x32xf32>
    %411 = arith.addf %410, %409 : vector<8x32xf32>
    %412 = arith.divf %410, %411 : vector<8x32xf32>
    %413 = arith.mulf %404, %352 : vector<8x32xf32>
    %414 = arith.mulf %398, %406 : vector<8x32xf32>
    %415 = arith.addf %413, %414 : vector<8x32xf32>
    %416 = math.tanh %415 : vector<8x32xf32>
    %417 = arith.mulf %412, %416 : vector<8x32xf32>
    %cst_90 = arith.constant dense<0.000000e+00> : vector<8x128xf32>
    %418 = tpu.matmul %417, %1, %cst_90 {dimension_numbers = #tpu.dot_dimension_numbers<[1], [0], [0], [1], [0, 0, 1, 1], [], []>} : vector<8x32xf32>, vector<32x128xf32>, vector<8x128xf32> -> vector<8x128xf32>
    %cst_91 = arith.constant dense<0.000000e+00> : vector<8x128xf32>
    %419 = tpu.matmul %384, %3, %cst_91 {dimension_numbers = #tpu.dot_dimension_numbers<[1], [0], [0], [1], [0, 0, 1, 1], [], []>} : vector<8x32xf32>, vector<32x128xf32>, vector<8x128xf32> -> vector<8x128xf32>
    %420 = arith.addf %418, %419 : vector<8x128xf32>
    %421 = vector.broadcast %5 : vector<1x128xf32> to vector<8x128xf32>
    %422 = arith.addf %420, %421 : vector<8x128xf32>
    %423 = vector.extract_strided_slice %422 {offsets = [0, 0], sizes = [8, 32], strides = [1, 1]} : vector<8x128xf32> to vector<8x32xf32>
    %424 = arith.negf %423 : vector<8x32xf32>
    %425 = math.exp %424 : vector<8x32xf32>
    %cst_92 = arith.constant 1.000000e+00 : f32
    %426 = vector.broadcast %cst_92 : f32 to vector<8x32xf32>
    %427 = arith.addf %426, %425 : vector<8x32xf32>
    %428 = arith.divf %426, %427 : vector<8x32xf32>
    %429 = vector.extract_strided_slice %422 {offsets = [0, 32], sizes = [8, 32], strides = [1, 1]} : vector<8x128xf32> to vector<8x32xf32>
    %430 = arith.negf %429 : vector<8x32xf32>
    %431 = math.exp %430 : vector<8x32xf32>
    %cst_93 = arith.constant 1.000000e+00 : f32
    %432 = vector.broadcast %cst_93 : f32 to vector<8x32xf32>
    %433 = arith.addf %432, %431 : vector<8x32xf32>
    %434 = arith.divf %432, %433 : vector<8x32xf32>
    %435 = vector.extract_strided_slice %422 {offsets = [0, 64], sizes = [8, 32], strides = [1, 1]} : vector<8x128xf32> to vector<8x32xf32>
    %436 = math.tanh %435 : vector<8x32xf32>
    %437 = vector.extract_strided_slice %422 {offsets = [0, 96], sizes = [8, 32], strides = [1, 1]} : vector<8x128xf32> to vector<8x32xf32>
    %438 = arith.negf %437 : vector<8x32xf32>
    %439 = math.exp %438 : vector<8x32xf32>
    %cst_94 = arith.constant 1.000000e+00 : f32
    %440 = vector.broadcast %cst_94 : f32 to vector<8x32xf32>
    %441 = arith.addf %440, %439 : vector<8x32xf32>
    %442 = arith.divf %440, %441 : vector<8x32xf32>
    %443 = arith.mulf %434, %382 : vector<8x32xf32>
    %444 = arith.mulf %428, %436 : vector<8x32xf32>
    %445 = arith.addf %443, %444 : vector<8x32xf32>
    %446 = math.tanh %445 : vector<8x32xf32>
    %447 = arith.mulf %442, %446 : vector<8x32xf32>
    %c7_i32 = arith.constant 7 : i32
    %448 = arith.index_cast %c7_i32 : i32 to index
    %c0_95 = arith.constant 0 : index
    %c0_96 = arith.constant 0 : index
    %449 = vector.load %arg1[%448, %c0_95, %c0_96] : memref<8x8x16xf32, #tpu.memory_space<vmem>>, vector<1x8x16xf32>
    %450 = vector.shape_cast %449 : vector<1x8x16xf32> to vector<8x16xf32>
    %cst_97 = arith.constant dense<0.000000e+00> : vector<8x128xf32>
    %451 = tpu.matmul %450, %0, %cst_97 {dimension_numbers = #tpu.dot_dimension_numbers<[1], [0], [0], [1], [0, 0, 1, 1], [], []>} : vector<8x16xf32>, vector<16x128xf32>, vector<8x128xf32> -> vector<8x128xf32>
    %cst_98 = arith.constant dense<0.000000e+00> : vector<8x128xf32>
    %452 = tpu.matmul %417, %2, %cst_98 {dimension_numbers = #tpu.dot_dimension_numbers<[1], [0], [0], [1], [0, 0, 1, 1], [], []>} : vector<8x32xf32>, vector<32x128xf32>, vector<8x128xf32> -> vector<8x128xf32>
    %453 = arith.addf %451, %452 : vector<8x128xf32>
    %454 = vector.broadcast %4 : vector<1x128xf32> to vector<8x128xf32>
    %455 = arith.addf %453, %454 : vector<8x128xf32>
    %456 = vector.extract_strided_slice %455 {offsets = [0, 0], sizes = [8, 32], strides = [1, 1]} : vector<8x128xf32> to vector<8x32xf32>
    %457 = arith.negf %456 : vector<8x32xf32>
    %458 = math.exp %457 : vector<8x32xf32>
    %cst_99 = arith.constant 1.000000e+00 : f32
    %459 = vector.broadcast %cst_99 : f32 to vector<8x32xf32>
    %460 = arith.addf %459, %458 : vector<8x32xf32>
    %461 = arith.divf %459, %460 : vector<8x32xf32>
    %462 = vector.extract_strided_slice %455 {offsets = [0, 32], sizes = [8, 32], strides = [1, 1]} : vector<8x128xf32> to vector<8x32xf32>
    %463 = arith.negf %462 : vector<8x32xf32>
    %464 = math.exp %463 : vector<8x32xf32>
    %cst_100 = arith.constant 1.000000e+00 : f32
    %465 = vector.broadcast %cst_100 : f32 to vector<8x32xf32>
    %466 = arith.addf %465, %464 : vector<8x32xf32>
    %467 = arith.divf %465, %466 : vector<8x32xf32>
    %468 = vector.extract_strided_slice %455 {offsets = [0, 64], sizes = [8, 32], strides = [1, 1]} : vector<8x128xf32> to vector<8x32xf32>
    %469 = math.tanh %468 : vector<8x32xf32>
    %470 = vector.extract_strided_slice %455 {offsets = [0, 96], sizes = [8, 32], strides = [1, 1]} : vector<8x128xf32> to vector<8x32xf32>
    %471 = arith.negf %470 : vector<8x32xf32>
    %472 = math.exp %471 : vector<8x32xf32>
    %cst_101 = arith.constant 1.000000e+00 : f32
    %473 = vector.broadcast %cst_101 : f32 to vector<8x32xf32>
    %474 = arith.addf %473, %472 : vector<8x32xf32>
    %475 = arith.divf %473, %474 : vector<8x32xf32>
    %476 = arith.mulf %467, %415 : vector<8x32xf32>
    %477 = arith.mulf %461, %469 : vector<8x32xf32>
    %478 = arith.addf %476, %477 : vector<8x32xf32>
    %479 = math.tanh %478 : vector<8x32xf32>
    %480 = arith.mulf %475, %479 : vector<8x32xf32>
    %cst_102 = arith.constant dense<0.000000e+00> : vector<8x128xf32>
    %481 = tpu.matmul %480, %1, %cst_102 {dimension_numbers = #tpu.dot_dimension_numbers<[1], [0], [0], [1], [0, 0, 1, 1], [], []>} : vector<8x32xf32>, vector<32x128xf32>, vector<8x128xf32> -> vector<8x128xf32>
    %cst_103 = arith.constant dense<0.000000e+00> : vector<8x128xf32>
    %482 = tpu.matmul %447, %3, %cst_103 {dimension_numbers = #tpu.dot_dimension_numbers<[1], [0], [0], [1], [0, 0, 1, 1], [], []>} : vector<8x32xf32>, vector<32x128xf32>, vector<8x128xf32> -> vector<8x128xf32>
    %483 = arith.addf %481, %482 : vector<8x128xf32>
    %484 = vector.broadcast %5 : vector<1x128xf32> to vector<8x128xf32>
    %485 = arith.addf %483, %484 : vector<8x128xf32>
    %486 = vector.extract_strided_slice %485 {offsets = [0, 0], sizes = [8, 32], strides = [1, 1]} : vector<8x128xf32> to vector<8x32xf32>
    %487 = arith.negf %486 : vector<8x32xf32>
    %488 = math.exp %487 : vector<8x32xf32>
    %cst_104 = arith.constant 1.000000e+00 : f32
    %489 = vector.broadcast %cst_104 : f32 to vector<8x32xf32>
    %490 = arith.addf %489, %488 : vector<8x32xf32>
    %491 = arith.divf %489, %490 : vector<8x32xf32>
    %492 = vector.extract_strided_slice %485 {offsets = [0, 32], sizes = [8, 32], strides = [1, 1]} : vector<8x128xf32> to vector<8x32xf32>
    %493 = arith.negf %492 : vector<8x32xf32>
    %494 = math.exp %493 : vector<8x32xf32>
    %cst_105 = arith.constant 1.000000e+00 : f32
    %495 = vector.broadcast %cst_105 : f32 to vector<8x32xf32>
    %496 = arith.addf %495, %494 : vector<8x32xf32>
    %497 = arith.divf %495, %496 : vector<8x32xf32>
    %498 = vector.extract_strided_slice %485 {offsets = [0, 64], sizes = [8, 32], strides = [1, 1]} : vector<8x128xf32> to vector<8x32xf32>
    %499 = math.tanh %498 : vector<8x32xf32>
    %500 = vector.extract_strided_slice %485 {offsets = [0, 96], sizes = [8, 32], strides = [1, 1]} : vector<8x128xf32> to vector<8x32xf32>
    %501 = arith.negf %500 : vector<8x32xf32>
    %502 = math.exp %501 : vector<8x32xf32>
    %cst_106 = arith.constant 1.000000e+00 : f32
    %503 = vector.broadcast %cst_106 : f32 to vector<8x32xf32>
    %504 = arith.addf %503, %502 : vector<8x32xf32>
    %505 = arith.divf %503, %504 : vector<8x32xf32>
    %506 = arith.mulf %497, %445 : vector<8x32xf32>
    %507 = arith.mulf %491, %499 : vector<8x32xf32>
    %508 = arith.addf %506, %507 : vector<8x32xf32>
    %509 = math.tanh %508 : vector<8x32xf32>
    %510 = arith.mulf %505, %509 : vector<8x32xf32>
    %c8_i32 = arith.constant 8 : i32
    %c0_107 = arith.constant 0 : index
    %c0_108 = arith.constant 0 : index
    %511 = vector.load %arg8[%c0_107, %c0_108] : memref<32x10xf32, #tpu.memory_space<vmem>>, vector<32x10xf32>
    %cst_109 = arith.constant dense<0.000000e+00> : vector<8x10xf32>
    %512 = tpu.matmul %510, %511, %cst_109 {dimension_numbers = #tpu.dot_dimension_numbers<[1], [0], [0], [1], [0, 0, 1, 1], [], []>} : vector<8x32xf32>, vector<32x10xf32>, vector<8x10xf32> -> vector<8x10xf32>
    %c0_110 = arith.constant 0 : index
    %c0_111 = arith.constant 0 : index
    %513 = vector.load %arg9[%c0_110, %c0_111] : memref<1x10xf32, #tpu.memory_space<vmem>>, vector<1x10xf32>
    %514 = vector.broadcast %513 : vector<1x10xf32> to vector<8x10xf32>
    %515 = arith.addf %512, %514 : vector<8x10xf32>
    %c0_112 = arith.constant 0 : index
    %c0_113 = arith.constant 0 : index
    %516 = vector.load %arg10[%c0_112, %c0_113] : memref<8x10xf32, #tpu.memory_space<vmem>>, vector<8x10xf32>
    tpu.vector_store %arg10[%c0_112, %c0_113], %515 {strides = array<i32>} : memref<8x10xf32, #tpu.memory_space<vmem>>, vector<8x10xf32>,
    return
  }
  func.func @transform_0(%arg0: i32) -> (i32, i32, i32) {
    %c0_i32 = arith.constant 0 : i32
    %c0_i32_0 = arith.constant 0 : i32
    %c0_i32_1 = arith.constant 0 : i32
    %c0_i32_2 = arith.constant 0 : i32
    return %c0_i32, %c0_i32_0, %c0_i32_1 : i32, i32, i32
  }
  func.func @transform_1(%arg0: i32) -> (i32, i32) {
    %c0_i32 = arith.constant 0 : i32
    %c0_i32_0 = arith.constant 0 : i32
    %c0_i32_1 = arith.constant 0 : i32
    return %c0_i32, %c0_i32_0 : i32, i32
  }
  func.func @transform_2(%arg0: i32) -> (i32, i32) {
    %c0_i32 = arith.constant 0 : i32
    %c0_i32_0 = arith.constant 0 : i32
    %c0_i32_1 = arith.constant 0 : i32
    return %c0_i32, %c0_i32_0 : i32, i32
  }
  func.func @transform_3(%arg0: i32) -> (i32, i32) {
    %c0_i32 = arith.constant 0 : i32
    %c0_i32_0 = arith.constant 0 : i32
    %c0_i32_1 = arith.constant 0 : i32
    return %c0_i32, %c0_i32_0 : i32, i32
  }
  func.func @transform_4(%arg0: i32) -> (i32, i32) {
    %c0_i32 = arith.constant 0 : i32
    %c0_i32_0 = arith.constant 0 : i32
    %c0_i32_1 = arith.constant 0 : i32
    return %c0_i32, %c0_i32_0 : i32, i32
  }
  func.func @transform_5(%arg0: i32) -> (i32, i32) {
    %c0_i32 = arith.constant 0 : i32
    %c0_i32_0 = arith.constant 0 : i32
    %c0_i32_1 = arith.constant 0 : i32
    return %c0_i32, %c0_i32_0 : i32, i32
  }
  func.func @transform_6(%arg0: i32) -> (i32, i32) {
    %c0_i32 = arith.constant 0 : i32
    %c0_i32_0 = arith.constant 0 : i32
    %c0_i32_1 = arith.constant 0 : i32
    return %c0_i32, %c0_i32_0 : i32, i32
  }
  func.func @transform_7(%arg0: i32) -> (i32, i32) {
    %c0_i32 = arith.constant 0 : i32
    %c0_i32_0 = arith.constant 0 : i32
    %c0_i32_1 = arith.constant 0 : i32
    return %c0_i32, %c0_i32_0 : i32, i32
  }
  func.func @transform_8(%arg0: i32) -> (i32, i32) {
    %c0_i32 = arith.constant 0 : i32
    %c0_i32_0 = arith.constant 0 : i32
    %c0_i32_1 = arith.constant 0 : i32
    return %c0_i32, %c0_i32_0 : i32, i32
  }
  func.func @transform_9(%arg0: i32) -> (i32, i32) {
    %c0_i32 = arith.constant 0 : i32
    %c0_i32_0 = arith.constant 0 : i32
    %c0_i32_1 = arith.constant 0 : i32
    return %c0_i32, %c0_i32_0 : i32, i32
  }
}

</mosaic_0001>

<llo_original>
// kernel: simple_lstm_forward.1
$region0: #{simple_lstm_forward.1}
  #allocation0 [shape = 'u32[]', space=smem, size = 0x4, offset = 0x4, fixed_abs, tag = 'smem constant byte address 0x4 - core index']
  #allocation1 [shape = 'u32[144,128]{1,0:T(1,128)}', space=vmem, size = 0x12000, scoped, tag = 'internal scratch']
  %s0 = inlined_call_operand.vmem [shape: f32[8,8,16], index: 0, kind: input, shape index: {}]
  %s1 = inlined_call_operand.vmem [shape: f32[16,128], index: 1, kind: input, shape index: {}]
  %s2 = inlined_call_operand.vmem [shape: f32[32,128], index: 2, kind: input, shape index: {}]
  %s3 = inlined_call_operand.vmem [shape: f32[1,128], index: 3, kind: input, shape index: {}]
  %s4 = inlined_call_operand.vmem [shape: f32[32,128], index: 4, kind: input, shape index: {}]
  %s5 = inlined_call_operand.vmem [shape: f32[32,128], index: 5, kind: input, shape index: {}]
  %s6 = inlined_call_operand.vmem [shape: f32[1,128], index: 6, kind: input, shape index: {}]
  %s7 = inlined_call_operand.vmem [shape: f32[32,10], index: 7, kind: input, shape index: {}]
  %s8 = inlined_call_operand.vmem [shape: f32[1,10], index: 8, kind: input, shape index: {}]
  %s9 = inlined_call_operand.vmem [shape: f32[8,10], index: 9, kind: output, shape index: {}]
  %s10 = sld [smem:[#allocation0]]
  $region46: #{simple_lstm_forward.1} parent=0
    _
  %s12 = ssub.s32 1, %s10
  %s13 = scalar_select 0, %s12, %s10
  // Predicated region
  $region2: #{simple_lstm_forward.1} parent=0 // pred_check
    _
  $region3: #{simple_lstm_forward.1} parent=0 // pred_check_branch
    %15 = sbr.rel (0) target = $region5
  $region4: #{simple_lstm_forward.1} parent=0 // pred_region
    _
  $region5: #{simple_lstm_forward.1} parent=0 // pred_fallthru
    _
  // Predicated region
  $region6: #{simple_lstm_forward.1} parent=0 // pred_check
    _
  $region7: #{simple_lstm_forward.1} parent=0 // pred_check_branch
    %17 = sbr.rel (0) target = $region9
  $region8: #{simple_lstm_forward.1} parent=0 // pred_region
    _
  $region9: #{simple_lstm_forward.1} parent=0 // pred_fallthru
    _
  // Predicated region
  $region10: #{simple_lstm_forward.1} parent=0 // pred_check
    _
  $region11: #{simple_lstm_forward.1} parent=0 // pred_check_branch
    %19 = sbr.rel (0) target = $region13
  $region12: #{simple_lstm_forward.1} parent=0 // pred_region
    _
  $region13: #{simple_lstm_forward.1} parent=0 // pred_fallthru
    _
  // Predicated region
  $region14: #{simple_lstm_forward.1} parent=0 // pred_check
    _
  $region15: #{simple_lstm_forward.1} parent=0 // pred_check_branch
    %21 = sbr.rel (0) target = $region17
  $region16: #{simple_lstm_forward.1} parent=0 // pred_region
    _
  $region17: #{simple_lstm_forward.1} parent=0 // pred_fallthru
    _
  // Predicated region
  $region18: #{simple_lstm_forward.1} parent=0 // pred_check
    _
  $region19: #{simple_lstm_forward.1} parent=0 // pred_check_branch
    %23 = sbr.rel (0) target = $region21
  $region20: #{simple_lstm_forward.1} parent=0 // pred_region
    _
  $region21: #{simple_lstm_forward.1} parent=0 // pred_fallthru
    _
  // Predicated region
  $region22: #{simple_lstm_forward.1} parent=0 // pred_check
    _
  $region23: #{simple_lstm_forward.1} parent=0 // pred_check_branch
    %25 = sbr.rel (0) target = $region25
  $region24: #{simple_lstm_forward.1} parent=0 // pred_region
    _
  $region25: #{simple_lstm_forward.1} parent=0 // pred_fallthru
    _
  // Predicated region
  $region26: #{simple_lstm_forward.1} parent=0 // pred_check
    _
  $region27: #{simple_lstm_forward.1} parent=0 // pred_check_branch
    %27 = sbr.rel (0) target = $region29
  $region28: #{simple_lstm_forward.1} parent=0 // pred_region
    _
  $region29: #{simple_lstm_forward.1} parent=0 // pred_fallthru
    _
  // Predicated region
  $region30: #{simple_lstm_forward.1} parent=0 // pred_check
    _
  $region31: #{simple_lstm_forward.1} parent=0 // pred_check_branch
    %29 = sbr.rel (0) target = $region33
  $region32: #{simple_lstm_forward.1} parent=0 // pred_region
    _
  $region33: #{simple_lstm_forward.1} parent=0 // pred_fallthru
    _
  // Predicated region
  $region34: #{simple_lstm_forward.1} parent=0 // pred_check
    _
  $region35: #{simple_lstm_forward.1} parent=0 // pred_check_branch
    %31 = sbr.rel (0) target = $region37
  $region36: #{simple_lstm_forward.1} parent=0 // pred_region
    _
  $region37: #{simple_lstm_forward.1} parent=0 // pred_fallthru
    _
  %v32 = vld [vmem:[%s1] sm:$0xff]
  %v33 = vld [vmem:[%s1 + $0x8] sm:$0xff]
  %v34 = vld [vmem:[%s4] sm:$0xff]
  %v35 = vld [vmem:[%s4 + $0x8] sm:$0xff]
  %v36 = vld [vmem:[%s4 + $0x10] sm:$0xff]
  %v37 = vld [vmem:[%s4 + $0x18] sm:$0xff]
  %v38 = vld [vmem:[%s2] sm:$0xff]
  %v39 = vld [vmem:[%s2 + $0x8] sm:$0xff]
  %v40 = vld [vmem:[%s2 + $0x10] sm:$0xff]
  %v41 = vld [vmem:[%s2 + $0x18] sm:$0xff]
  %v42 = vld [vmem:[%s5] sm:$0xff]
  %v43 = vld [vmem:[%s5 + $0x8] sm:$0xff]
  %v44 = vld [vmem:[%s5 + $0x10] sm:$0xff]
  %v45 = vld [vmem:[%s5 + $0x18] sm:$0xff]
  %v46 = vld [vmem:[%s3] sm:$0x1]
  %v47 = vld [vmem:[%s6] sm:$0x1]
  %v48 = vld [vmem:[%s0] sm:$0xff]
  %vm49 = vcmask 261120
  %v51 = vsel %vm49, 0.0, 0
  %53 = vmatprep.subr.mxu0 0.0
  %54 = vmatpush1.msra.mxu0 %v38
  %55 = vmatprep.subr.mxu0 0.0
  %56 = vmatpush1.msra.mxu0 %v39
  %57 = vmatprep.subr.mxu0 0.0
  %58 = vmatpush1.msra.mxu0 %v40
  %59 = vmatprep.subr.mxu0 0.0
  %60 = vmatpush1.msra.mxu0 %v41
  %61 = vmatprep.subr.mxu0 0.0
  %62 = vmatpush1.msra.mxu0 0.0
  %63 = vmatprep.subr.mxu0 0.0
  %64 = vmatpush1.msra.mxu0 0.0
  %65 = vmatprep.subr.mxu0 0.0
  %66 = vmatpush1.msra.mxu0 0.0
  %67 = vmatprep.subr.mxu0 0.0
  %68 = vmatpush1.msra.mxu0 0.0
  %69 = vmatprep.subr.mxu0 0.0
  %70 = vmatpush1.msra.mxu0 0.0
  %71 = vmatprep.subr.mxu0 0.0
  %72 = vmatpush1.msra.mxu0 0.0
  %73 = vmatprep.subr.mxu0 0.0
  %74 = vmatpush1.msra.mxu0 0.0
  %75 = vmatprep.subr.mxu0 0.0
  %76 = vmatpush1.msra.mxu0 0.0
  %77 = vmatprep.subr.mxu0 0.0
  %78 = vmatpush1.msra.mxu0 0.0
  %79 = vmatprep.subr.mxu0 0.0
  %80 = vmatpush1.msra.mxu0 0.0
  %81 = vmatprep.subr.mxu0 0.0
  %82 = vmatpush1.msra.mxu0 0.0
  %83 = vmatprep.subr.mxu0 0.0
  %84 = vmatpush1.msra.mxu0 0.0
  %85 = vmatprep.subr.mxu0 0.0
  %86 = vmatpush1.msra.mxu0 0.0
  %87 = vmatprep.subr.mxu0 0.0
  %88 = vmatpush1.msra.mxu0 0.0
  %89 = vmatprep.subr.mxu0 0.0
  %90 = vmatpush1.msra.mxu0 0.0
  %91 = vmatprep.subr.mxu0 0.0
  %92 = vmatpush1.msra.mxu0 0.0
  %93 = vmatprep.subr.mxu0 0.0
  %94 = vmatpush1.msra.mxu0 0.0
  %95 = vmatprep.subr.mxu0 0.0
  %96 = vmatpush1.msra.mxu0 0.0
  %97 = vmatprep.subr.mxu0 0.0
  %98 = vmatpush1.msra.mxu0 0.0
  %99 = vmatprep.subr.mxu0 0.0
  %100 = vmatpush1.msra.mxu0 0.0
  %101 = vmatprep.subr.mxu0 0.0
  %102 = vmatpush1.msra.mxu0 0.0
  %103 = vmatprep.subr.mxu0 0.0
  %104 = vmatpush1.msra.mxu0 0.0
  %105 = vmatprep.subr.mxu0 0.0
  %106 = vmatpush1.msra.mxu0 0.0
  %107 = vmatprep.subr.mxu0 0.0
  %108 = vmatpush1.msra.mxu0 0.0
  %109 = vmatprep.subr.mxu0 0.0
  %110 = vmatpush1.msra.mxu0 0.0
  %111 = vmatprep.subr.mxu0 0.0
  %112 = vmatpush1.msra.mxu0 0.0
  %113 = vmatprep.subr.mxu0 0.0
  %114 = vmatpush1.msra.mxu0 0.0
  %115 = vmatprep.subr.mxu0 0.0
  %116 = vmatpush1.msra.mxu0 0.0
  %117 = vmatprep.mubr.f32.mxu0 0.0
  %118 = vmatmul.mubr.f32.gmra.mrb[0].mxu0 %v51
  %v119 = vpop.f32.mrb[0].mxu0
  %v120 = vadd.f32 0.0, %v119
  %v121 = vpop.f32.mrb[0].mxu0
  %122 = vdwg.mxu0
  %vm123 = vcmask 130048
  %v125 = vsel %vm123, %v48, 0
  %127 = vmatprep.subr.mxu0 0.0
  %128 = vmatpush1.msra.mxu0 %v32
  %129 = vmatprep.subr.mxu0 0.0
  %130 = vmatpush1.msra.mxu0 %v33
  %131 = vmatprep.subr.mxu0 0.0
  %132 = vmatpush1.msra.mxu0 0.0
  %133 = vmatprep.subr.mxu0 0.0
  %134 = vmatpush1.msra.mxu0 0.0
  %135 = vmatprep.subr.mxu0 0.0
  %136 = vmatpush1.msra.mxu0 0.0
  %137 = vmatprep.subr.mxu0 0.0
  %138 = vmatpush1.msra.mxu0 0.0
  %139 = vmatprep.subr.mxu0 0.0
  %140 = vmatpush1.msra.mxu0 0.0
  %141 = vmatprep.subr.mxu0 0.0
  %142 = vmatpush1.msra.mxu0 0.0
  %143 = vmatprep.subr.mxu0 0.0
  %144 = vmatpush1.msra.mxu0 0.0
  %145 = vmatprep.subr.mxu0 0.0
  %146 = vmatpush1.msra.mxu0 0.0
  %147 = vmatprep.subr.mxu0 0.0
  %148 = vmatpush1.msra.mxu0 0.0
  %149 = vmatprep.subr.mxu0 0.0
  %150 = vmatpush1.msra.mxu0 0.0
  %151 = vmatprep.subr.mxu0 0.0
  %152 = vmatpush1.msra.mxu0 0.0
  %153 = vmatprep.subr.mxu0 0.0
  %154 = vmatpush1.msra.mxu0 0.0
  %155 = vmatprep.subr.mxu0 0.0
  %156 = vmatpush1.msra.mxu0 0.0
  %157 = vmatprep.subr.mxu0 0.0
  %158 = vmatpush1.msra.mxu0 0.0
  %159 = vmatprep.subr.mxu0 0.0
  %160 = vmatpush1.msra.mxu0 0.0
  %161 = vmatprep.subr.mxu0 0.0
  %162 = vmatpush1.msra.mxu0 0.0
  %163 = vmatprep.subr.mxu0 0.0
  %164 = vmatpush1.msra.mxu0 0.0
  %165 = vmatprep.subr.mxu0 0.0
  %166 = vmatpush1.msra.mxu0 0.0
  %167 = vmatprep.subr.mxu0 0.0
  %168 = vmatpush1.msra.mxu0 0.0
  %169 = vmatprep.subr.mxu0 0.0
  %170 = vmatpush1.msra.mxu0 0.0
  %171 = vmatprep.subr.mxu0 0.0
  %172 = vmatpush1.msra.mxu0 0.0
  %173 = vmatprep.subr.mxu0 0.0
  %174 = vmatpush1.msra.mxu0 0.0
  %175 = vmatprep.subr.mxu0 0.0
  %176 = vmatpush1.msra.mxu0 0.0
  %177 = vmatprep.subr.mxu0 0.0
  %178 = vmatpush1.msra.mxu0 0.0
  %179 = vmatprep.subr.mxu0 0.0
  %180 = vmatpush1.msra.mxu0 0.0
  %181 = vmatprep.subr.mxu0 0.0
  %182 = vmatpush1.msra.mxu0 0.0
  %183 = vmatprep.subr.mxu0 0.0
  %184 = vmatpush1.msra.mxu0 0.0
  %185 = vmatprep.subr.mxu0 0.0
  %186 = vmatpush1.msra.mxu0 0.0
  %187 = vmatprep.subr.mxu0 0.0
  %188 = vmatpush1.msra.mxu0 0.0
  %189 = vmatprep.subr.mxu0 0.0
  %190 = vmatpush1.msra.mxu0 0.0
  %191 = vmatprep.mubr.f32.mxu0 0.0
  %192 = vmatmul.mubr.f32.gmra.mrb[0].mxu0 %v125
  %v193 = vpop.f32.mrb[0].mxu0
  %v194 = vadd.f32 %v120, %v193
  %v195 = vpop.f32.mrb[0].mxu0
  %196 = vdwg.mxu0
  %v198 = vlaneseq
  %v199 = vshrl.u32 %v198, 7
  %v200 = vsub.s32 0, %v199
  %v201 = vrot.slane %v46, %v200
  %v203 = vadd.f32 %v194, %v201
  %v204 = vxor.u32 %v203, 2147483648
  %v205 = vmul.f32 %v204, 1.442695
  %v206 = vpow.pop %v205
  %v207 = vadd.f32 %v206, 1.0
  %v208 = vrcp.pop %v207
  %v209 = vmul.f32 1.0, %v208
  %v210 = vtanh.pop %v203
  %v211 = vmul.f32 %v209, 0.0
  %213 = vrot.lane.b32.xlu0 %v210, 64
  %v214 = vpop.permute.xlu0 %213
  %v216 = vmul.f32 %v209, %v214
  %218 = vrot.lane.b32.xlu0 %v216, 32
  %v219 = vpop.permute.xlu0 %218
  %v221 = vadd.f32 %v211, %v219
  %v222 = vtanh.pop %v221
  %224 = vrot.lane.b32.xlu0 %v222, 64
  %v225 = vpop.permute.xlu0 %224
  %v227 = vmul.f32 %v209, %v225
  %228 = vmatprep.subr.mxu0 0.0
  %229 = vmatpush1.msra.mxu0 %v42
  %230 = vmatprep.subr.mxu0 0.0
  %231 = vmatpush1.msra.mxu0 %v43
  %232 = vmatprep.subr.mxu0 0.0
  %233 = vmatpush1.msra.mxu0 %v44
  %234 = vmatprep.subr.mxu0 0.0
  %235 = vmatpush1.msra.mxu0 %v45
  %236 = vmatprep.subr.mxu0 0.0
  %237 = vmatpush1.msra.mxu0 0.0
  %238 = vmatprep.subr.mxu0 0.0
  %239 = vmatpush1.msra.mxu0 0.0
  %240 = vmatprep.subr.mxu0 0.0
  %241 = vmatpush1.msra.mxu0 0.0
  %242 = vmatprep.subr.mxu0 0.0
  %243 = vmatpush1.msra.mxu0 0.0
  %244 = vmatprep.subr.mxu0 0.0
  %245 = vmatpush1.msra.mxu0 0.0
  %246 = vmatprep.subr.mxu0 0.0
  %247 = vmatpush1.msra.mxu0 0.0
  %248 = vmatprep.subr.mxu0 0.0
  %249 = vmatpush1.msra.mxu0 0.0
  %250 = vmatprep.subr.mxu0 0.0
  %251 = vmatpush1.msra.mxu0 0.0
  %252 = vmatprep.subr.mxu0 0.0
  %253 = vmatpush1.msra.mxu0 0.0
  %254 = vmatprep.subr.mxu0 0.0
  %255 = vmatpush1.msra.mxu0 0.0
  %256 = vmatprep.subr.mxu0 0.0
  %257 = vmatpush1.msra.mxu0 0.0
  %258 = vmatprep.subr.mxu0 0.0
  %259 = vmatpush1.msra.mxu0 0.0
  %260 = vmatprep.subr.mxu0 0.0
  %261 = vmatpush1.msra.mxu0 0.0
  %262 = vmatprep.subr.mxu0 0.0
  %263 = vmatpush1.msra.mxu0 0.0
  %264 = vmatprep.subr.mxu0 0.0
  %265 = vmatpush1.msra.mxu0 0.0
  %266 = vmatprep.subr.mxu0 0.0
  %267 = vmatpush1.msra.mxu0 0.0
  %268 = vmatprep.subr.mxu0 0.0
  %269 = vmatpush1.msra.mxu0 0.0
  %270 = vmatprep.subr.mxu0 0.0
  %271 = vmatpush1.msra.mxu0 0.0
  %272 = vmatprep.subr.mxu0 0.0
  %273 = vmatpush1.msra.mxu0 0.0
  %274 = vmatprep.subr.mxu0 0.0
  %275 = vmatpush1.msra.mxu0 0.0
  %276 = vmatprep.subr.mxu0 0.0
  %277 = vmatpush1.msra.mxu0 0.0
  %278 = vmatprep.subr.mxu0 0.0
  %279 = vmatpush1.msra.mxu0 0.0
  %280 = vmatprep.subr.mxu0 0.0
  %281 = vmatpush1.msra.mxu0 0.0
  %282 = vmatprep.subr.mxu0 0.0
  %283 = vmatpush1.msra.mxu0 0.0
  %284 = vmatprep.subr.mxu0 0.0
  %285 = vmatpush1.msra.mxu0 0.0
  %286 = vmatprep.subr.mxu0 0.0
  %287 = vmatpush1.msra.mxu0 0.0
  %288 = vmatprep.subr.mxu0 0.0
  %289 = vmatpush1.msra.mxu0 0.0
  %290 = vmatprep.subr.mxu0 0.0
  %291 = vmatpush1.msra.mxu0 0.0
  %292 = vmatprep.mubr.f32.mxu0 0.0
  %293 = vmatmul.mubr.f32.gmra.mrb[0].mxu0 %v51
  %v294 = vpop.f32.mrb[0].mxu0
  %v295 = vadd.f32 0.0, %v294
  %v296 = vpop.f32.mrb[0].mxu0
  %297 = vdwg.mxu0
  %299 = vrot.lane.b32.xlu0 %v227, 32
  %v300 = vpop.permute.xlu0 %299
  %v301 = vsel %vm49, %v300, 0
  %303 = vmatprep.subr.mxu0 0.0
  %304 = vmatpush1.msra.mxu0 %v34
  %305 = vmatprep.subr.mxu0 0.0
  %306 = vmatpush1.msra.mxu0 %v35
  %307 = vmatprep.subr.mxu0 0.0
  %308 = vmatpush1.msra.mxu0 %v36
  %309 = vmatprep.subr.mxu0 0.0
  %310 = vmatpush1.msra.mxu0 %v37
  %311 = vmatprep.subr.mxu0 0.0
  %312 = vmatpush1.msra.mxu0 0.0
  %313 = vmatprep.subr.mxu0 0.0
  %314 = vmatpush1.msra.mxu0 0.0
  %315 = vmatprep.subr.mxu0 0.0
  %316 = vmatpush1.msra.mxu0 0.0
  %317 = vmatprep.subr.mxu0 0.0
  %318 = vmatpush1.msra.mxu0 0.0
  %319 = vmatprep.subr.mxu0 0.0
  %320 = vmatpush1.msra.mxu0 0.0
  %321 = vmatprep.subr.mxu0 0.0
  %322 = vmatpush1.msra.mxu0 0.0
  %323 = vmatprep.subr.mxu0 0.0
  %324 = vmatpush1.msra.mxu0 0.0
  %325 = vmatprep.subr.mxu0 0.0
  %326 = vmatpush1.msra.mxu0 0.0
  %327 = vmatprep.subr.mxu0 0.0
  %328 = vmatpush1.msra.mxu0 0.0
  %329 = vmatprep.subr.mxu0 0.0
  %330 = vmatpush1.msra.mxu0 0.0
  %331 = vmatprep.subr.mxu0 0.0
  %332 = vmatpush1.msra.mxu0 0.0
  %333 = vmatprep.subr.mxu0 0.0
  %334 = vmatpush1.msra.mxu0 0.0
  %335 = vmatprep.subr.mxu0 0.0
  %336 = vmatpush1.msra.mxu0 0.0
  %337 = vmatprep.subr.mxu0 0.0
  %338 = vmatpush1.msra.mxu0 0.0
  %339 = vmatprep.subr.mxu0 0.0
  %340 = vmatpush1.msra.mxu0 0.0
  %341 = vmatprep.subr.mxu0 0.0
  %342 = vmatpush1.msra.mxu0 0.0
  %343 = vmatprep.subr.mxu0 0.0
  %344 = vmatpush1.msra.mxu0 0.0
  %345 = vmatprep.subr.mxu0 0.0
  %346 = vmatpush1.msra.mxu0 0.0
  %347 = vmatprep.subr.mxu0 0.0
  %348 = vmatpush1.msra.mxu0 0.0
  %349 = vmatprep.subr.mxu0 0.0
  %350 = vmatpush1.msra.mxu0 0.0
  %351 = vmatprep.subr.mxu0 0.0
  %352 = vmatpush1.msra.mxu0 0.0
  %353 = vmatprep.subr.mxu0 0.0
  %354 = vmatpush1.msra.mxu0 0.0
  %355 = vmatprep.subr.mxu0 0.0
  %356 = vmatpush1.msra.mxu0 0.0
  %357 = vmatprep.subr.mxu0 0.0
  %358 = vmatpush1.msra.mxu0 0.0
  %359 = vmatprep.subr.mxu0 0.0
  %360 = vmatpush1.msra.mxu0 0.0
  %361 = vmatprep.subr.mxu0 0.0
  %362 = vmatpush1.msra.mxu0 0.0
  %363 = vmatprep.subr.mxu0 0.0
  %364 = vmatpush1.msra.mxu0 0.0
  %365 = vmatprep.subr.mxu0 0.0
  %366 = vmatpush1.msra.mxu0 0.0
  %367 = vmatprep.mubr.f32.mxu0 0.0
  %368 = vmatmul.mubr.f32.gmra.mrb[0].mxu0 %v301
  %v369 = vpop.f32.mrb[0].mxu0
  %v370 = vadd.f32 %v295, %v369
  %v371 = vpop.f32.mrb[0].mxu0
  %372 = vdwg.mxu0
  %v374 = vlaneseq
  %v375 = vshrl.u32 %v374, 7
  %v376 = vsub.s32 0, %v375
  %v377 = vrot.slane %v47, %v376
  %v379 = vadd.f32 %v370, %v377
  %v380 = vxor.u32 %v379, 2147483648
  %v381 = vmul.f32 %v380, 1.442695
  %v382 = vpow.pop %v381
  %v383 = vadd.f32 %v382, 1.0
  %v384 = vrcp.pop %v383
  %v385 = vmul.f32 1.0, %v384
  %v386 = vtanh.pop %v379
  %v387 = vmul.f32 %v385, 0.0
  %389 = vrot.lane.b32.xlu0 %v386, 64
  %v390 = vpop.permute.xlu0 %389
  %v392 = vmul.f32 %v385, %v390
  %394 = vrot.lane.b32.xlu0 %v392, 32
  %v395 = vpop.permute.xlu0 %394
  %v397 = vadd.f32 %v387, %v395
  %v398 = vtanh.pop %v397
  %400 = vrot.lane.b32.xlu0 %v398, 64
  %v401 = vpop.permute.xlu0 %400
  %v403 = vmul.f32 %v385, %v401
  %s404 = scalar_lea.vmem %s0, 8
  %v405 = vld [vmem:[%s404] sm:$0xff]
  %406 = vmatprep.subr.mxu0 0.0
  %407 = vmatpush1.msra.mxu0 %v38
  %408 = vmatprep.subr.mxu0 0.0
  %409 = vmatpush1.msra.mxu0 %v39
  %410 = vmatprep.subr.mxu0 0.0
  %411 = vmatpush1.msra.mxu0 %v40
  %412 = vmatprep.subr.mxu0 0.0
  %413 = vmatpush1.msra.mxu0 %v41
  %414 = vmatprep.subr.mxu0 0.0
  %415 = vmatpush1.msra.mxu0 0.0
  %416 = vmatprep.subr.mxu0 0.0
  %417 = vmatpush1.msra.mxu0 0.0
  %418 = vmatprep.subr.mxu0 0.0
  %419 = vmatpush1.msra.mxu0 0.0
  %420 = vmatprep.subr.mxu0 0.0
  %421 = vmatpush1.msra.mxu0 0.0
  %422 = vmatprep.subr.mxu0 0.0
  %423 = vmatpush1.msra.mxu0 0.0
  %424 = vmatprep.subr.mxu0 0.0
  %425 = vmatpush1.msra.mxu0 0.0
  %426 = vmatprep.subr.mxu0 0.0
  %427 = vmatpush1.msra.mxu0 0.0
  %428 = vmatprep.subr.mxu0 0.0
  %429 = vmatpush1.msra.mxu0 0.0
  %430 = vmatprep.subr.mxu0 0.0
  %431 = vmatpush1.msra.mxu0 0.0
  %432 = vmatprep.subr.mxu0 0.0
  %433 = vmatpush1.msra.mxu0 0.0
  %434 = vmatprep.subr.mxu0 0.0
  %435 = vmatpush1.msra.mxu0 0.0
  %436 = vmatprep.subr.mxu0 0.0
  %437 = vmatpush1.msra.mxu0 0.0
  %438 = vmatprep.subr.mxu0 0.0
  %439 = vmatpush1.msra.mxu0 0.0
  %440 = vmatprep.subr.mxu0 0.0
  %441 = vmatpush1.msra.mxu0 0.0
  %442 = vmatprep.subr.mxu0 0.0
  %443 = vmatpush1.msra.mxu0 0.0
  %444 = vmatprep.subr.mxu0 0.0
  %445 = vmatpush1.msra.mxu0 0.0
  %446 = vmatprep.subr.mxu0 0.0
  %447 = vmatpush1.msra.mxu0 0.0
  %448 = vmatprep.subr.mxu0 0.0
  %449 = vmatpush1.msra.mxu0 0.0
  %450 = vmatprep.subr.mxu0 0.0
  %451 = vmatpush1.msra.mxu0 0.0
  %452 = vmatprep.subr.mxu0 0.0
  %453 = vmatpush1.msra.mxu0 0.0
  %454 = vmatprep.subr.mxu0 0.0
  %455 = vmatpush1.msra.mxu0 0.0
  %456 = vmatprep.subr.mxu0 0.0
  %457 = vmatpush1.msra.mxu0 0.0
  %458 = vmatprep.subr.mxu0 0.0
  %459 = vmatpush1.msra.mxu0 0.0
  %460 = vmatprep.subr.mxu0 0.0
  %461 = vmatpush1.msra.mxu0 0.0
  %462 = vmatprep.subr.mxu0 0.0
  %463 = vmatpush1.msra.mxu0 0.0
  %464 = vmatprep.subr.mxu0 0.0
  %465 = vmatpush1.msra.mxu0 0.0
  %466 = vmatprep.subr.mxu0 0.0
  %467 = vmatpush1.msra.mxu0 0.0
  %468 = vmatprep.subr.mxu0 0.0
  %469 = vmatpush1.msra.mxu0 0.0
  %470 = vmatprep.mubr.f32.mxu0 0.0
  %471 = vmatmul.mubr.f32.gmra.mrb[0].mxu0 %v301
  %v472 = vpop.f32.mrb[0].mxu0
  %v473 = vadd.f32 0.0, %v472
  %v474 = vpop.f32.mrb[0].mxu0
  %475 = vdwg.mxu0
  %v477 = vsel %vm123, %v405, 0
  %479 = vmatprep.subr.mxu0 0.0
  %480 = vmatpush1.msra.mxu0 %v32
  %481 = vmatprep.subr.mxu0 0.0
  %482 = vmatpush1.msra.mxu0 %v33
  %483 = vmatprep.subr.mxu0 0.0
  %484 = vmatpush1.msra.mxu0 0.0
  %485 = vmatprep.subr.mxu0 0.0
  %486 = vmatpush1.msra.mxu0 0.0
  %487 = vmatprep.subr.mxu0 0.0
  %488 = vmatpush1.msra.mxu0 0.0
  %489 = vmatprep.subr.mxu0 0.0
  %490 = vmatpush1.msra.mxu0 0.0
  %491 = vmatprep.subr.mxu0 0.0
  %492 = vmatpush1.msra.mxu0 0.0
  %493 = vmatprep.subr.mxu0 0.0
  %494 = vmatpush1.msra.mxu0 0.0
  %495 = vmatprep.subr.mxu0 0.0
  %496 = vmatpush1.msra.mxu0 0.0
  %497 = vmatprep.subr.mxu0 0.0
  %498 = vmatpush1.msra.mxu0 0.0
  %499 = vmatprep.subr.mxu0 0.0
  %500 = vmatpush1.msra.mxu0 0.0
  %501 = vmatprep.subr.mxu0 0.0
  %502 = vmatpush1.msra.mxu0 0.0
  %503 = vmatprep.subr.mxu0 0.0
  %504 = vmatpush1.msra.mxu0 0.0
  %505 = vmatprep.subr.mxu0 0.0
  %506 = vmatpush1.msra.mxu0 0.0
  %507 = vmatprep.subr.mxu0 0.0
  %508 = vmatpush1.msra.mxu0 0.0
  %509 = vmatprep.subr.mxu0 0.0
  %510 = vmatpush1.msra.mxu0 0.0
  %511 = vmatprep.subr.mxu0 0.0
  %512 = vmatpush1.msra.mxu0 0.0
  %513 = vmatprep.subr.mxu0 0.0
  %514 = vmatpush1.msra.mxu0 0.0
  %515 = vmatprep.subr.mxu0 0.0
  %516 = vmatpush1.msra.mxu0 0.0
  %517 = vmatprep.subr.mxu0 0.0
  %518 = vmatpush1.msra.mxu0 0.0
  %519 = vmatprep.subr.mxu0 0.0
  %520 = vmatpush1.msra.mxu0 0.0
  %521 = vmatprep.subr.mxu0 0.0
  %522 = vmatpush1.msra.mxu0 0.0
  %523 = vmatprep.subr.mxu0 0.0
  %524 = vmatpush1.msra.mxu0 0.0
  %525 = vmatprep.subr.mxu0 0.0
  %526 = vmatpush1.msra.mxu0 0.0
  %527 = vmatprep.subr.mxu0 0.0
  %528 = vmatpush1.msra.mxu0 0.0
  %529 = vmatprep.subr.mxu0 0.0
  %530 = vmatpush1.msra.mxu0 0.0
  %531 = vmatprep.subr.mxu0 0.0
  %532 = vmatpush1.msra.mxu0 0.0
  %533 = vmatprep.subr.mxu0 0.0
  %534 = vmatpush1.msra.mxu0 0.0
  %535 = vmatprep.subr.mxu0 0.0
  %536 = vmatpush1.msra.mxu0 0.0
  %537 = vmatprep.subr.mxu0 0.0
  %538 = vmatpush1.msra.mxu0 0.0
  %539 = vmatprep.subr.mxu0 0.0
  %540 = vmatpush1.msra.mxu0 0.0
  %541 = vmatprep.subr.mxu0 0.0
  %542 = vmatpush1.msra.mxu0 0.0
  %543 = vmatprep.mubr.f32.mxu0 0.0
  %544 = vmatmul.mubr.f32.gmra.mrb[0].mxu0 %v477
  %v545 = vpop.f32.mrb[0].mxu0
  %v546 = vadd.f32 %v473, %v545
  %v547 = vpop.f32.mrb[0].mxu0
  %548 = vdwg.mxu0
  %v549 = vadd.f32 %v546, %v201
  %v550 = vxor.u32 %v549, 2147483648
  %v551 = vmul.f32 %v550, 1.442695
  %v552 = vpow.pop %v551
  %v553 = vadd.f32 %v552, 1.0
  %v554 = vrcp.pop %v553
  %v555 = vmul.f32 1.0, %v554
  %v556 = vtanh.pop %v549
  %v557 = vmul.f32 %v555, %v221
  %559 = vrot.lane.b32.xlu0 %v556, 64
  %v560 = vpop.permute.xlu0 %559
  %v562 = vmul.f32 %v555, %v560
  %564 = vrot.lane.b32.xlu0 %v562, 32
  %v565 = vpop.permute.xlu0 %564
  %v567 = vadd.f32 %v557, %v565
  %v568 = vtanh.pop %v567
  %570 = vrot.lane.b32.xlu0 %v568, 64
  %v571 = vpop.permute.xlu0 %570
  %v573 = vmul.f32 %v555, %v571
  %575 = vrot.lane.b32.xlu0 %v403, 32
  %v576 = vpop.permute.xlu0 %575
  %v577 = vsel %vm49, %v576, 0
  %579 = vmatprep.subr.mxu0 0.0
  %580 = vmatpush1.msra.mxu0 %v42
  %581 = vmatprep.subr.mxu0 0.0
  %582 = vmatpush1.msra.mxu0 %v43
  %583 = vmatprep.subr.mxu0 0.0
  %584 = vmatpush1.msra.mxu0 %v44
  %585 = vmatprep.subr.mxu0 0.0
  %586 = vmatpush1.msra.mxu0 %v45
  %587 = vmatprep.subr.mxu0 0.0
  %588 = vmatpush1.msra.mxu0 0.0
  %589 = vmatprep.subr.mxu0 0.0
  %590 = vmatpush1.msra.mxu0 0.0
  %591 = vmatprep.subr.mxu0 0.0
  %592 = vmatpush1.msra.mxu0 0.0
  %593 = vmatprep.subr.mxu0 0.0
  %594 = vmatpush1.msra.mxu0 0.0
  %595 = vmatprep.subr.mxu0 0.0
  %596 = vmatpush1.msra.mxu0 0.0
  %597 = vmatprep.subr.mxu0 0.0
  %598 = vmatpush1.msra.mxu0 0.0
  %599 = vmatprep.subr.mxu0 0.0
  %600 = vmatpush1.msra.mxu0 0.0
  %601 = vmatprep.subr.mxu0 0.0
  %602 = vmatpush1.msra.mxu0 0.0
  %603 = vmatprep.subr.mxu0 0.0
  %604 = vmatpush1.msra.mxu0 0.0
  %605 = vmatprep.subr.mxu0 0.0
  %606 = vmatpush1.msra.mxu0 0.0
  %607 = vmatprep.subr.mxu0 0.0
  %608 = vmatpush1.msra.mxu0 0.0
  %609 = vmatprep.subr.mxu0 0.0
  %610 = vmatpush1.msra.mxu0 0.0
  %611 = vmatprep.subr.mxu0 0.0
  %612 = vmatpush1.msra.mxu0 0.0
  %613 = vmatprep.subr.mxu0 0.0
  %614 = vmatpush1.msra.mxu0 0.0
  %615 = vmatprep.subr.mxu0 0.0
  %616 = vmatpush1.msra.mxu0 0.0
  %617 = vmatprep.subr.mxu0 0.0
  %618 = vmatpush1.msra.mxu0 0.0
  %619 = vmatprep.subr.mxu0 0.0
  %620 = vmatpush1.msra.mxu0 0.0
  %621 = vmatprep.subr.mxu0 0.0
  %622 = vmatpush1.msra.mxu0 0.0
  %623 = vmatprep.subr.mxu0 0.0
  %624 = vmatpush1.msra.mxu0 0.0
  %625 = vmatprep.subr.mxu0 0.0
  %626 = vmatpush1.msra.mxu0 0.0
  %627 = vmatprep.subr.mxu0 0.0
  %628 = vmatpush1.msra.mxu0 0.0
  %629 = vmatprep.subr.mxu0 0.0
  %630 = vmatpush1.msra.mxu0 0.0
  %631 = vmatprep.subr.mxu0 0.0
  %632 = vmatpush1.msra.mxu0 0.0
  %633 = vmatprep.subr.mxu0 0.0
  %634 = vmatpush1.msra.mxu0 0.0
  %635 = vmatprep.subr.mxu0 0.0
  %636 = vmatpush1.msra.mxu0 0.0
  %637 = vmatprep.subr.mxu0 0.0
  %638 = vmatpush1.msra.mxu0 0.0
  %639 = vmatprep.subr.mxu0 0.0
  %640 = vmatpush1.msra.mxu0 0.0
  %641 = vmatprep.subr.mxu0 0.0
  %642 = vmatpush1.msra.mxu0 0.0
  %643 = vmatprep.mubr.f32.mxu0 0.0
  %644 = vmatmul.mubr.f32.gmra.mrb[0].mxu0 %v577
  %v645 = vpop.f32.mrb[0].mxu0
  %v646 = vadd.f32 0.0, %v645
  %v647 = vpop.f32.mrb[0].mxu0
  %648 = vdwg.mxu0
  %650 = vrot.lane.b32.xlu0 %v573, 32
  %v651 = vpop.permute.xlu0 %650
  %v652 = vsel %vm49, %v651, 0
  %654 = vmatprep.subr.mxu0 0.0
  %655 = vmatpush1.msra.mxu0 %v34
  %656 = vmatprep.subr.mxu0 0.0
  %657 = vmatpush1.msra.mxu0 %v35
  %658 = vmatprep.subr.mxu0 0.0
  %659 = vmatpush1.msra.mxu0 %v36
  %660 = vmatprep.subr.mxu0 0.0
  %661 = vmatpush1.msra.mxu0 %v37
  %662 = vmatprep.subr.mxu0 0.0
  %663 = vmatpush1.msra.mxu0 0.0
  %664 = vmatprep.subr.mxu0 0.0
  %665 = vmatpush1.msra.mxu0 0.0
  %666 = vmatprep.subr.mxu0 0.0
  %667 = vmatpush1.msra.mxu0 0.0
  %668 = vmatprep.subr.mxu0 0.0
  %669 = vmatpush1.msra.mxu0 0.0
  %670 = vmatprep.subr.mxu0 0.0
  %671 = vmatpush1.msra.mxu0 0.0
  %672 = vmatprep.subr.mxu0 0.0
  %673 = vmatpush1.msra.mxu0 0.0
  %674 = vmatprep.subr.mxu0 0.0
  %675 = vmatpush1.msra.mxu0 0.0
  %676 = vmatprep.subr.mxu0 0.0
  %677 = vmatpush1.msra.mxu0 0.0
  %678 = vmatprep.subr.mxu0 0.0
  %679 = vmatpush1.msra.mxu0 0.0
  %680 = vmatprep.subr.mxu0 0.0
  %681 = vmatpush1.msra.mxu0 0.0
  %682 = vmatprep.subr.mxu0 0.0
  %683 = vmatpush1.msra.mxu0 0.0
  %684 = vmatprep.subr.mxu0 0.0
  %685 = vmatpush1.msra.mxu0 0.0
  %686 = vmatprep.subr.mxu0 0.0
  %687 = vmatpush1.msra.mxu0 0.0
  %688 = vmatprep.subr.mxu0 0.0
  %689 = vmatpush1.msra.mxu0 0.0
  %690 = vmatprep.subr.mxu0 0.0
  %691 = vmatpush1.msra.mxu0 0.0
  %692 = vmatprep.subr.mxu0 0.0
  %693 = vmatpush1.msra.mxu0 0.0
  %694 = vmatprep.subr.mxu0 0.0
  %695 = vmatpush1.msra.mxu0 0.0
  %696 = vmatprep.subr.mxu0 0.0
  %697 = vmatpush1.msra.mxu0 0.0
  %698 = vmatprep.subr.mxu0 0.0
  %699 = vmatpush1.msra.mxu0 0.0
  %700 = vmatprep.subr.mxu0 0.0
  %701 = vmatpush1.msra.mxu0 0.0
  %702 = vmatprep.subr.mxu0 0.0
  %703 = vmatpush1.msra.mxu0 0.0
  %704 = vmatprep.subr.mxu0 0.0
  %705 = vmatpush1.msra.mxu0 0.0
  %706 = vmatprep.subr.mxu0 0.0
  %707 = vmatpush1.msra.mxu0 0.0
  %708 = vmatprep.subr.mxu0 0.0
  %709 = vmatpush1.msra.mxu0 0.0
  %710 = vmatprep.subr.mxu0 0.0
  %711 = vmatpush1.msra.mxu0 0.0
  %712 = vmatprep.subr.mxu0 0.0
  %713 = vmatpush1.msra.mxu0 0.0
  %714 = vmatprep.subr.mxu0 0.0
  %715 = vmatpush1.msra.mxu0 0.0
  %716 = vmatprep.subr.mxu0 0.0
  %717 = vmatpush1.msra.mxu0 0.0
  %718 = vmatprep.mubr.f32.mxu0 0.0
  %719 = vmatmul.mubr.f32.gmra.mrb[0].mxu0 %v652
  %v720 = vpop.f32.mrb[0].mxu0
  %v721 = vadd.f32 %v646, %v720
  %v722 = vpop.f32.mrb[0].mxu0
  %723 = vdwg.mxu0
  %v724 = vadd.f32 %v721, %v377
  %v725 = vxor.u32 %v724, 2147483648
  %v726 = vmul.f32 %v725, 1.442695
  %v727 = vpow.pop %v726
  %v728 = vadd.f32 %v727, 1.0
  %v729 = vrcp.pop %v728
  %v730 = vmul.f32 1.0, %v729
  %v731 = vtanh.pop %v724
  %v732 = vmul.f32 %v730, %v397
  %734 = vrot.lane.b32.xlu0 %v731, 64
  %v735 = vpop.permute.xlu0 %734
  %v737 = vmul.f32 %v730, %v735
  %739 = vrot.lane.b32.xlu0 %v737, 32
  %v740 = vpop.permute.xlu0 %739
  %v742 = vadd.f32 %v732, %v740
  %v743 = vtanh.pop %v742
  %745 = vrot.lane.b32.xlu0 %v743, 64
  %v746 = vpop.permute.xlu0 %745
  %v748 = vmul.f32 %v730, %v746
  %s749 = scalar_lea.vmem %s0, 16
  %v750 = vld [vmem:[%s749] sm:$0xff]
  %751 = vmatprep.subr.mxu0 0.0
  %752 = vmatpush1.msra.mxu0 %v38
  %753 = vmatprep.subr.mxu0 0.0
  %754 = vmatpush1.msra.mxu0 %v39
  %755 = vmatprep.subr.mxu0 0.0
  %756 = vmatpush1.msra.mxu0 %v40
  %757 = vmatprep.subr.mxu0 0.0
  %758 = vmatpush1.msra.mxu0 %v41
  %759 = vmatprep.subr.mxu0 0.0
  %760 = vmatpush1.msra.mxu0 0.0
  %761 = vmatprep.subr.mxu0 0.0
  %762 = vmatpush1.msra.mxu0 0.0
  %763 = vmatprep.subr.mxu0 0.0
  %764 = vmatpush1.msra.mxu0 0.0
  %765 = vmatprep.subr.mxu0 0.0
  %766 = vmatpush1.msra.mxu0 0.0
  %767 = vmatprep.subr.mxu0 0.0
  %768 = vmatpush1.msra.mxu0 0.0
  %769 = vmatprep.subr.mxu0 0.0
  %770 = vmatpush1.msra.mxu0 0.0
  %771 = vmatprep.subr.mxu0 0.0
  %772 = vmatpush1.msra.mxu0 0.0
  %773 = vmatprep.subr.mxu0 0.0
  %774 = vmatpush1.msra.mxu0 0.0
  %775 = vmatprep.subr.mxu0 0.0
  %776 = vmatpush1.msra.mxu0 0.0
  %777 = vmatprep.subr.mxu0 0.0
  %778 = vmatpush1.msra.mxu0 0.0
  %779 = vmatprep.subr.mxu0 0.0
  %780 = vmatpush1.msra.mxu0 0.0
  %781 = vmatprep.subr.mxu0 0.0
  %782 = vmatpush1.msra.mxu0 0.0
  %783 = vmatprep.subr.mxu0 0.0
  %784 = vmatpush1.msra.mxu0 0.0
  %785 = vmatprep.subr.mxu0 0.0
  %786 = vmatpush1.msra.mxu0 0.0
  %787 = vmatprep.subr.mxu0 0.0
  %788 = vmatpush1.msra.mxu0 0.0
  %789 = vmatprep.subr.mxu0 0.0
  %790 = vmatpush1.msra.mxu0 0.0
  %791 = vmatprep.subr.mxu0 0.0
  %792 = vmatpush1.msra.mxu0 0.0
  %793 = vmatprep.subr.mxu0 0.0
  %794 = vmatpush1.msra.mxu0 0.0
  %795 = vmatprep.subr.mxu0 0.0
  %796 = vmatpush1.msra.mxu0 0.0
  %797 = vmatprep.subr.mxu0 0.0
  %798 = vmatpush1.msra.mxu0 0.0
  %799 = vmatprep.subr.mxu0 0.0
  %800 = vmatpush1.msra.mxu0 0.0
  %801 = vmatprep.subr.mxu0 0.0
  %802 = vmatpush1.msra.mxu0 0.0
  %803 = vmatprep.subr.mxu0 0.0
  %804 = vmatpush1.msra.mxu0 0.0
  %805 = vmatprep.subr.mxu0 0.0
  %806 = vmatpush1.msra.mxu0 0.0
  %807 = vmatprep.subr.mxu0 0.0
  %808 = vmatpush1.msra.mxu0 0.0
  %809 = vmatprep.subr.mxu0 0.0
  %810 = vmatpush1.msra.mxu0 0.0
  %811 = vmatprep.subr.mxu0 0.0
  %812 = vmatpush1.msra.mxu0 0.0
  %813 = vmatprep.subr.mxu0 0.0
  %814 = vmatpush1.msra.mxu0 0.0
  %815 = vmatprep.mubr.f32.mxu0 0.0
  %816 = vmatmul.mubr.f32.gmra.mrb[0].mxu0 %v652
  %v817 = vpop.f32.mrb[0].mxu0
  %v818 = vadd.f32 0.0, %v817
  %v819 = vpop.f32.mrb[0].mxu0
  %820 = vdwg.mxu0
  %v822 = vsel %vm123, %v750, 0
  %824 = vmatprep.subr.mxu0 0.0
  %825 = vmatpush1.msra.mxu0 %v32
  %826 = vmatprep.subr.mxu0 0.0
  %827 = vmatpush1.msra.mxu0 %v33
  %828 = vmatprep.subr.mxu0 0.0
  %829 = vmatpush1.msra.mxu0 0.0
  %830 = vmatprep.subr.mxu0 0.0
  %831 = vmatpush1.msra.mxu0 0.0
  %832 = vmatprep.subr.mxu0 0.0
  %833 = vmatpush1.msra.mxu0 0.0
  %834 = vmatprep.subr.mxu0 0.0
  %835 = vmatpush1.msra.mxu0 0.0
  %836 = vmatprep.subr.mxu0 0.0
  %837 = vmatpush1.msra.mxu0 0.0
  %838 = vmatprep.subr.mxu0 0.0
  %839 = vmatpush1.msra.mxu0 0.0
  %840 = vmatprep.subr.mxu0 0.0
  %841 = vmatpush1.msra.mxu0 0.0
  %842 = vmatprep.subr.mxu0 0.0
  %843 = vmatpush1.msra.mxu0 0.0
  %844 = vmatprep.subr.mxu0 0.0
  %845 = vmatpush1.msra.mxu0 0.0
  %846 = vmatprep.subr.mxu0 0.0
  %847 = vmatpush1.msra.mxu0 0.0
  %848 = vmatprep.subr.mxu0 0.0
  %849 = vmatpush1.msra.mxu0 0.0
  %850 = vmatprep.subr.mxu0 0.0
  %851 = vmatpush1.msra.mxu0 0.0
  %852 = vmatprep.subr.mxu0 0.0
  %853 = vmatpush1.msra.mxu0 0.0
  %854 = vmatprep.subr.mxu0 0.0
  %855 = vmatpush1.msra.mxu0 0.0
  %856 = vmatprep.subr.mxu0 0.0
  %857 = vmatpush1.msra.mxu0 0.0
  %858 = vmatprep.subr.mxu0 0.0
  %859 = vmatpush1.msra.mxu0 0.0
  %860 = vmatprep.subr.mxu0 0.0
  %861 = vmatpush1.msra.mxu0 0.0
  %862 = vmatprep.subr.mxu0 0.0
  %863 = vmatpush1.msra.mxu0 0.0
  %864 = vmatprep.subr.mxu0 0.0
  %865 = vmatpush1.msra.mxu0 0.0
  %866 = vmatprep.subr.mxu0 0.0
  %867 = vmatpush1.msra.mxu0 0.0
  %868 = vmatprep.subr.mxu0 0.0
  %869 = vmatpush1.msra.mxu0 0.0
  %870 = vmatprep.subr.mxu0 0.0
  %871 = vmatpush1.msra.mxu0 0.0
  %872 = vmatprep.subr.mxu0 0.0
  %873 = vmatpush1.msra.mxu0 0.0
  %874 = vmatprep.subr.mxu0 0.0
  %875 = vmatpush1.msra.mxu0 0.0
  %876 = vmatprep.subr.mxu0 0.0
  %877 = vmatpush1.msra.mxu0 0.0
  %878 = vmatprep.subr.mxu0 0.0
  %879 = vmatpush1.msra.mxu0 0.0
  %880 = vmatprep.subr.mxu0 0.0
  %881 = vmatpush1.msra.mxu0 0.0
  %882 = vmatprep.subr.mxu0 0.0
  %883 = vmatpush1.msra.mxu0 0.0
  %884 = vmatprep.subr.mxu0 0.0
  %885 = vmatpush1.msra.mxu0 0.0
  %886 = vmatprep.subr.mxu0 0.0
  %887 = vmatpush1.msra.mxu0 0.0
  %888 = vmatprep.mubr.f32.mxu0 0.0
  %889 = vmatmul.mubr.f32.gmra.mrb[0].mxu0 %v822
  %v890 = vpop.f32.mrb[0].mxu0
  %v891 = vadd.f32 %v818, %v890
  %v892 = vpop.f32.mrb[0].mxu0
  %893 = vdwg.mxu0
  %v894 = vadd.f32 %v891, %v201
  %v895 = vxor.u32 %v894, 2147483648
  %v896 = vmul.f32 %v895, 1.442695
  %v897 = vpow.pop %v896
  %v898 = vadd.f32 %v897, 1.0
  %v899 = vrcp.pop %v898
  %v900 = vmul.f32 1.0, %v899
  %v901 = vtanh.pop %v894
  %v902 = vmul.f32 %v900, %v567
  %904 = vrot.lane.b32.xlu0 %v901, 64
  %v905 = vpop.permute.xlu0 %904
  %v907 = vmul.f32 %v900, %v905
  %909 = vrot.lane.b32.xlu0 %v907, 32
  %v910 = vpop.permute.xlu0 %909
  %v912 = vadd.f32 %v902, %v910
  %v913 = vtanh.pop %v912
  %915 = vrot.lane.b32.xlu0 %v913, 64
  %v916 = vpop.permute.xlu0 %915
  %v918 = vmul.f32 %v900, %v916
  %920 = vrot.lane.b32.xlu0 %v748, 32
  %v921 = vpop.permute.xlu0 %920
  %v922 = vsel %vm49, %v921, 0
  %924 = vmatprep.subr.mxu0 0.0
  %925 = vmatpush1.msra.mxu0 %v42
  %926 = vmatprep.subr.mxu0 0.0
  %927 = vmatpush1.msra.mxu0 %v43
  %928 = vmatprep.subr.mxu0 0.0
  %929 = vmatpush1.msra.mxu0 %v44
  %930 = vmatprep.subr.mxu0 0.0
  %931 = vmatpush1.msra.mxu0 %v45
  %932 = vmatprep.subr.mxu0 0.0
  %933 = vmatpush1.msra.mxu0 0.0
  %934 = vmatprep.subr.mxu0 0.0
  %935 = vmatpush1.msra.mxu0 0.0
  %936 = vmatprep.subr.mxu0 0.0
  %937 = vmatpush1.msra.mxu0 0.0
  %938 = vmatprep.subr.mxu0 0.0
  %939 = vmatpush1.msra.mxu0 0.0
  %940 = vmatprep.subr.mxu0 0.0
  %941 = vmatpush1.msra.mxu0 0.0
  %942 = vmatprep.subr.mxu0 0.0
  %943 = vmatpush1.msra.mxu0 0.0
  %944 = vmatprep.subr.mxu0 0.0
  %945 = vmatpush1.msra.mxu0 0.0
  %946 = vmatprep.subr.mxu0 0.0
  %947 = vmatpush1.msra.mxu0 0.0
  %948 = vmatprep.subr.mxu0 0.0
  %949 = vmatpush1.msra.mxu0 0.0
  %950 = vmatprep.subr.mxu0 0.0
  %951 = vmatpush1.msra.mxu0 0.0
  %952 = vmatprep.subr.mxu0 0.0
  %953 = vmatpush1.msra.mxu0 0.0
  %954 = vmatprep.subr.mxu0 0.0
  %955 = vmatpush1.msra.mxu0 0.0
  %956 = vmatprep.subr.mxu0 0.0
  %957 = vmatpush1.msra.mxu0 0.0
  %958 = vmatprep.subr.mxu0 0.0
  %959 = vmatpush1.msra.mxu0 0.0
  %960 = vmatprep.subr.mxu0 0.0
  %961 = vmatpush1.msra.mxu0 0.0
  %962 = vmatprep.subr.mxu0 0.0
  %963 = vmatpush1.msra.mxu0 0.0
  %964 = vmatprep.subr.mxu0 0.0
  %965 = vmatpush1.msra.mxu0 0.0
  %966 = vmatprep.subr.mxu0 0.0
  %967 = vmatpush1.msra.mxu0 0.0
  %968 = vmatprep.subr.mxu0 0.0
  %969 = vmatpush1.msra.mxu0 0.0
  %970 = vmatprep.subr.mxu0 0.0
  %971 = vmatpush1.msra.mxu0 0.0
  %972 = vmatprep.subr.mxu0 0.0
  %973 = vmatpush1.msra.mxu0 0.0
  %974 = vmatprep.subr.mxu0 0.0
  %975 = vmatpush1.msra.mxu0 0.0
  %976 = vmatprep.subr.mxu0 0.0
  %977 = vmatpush1.msra.mxu0 0.0
  %978 = vmatprep.subr.mxu0 0.0
  %979 = vmatpush1.msra.mxu0 0.0
  %980 = vmatprep.subr.mxu0 0.0
  %981 = vmatpush1.msra.mxu0 0.0
  %982 = vmatprep.subr.mxu0 0.0
  %983 = vmatpush1.msra.mxu0 0.0
  %984 = vmatprep.subr.mxu0 0.0
  %985 = vmatpush1.msra.mxu0 0.0
  %986 = vmatprep.subr.mxu0 0.0
  %987 = vmatpush1.msra.mxu0 0.0
  %988 = vmatprep.mubr.f32.mxu0 0.0
  %989 = vmatmul.mubr.f32.gmra.mrb[0].mxu0 %v922
  %v990 = vpop.f32.mrb[0].mxu0
  %v991 = vadd.f32 0.0, %v990
  %v992 = vpop.f32.mrb[0].mxu0
  %993 = vdwg.mxu0
  %995 = vrot.lane.b32.xlu0 %v918, 32
  %v996 = vpop.permute.xlu0 %995
  %v997 = vsel %vm49, %v996, 0
  %999 = vmatprep.subr.mxu0 0.0
  %1000 = vmatpush1.msra.mxu0 %v34
  %1001 = vmatprep.subr.mxu0 0.0
  %1002 = vmatpush1.msra.mxu0 %v35
  %1003 = vmatprep.subr.mxu0 0.0
  %1004 = vmatpush1.msra.mxu0 %v36
  %1005 = vmatprep.subr.mxu0 0.0
  %1006 = vmatpush1.msra.mxu0 %v37
  %1007 = vmatprep.subr.mxu0 0.0
  %1008 = vmatpush1.msra.mxu0 0.0
  %1009 = vmatprep.subr.mxu0 0.0
  %1010 = vmatpush1.msra.mxu0 0.0
  %1011 = vmatprep.subr.mxu0 0.0
  %1012 = vmatpush1.msra.mxu0 0.0
  %1013 = vmatprep.subr.mxu0 0.0
  %1014 = vmatpush1.msra.mxu0 0.0
  %1015 = vmatprep.subr.mxu0 0.0
  %1016 = vmatpush1.msra.mxu0 0.0
  %1017 = vmatprep.subr.mxu0 0.0
  %1018 = vmatpush1.msra.mxu0 0.0
  %1019 = vmatprep.subr.mxu0 0.0
  %1020 = vmatpush1.msra.mxu0 0.0
  %1021 = vmatprep.subr.mxu0 0.0
  %1022 = vmatpush1.msra.mxu0 0.0
  %1023 = vmatprep.subr.mxu0 0.0
  %1024 = vmatpush1.msra.mxu0 0.0
  %1025 = vmatprep.subr.mxu0 0.0
  %1026 = vmatpush1.msra.mxu0 0.0
  %1027 = vmatprep.subr.mxu0 0.0
  %1028 = vmatpush1.msra.mxu0 0.0
  %1029 = vmatprep.subr.mxu0 0.0
  %1030 = vmatpush1.msra.mxu0 0.0
  %1031 = vmatprep.subr.mxu0 0.0
  %1032 = vmatpush1.msra.mxu0 0.0
  %1033 = vmatprep.subr.mxu0 0.0
  %1034 = vmatpush1.msra.mxu0 0.0
  %1035 = vmatprep.subr.mxu0 0.0
  %1036 = vmatpush1.msra.mxu0 0.0
  %1037 = vmatprep.subr.mxu0 0.0
  %1038 = vmatpush1.msra.mxu0 0.0
  %1039 = vmatprep.subr.mxu0 0.0
  %1040 = vmatpush1.msra.mxu0 0.0
  %1041 = vmatprep.subr.mxu0 0.0
  %1042 = vmatpush1.msra.mxu0 0.0
  %1043 = vmatprep.subr.mxu0 0.0
  %1044 = vmatpush1.msra.mxu0 0.0
  %1045 = vmatprep.subr.mxu0 0.0
  %1046 = vmatpush1.msra.mxu0 0.0
  %1047 = vmatprep.subr.mxu0 0.0
  %1048 = vmatpush1.msra.mxu0 0.0
  %1049 = vmatprep.subr.mxu0 0.0
  %1050 = vmatpush1.msra.mxu0 0.0
  %1051 = vmatprep.subr.mxu0 0.0
  %1052 = vmatpush1.msra.mxu0 0.0
  %1053 = vmatprep.subr.mxu0 0.0
  %1054 = vmatpush1.msra.mxu0 0.0
  %1055 = vmatprep.subr.mxu0 0.0
  %1056 = vmatpush1.msra.mxu0 0.0
  %1057 = vmatprep.subr.mxu0 0.0
  %1058 = vmatpush1.msra.mxu0 0.0
  %1059 = vmatprep.subr.mxu0 0.0
  %1060 = vmatpush1.msra.mxu0 0.0
  %1061 = vmatprep.subr.mxu0 0.0
  %1062 = vmatpush1.msra.mxu0 0.0
  %1063 = vmatprep.mubr.f32.mxu0 0.0
  %1064 = vmatmul.mubr.f32.gmra.mrb[0].mxu0 %v997
  %v1065 = vpop.f32.mrb[0].mxu0
  %v1066 = vadd.f32 %v991, %v1065
  %v1067 = vpop.f32.mrb[0].mxu0
  %1068 = vdwg.mxu0
  %v1069 = vadd.f32 %v1066, %v377
  %v1070 = vxor.u32 %v1069, 2147483648
  %v1071 = vmul.f32 %v1070, 1.442695
  %v1072 = vpow.pop %v1071
  %v1073 = vadd.f32 %v1072, 1.0
  %v1074 = vrcp.pop %v1073
  %v1075 = vmul.f32 1.0, %v1074
  %v1076 = vtanh.pop %v1069
  %v1077 = vmul.f32 %v1075, %v742
  %1079 = vrot.lane.b32.xlu0 %v1076, 64
  %v1080 = vpop.permute.xlu0 %1079
  %v1082 = vmul.f32 %v1075, %v1080
  %1084 = vrot.lane.b32.xlu0 %v1082, 32
  %v1085 = vpop.permute.xlu0 %1084
  %v1087 = vadd.f32 %v1077, %v1085
  %v1088 = vtanh.pop %v1087
  %1090 = vrot.lane.b32.xlu0 %v1088, 64
  %v1091 = vpop.permute.xlu0 %1090
  %v1093 = vmul.f32 %v1075, %v1091
  %s1094 = scalar_lea.vmem %s0, 24
  %v1095 = vld [vmem:[%s1094] sm:$0xff]
  %1096 = vmatprep.subr.mxu0 0.0
  %1097 = vmatpush1.msra.mxu0 %v38
  %1098 = vmatprep.subr.mxu0 0.0
  %1099 = vmatpush1.msra.mxu0 %v39
  %1100 = vmatprep.subr.mxu0 0.0
  %1101 = vmatpush1.msra.mxu0 %v40
  %1102 = vmatprep.subr.mxu0 0.0
  %1103 = vmatpush1.msra.mxu0 %v41
  %1104 = vmatprep.subr.mxu0 0.0
  %1105 = vmatpush1.msra.mxu0 0.0
  %1106 = vmatprep.subr.mxu0 0.0
  %1107 = vmatpush1.msra.mxu0 0.0
  %1108 = vmatprep.subr.mxu0 0.0
  %1109 = vmatpush1.msra.mxu0 0.0
  %1110 = vmatprep.subr.mxu0 0.0
  %1111 = vmatpush1.msra.mxu0 0.0
  %1112 = vmatprep.subr.mxu0 0.0
  %1113 = vmatpush1.msra.mxu0 0.0
  %1114 = vmatprep.subr.mxu0 0.0
  %1115 = vmatpush1.msra.mxu0 0.0
  %1116 = vmatprep.subr.mxu0 0.0
  %1117 = vmatpush1.msra.mxu0 0.0
  %1118 = vmatprep.subr.mxu0 0.0
  %1119 = vmatpush1.msra.mxu0 0.0
  %1120 = vmatprep.subr.mxu0 0.0
  %1121 = vmatpush1.msra.mxu0 0.0
  %1122 = vmatprep.subr.mxu0 0.0
  %1123 = vmatpush1.msra.mxu0 0.0
  %1124 = vmatprep.subr.mxu0 0.0
  %1125 = vmatpush1.msra.mxu0 0.0
  %1126 = vmatprep.subr.mxu0 0.0
  %1127 = vmatpush1.msra.mxu0 0.0
  %1128 = vmatprep.subr.mxu0 0.0
  %1129 = vmatpush1.msra.mxu0 0.0
  %1130 = vmatprep.subr.mxu0 0.0
  %1131 = vmatpush1.msra.mxu0 0.0
  %1132 = vmatprep.subr.mxu0 0.0
  %1133 = vmatpush1.msra.mxu0 0.0
  %1134 = vmatprep.subr.mxu0 0.0
  %1135 = vmatpush1.msra.mxu0 0.0
  %1136 = vmatprep.subr.mxu0 0.0
  %1137 = vmatpush1.msra.mxu0 0.0
  %1138 = vmatprep.subr.mxu0 0.0
  %1139 = vmatpush1.msra.mxu0 0.0
  %1140 = vmatprep.subr.mxu0 0.0
  %1141 = vmatpush1.msra.mxu0 0.0
  %1142 = vmatprep.subr.mxu0 0.0
  %1143 = vmatpush1.msra.mxu0 0.0
  %1144 = vmatprep.subr.mxu0 0.0
  %1145 = vmatpush1.msra.mxu0 0.0
  %1146 = vmatprep.subr.mxu0 0.0
  %1147 = vmatpush1.msra.mxu0 0.0
  %1148 = vmatprep.subr.mxu0 0.0
  %1149 = vmatpush1.msra.mxu0 0.0
  %1150 = vmatprep.subr.mxu0 0.0
  %1151 = vmatpush1.msra.mxu0 0.0
  %1152 = vmatprep.subr.mxu0 0.0
  %1153 = vmatpush1.msra.mxu0 0.0
  %1154 = vmatprep.subr.mxu0 0.0
  %1155 = vmatpush1.msra.mxu0 0.0
  %1156 = vmatprep.subr.mxu0 0.0
  %1157 = vmatpush1.msra.mxu0 0.0
  %1158 = vmatprep.subr.mxu0 0.0
  %1159 = vmatpush1.msra.mxu0 0.0
  %1160 = vmatprep.mubr.f32.mxu0 0.0
  %1161 = vmatmul.mubr.f32.gmra.mrb[0].mxu0 %v997
  %v1162 = vpop.f32.mrb[0].mxu0
  %v1163 = vadd.f32 0.0, %v1162
  %v1164 = vpop.f32.mrb[0].mxu0
  %1165 = vdwg.mxu0
  %v1167 = vsel %vm123, %v1095, 0
  %1169 = vmatprep.subr.mxu0 0.0
  %1170 = vmatpush1.msra.mxu0 %v32
  %1171 = vmatprep.subr.mxu0 0.0
  %1172 = vmatpush1.msra.mxu0 %v33
  %1173 = vmatprep.subr.mxu0 0.0
  %1174 = vmatpush1.msra.mxu0 0.0
  %1175 = vmatprep.subr.mxu0 0.0
  %1176 = vmatpush1.msra.mxu0 0.0
  %1177 = vmatprep.subr.mxu0 0.0
  %1178 = vmatpush1.msra.mxu0 0.0
  %1179 = vmatprep.subr.mxu0 0.0
  %1180 = vmatpush1.msra.mxu0 0.0
  %1181 = vmatprep.subr.mxu0 0.0
  %1182 = vmatpush1.msra.mxu0 0.0
  %1183 = vmatprep.subr.mxu0 0.0
  %1184 = vmatpush1.msra.mxu0 0.0
  %1185 = vmatprep.subr.mxu0 0.0
  %1186 = vmatpush1.msra.mxu0 0.0
  %1187 = vmatprep.subr.mxu0 0.0
  %1188 = vmatpush1.msra.mxu0 0.0
  %1189 = vmatprep.subr.mxu0 0.0
  %1190 = vmatpush1.msra.mxu0 0.0
  %1191 = vmatprep.subr.mxu0 0.0
  %1192 = vmatpush1.msra.mxu0 0.0
  %1193 = vmatprep.subr.mxu0 0.0
  %1194 = vmatpush1.msra.mxu0 0.0
  %1195 = vmatprep.subr.mxu0 0.0
  %1196 = vmatpush1.msra.mxu0 0.0
  %1197 = vmatprep.subr.mxu0 0.0
  %1198 = vmatpush1.msra.mxu0 0.0
  %1199 = vmatprep.subr.mxu0 0.0
  %1200 = vmatpush1.msra.mxu0 0.0
  %1201 = vmatprep.subr.mxu0 0.0
  %1202 = vmatpush1.msra.mxu0 0.0
  %1203 = vmatprep.subr.mxu0 0.0
  %1204 = vmatpush1.msra.mxu0 0.0
  %1205 = vmatprep.subr.mxu0 0.0
  %1206 = vmatpush1.msra.mxu0 0.0
  %1207 = vmatprep.subr.mxu0 0.0
  %1208 = vmatpush1.msra.mxu0 0.0
  %1209 = vmatprep.subr.mxu0 0.0
  %1210 = vmatpush1.msra.mxu0 0.0
  %1211 = vmatprep.subr.mxu0 0.0
  %1212 = vmatpush1.msra.mxu0 0.0
  %1213 = vmatprep.subr.mxu0 0.0
  %1214 = vmatpush1.msra.mxu0 0.0
  %1215 = vmatprep.subr.mxu0 0.0
  %1216 = vmatpush1.msra.mxu0 0.0
  %1217 = vmatprep.subr.mxu0 0.0
  %1218 = vmatpush1.msra.mxu0 0.0
  %1219 = vmatprep.subr.mxu0 0.0
  %1220 = vmatpush1.msra.mxu0 0.0
  %1221 = vmatprep.subr.mxu0 0.0
  %1222 = vmatpush1.msra.mxu0 0.0
  %1223 = vmatprep.subr.mxu0 0.0
  %1224 = vmatpush1.msra.mxu0 0.0
  %1225 = vmatprep.subr.mxu0 0.0
  %1226 = vmatpush1.msra.mxu0 0.0
  %1227 = vmatprep.subr.mxu0 0.0
  %1228 = vmatpush1.msra.mxu0 0.0
  %1229 = vmatprep.subr.mxu0 0.0
  %1230 = vmatpush1.msra.mxu0 0.0
  %1231 = vmatprep.subr.mxu0 0.0
  %1232 = vmatpush1.msra.mxu0 0.0
  %1233 = vmatprep.mubr.f32.mxu0 0.0
  %1234 = vmatmul.mubr.f32.gmra.mrb[0].mxu0 %v1167
  %v1235 = vpop.f32.mrb[0].mxu0
  %v1236 = vadd.f32 %v1163, %v1235
  %v1237 = vpop.f32.mrb[0].mxu0
  %1238 = vdwg.mxu0
  %v1239 = vadd.f32 %v1236, %v201
  %v1240 = vxor.u32 %v1239, 2147483648
  %v1241 = vmul.f32 %v1240, 1.442695
  %v1242 = vpow.pop %v1241
  %v1243 = vadd.f32 %v1242, 1.0
  %v1244 = vrcp.pop %v1243
  %v1245 = vmul.f32 1.0, %v1244
  %v1246 = vtanh.pop %v1239
  %v1247 = vmul.f32 %v1245, %v912
  %1249 = vrot.lane.b32.xlu0 %v1246, 64
  %v1250 = vpop.permute.xlu0 %1249
  %v1252 = vmul.f32 %v1245, %v1250
  %1254 = vrot.lane.b32.xlu0 %v1252, 32
  %v1255 = vpop.permute.xlu0 %1254
  %v1257 = vadd.f32 %v1247, %v1255
  %v1258 = vtanh.pop %v1257
  %1260 = vrot.lane.b32.xlu0 %v1258, 64
  %v1261 = vpop.permute.xlu0 %1260
  %v1263 = vmul.f32 %v1245, %v1261
  %1265 = vrot.lane.b32.xlu0 %v1093, 32
  %v1266 = vpop.permute.xlu0 %1265
  %v1267 = vsel %vm49, %v1266, 0
  %1269 = vmatprep.subr.mxu0 0.0
  %1270 = vmatpush1.msra.mxu0 %v42
  %1271 = vmatprep.subr.mxu0 0.0
  %1272 = vmatpush1.msra.mxu0 %v43
  %1273 = vmatprep.subr.mxu0 0.0
  %1274 = vmatpush1.msra.mxu0 %v44
  %1275 = vmatprep.subr.mxu0 0.0
  %1276 = vmatpush1.msra.mxu0 %v45
  %1277 = vmatprep.subr.mxu0 0.0
  %1278 = vmatpush1.msra.mxu0 0.0
  %1279 = vmatprep.subr.mxu0 0.0
  %1280 = vmatpush1.msra.mxu0 0.0
  %1281 = vmatprep.subr.mxu0 0.0
  %1282 = vmatpush1.msra.mxu0 0.0
  %1283 = vmatprep.subr.mxu0 0.0
  %1284 = vmatpush1.msra.mxu0 0.0
  %1285 = vmatprep.subr.mxu0 0.0
  %1286 = vmatpush1.msra.mxu0 0.0
  %1287 = vmatprep.subr.mxu0 0.0
  %1288 = vmatpush1.msra.mxu0 0.0
  %1289 = vmatprep.subr.mxu0 0.0
  %1290 = vmatpush1.msra.mxu0 0.0
  %1291 = vmatprep.subr.mxu0 0.0
  %1292 = vmatpush1.msra.mxu0 0.0
  %1293 = vmatprep.subr.mxu0 0.0
  %1294 = vmatpush1.msra.mxu0 0.0
  %1295 = vmatprep.subr.mxu0 0.0
  %1296 = vmatpush1.msra.mxu0 0.0
  %1297 = vmatprep.subr.mxu0 0.0
  %1298 = vmatpush1.msra.mxu0 0.0
  %1299 = vmatprep.subr.mxu0 0.0
  %1300 = vmatpush1.msra.mxu0 0.0
  %1301 = vmatprep.subr.mxu0 0.0
  %1302 = vmatpush1.msra.mxu0 0.0
  %1303 = vmatprep.subr.mxu0 0.0
  %1304 = vmatpush1.msra.mxu0 0.0
  %1305 = vmatprep.subr.mxu0 0.0
  %1306 = vmatpush1.msra.mxu0 0.0
  %1307 = vmatprep.subr.mxu0 0.0
  %1308 = vmatpush1.msra.mxu0 0.0
  %1309 = vmatprep.subr.mxu0 0.0
  %1310 = vmatpush1.msra.mxu0 0.0
  %1311 = vmatprep.subr.mxu0 0.0
  %1312 = vmatpush1.msra.mxu0 0.0
  %1313 = vmatprep.subr.mxu0 0.0
  %1314 = vmatpush1.msra.mxu0 0.0
  %1315 = vmatprep.subr.mxu0 0.0
  %1316 = vmatpush1.msra.mxu0 0.0
  %1317 = vmatprep.subr.mxu0 0.0
  %1318 = vmatpush1.msra.mxu0 0.0
  %1319 = vmatprep.subr.mxu0 0.0
  %1320 = vmatpush1.msra.mxu0 0.0
  %1321 = vmatprep.subr.mxu0 0.0
  %1322 = vmatpush1.msra.mxu0 0.0
  %1323 = vmatprep.subr.mxu0 0.0
  %1324 = vmatpush1.msra.mxu0 0.0
  %1325 = vmatprep.subr.mxu0 0.0
  %1326 = vmatpush1.msra.mxu0 0.0
  %1327 = vmatprep.subr.mxu0 0.0
  %1328 = vmatpush1.msra.mxu0 0.0
  %1329 = vmatprep.subr.mxu0 0.0
  %1330 = vmatpush1.msra.mxu0 0.0
  %1331 = vmatprep.subr.mxu0 0.0
  %1332 = vmatpush1.msra.mxu0 0.0
  %1333 = vmatprep.mubr.f32.mxu0 0.0
  %1334 = vmatmul.mubr.f32.gmra.mrb[0].mxu0 %v1267
  %v1335 = vpop.f32.mrb[0].mxu0
  %v1336 = vadd.f32 0.0, %v1335
  %v1337 = vpop.f32.mrb[0].mxu0
  %1338 = vdwg.mxu0
  %1340 = vrot.lane.b32.xlu0 %v1263, 32
  %v1341 = vpop.permute.xlu0 %1340
  %v1342 = vsel %vm49, %v1341, 0
  %1344 = vmatprep.subr.mxu0 0.0
  %1345 = vmatpush1.msra.mxu0 %v34
  %1346 = vmatprep.subr.mxu0 0.0
  %1347 = vmatpush1.msra.mxu0 %v35
  %1348 = vmatprep.subr.mxu0 0.0
  %1349 = vmatpush1.msra.mxu0 %v36
  %1350 = vmatprep.subr.mxu0 0.0
  %1351 = vmatpush1.msra.mxu0 %v37
  %1352 = vmatprep.subr.mxu0 0.0
  %1353 = vmatpush1.msra.mxu0 0.0
  %1354 = vmatprep.subr.mxu0 0.0
  %1355 = vmatpush1.msra.mxu0 0.0
  %1356 = vmatprep.subr.mxu0 0.0
  %1357 = vmatpush1.msra.mxu0 0.0
  %1358 = vmatprep.subr.mxu0 0.0
  %1359 = vmatpush1.msra.mxu0 0.0
  %1360 = vmatprep.subr.mxu0 0.0
  %1361 = vmatpush1.msra.mxu0 0.0
  %1362 = vmatprep.subr.mxu0 0.0
  %1363 = vmatpush1.msra.mxu0 0.0
  %1364 = vmatprep.subr.mxu0 0.0
  %1365 = vmatpush1.msra.mxu0 0.0
  %1366 = vmatprep.subr.mxu0 0.0
  %1367 = vmatpush1.msra.mxu0 0.0
  %1368 = vmatprep.subr.mxu0 0.0
  %1369 = vmatpush1.msra.mxu0 0.0
  %1370 = vmatprep.subr.mxu0 0.0
  %1371 = vmatpush1.msra.mxu0 0.0
  %1372 = vmatprep.subr.mxu0 0.0
  %1373 = vmatpush1.msra.mxu0 0.0
  %1374 = vmatprep.subr.mxu0 0.0
  %1375 = vmatpush1.msra.mxu0 0.0
  %1376 = vmatprep.subr.mxu0 0.0
  %1377 = vmatpush1.msra.mxu0 0.0
  %1378 = vmatprep.subr.mxu0 0.0
  %1379 = vmatpush1.msra.mxu0 0.0
  %1380 = vmatprep.subr.mxu0 0.0
  %1381 = vmatpush1.msra.mxu0 0.0
  %1382 = vmatprep.subr.mxu0 0.0
  %1383 = vmatpush1.msra.mxu0 0.0
  %1384 = vmatprep.subr.mxu0 0.0
  %1385 = vmatpush1.msra.mxu0 0.0
  %1386 = vmatprep.subr.mxu0 0.0
  %1387 = vmatpush1.msra.mxu0 0.0
  %1388 = vmatprep.subr.mxu0 0.0
  %1389 = vmatpush1.msra.mxu0 0.0
  %1390 = vmatprep.subr.mxu0 0.0
  %1391 = vmatpush1.msra.mxu0 0.0
  %1392 = vmatprep.subr.mxu0 0.0
  %1393 = vmatpush1.msra.mxu0 0.0
  %1394 = vmatprep.subr.mxu0 0.0
  %1395 = vmatpush1.msra.mxu0 0.0
  %1396 = vmatprep.subr.mxu0 0.0
  %1397 = vmatpush1.msra.mxu0 0.0
  %1398 = vmatprep.subr.mxu0 0.0
  %1399 = vmatpush1.msra.mxu0 0.0
  %1400 = vmatprep.subr.mxu0 0.0
  %1401 = vmatpush1.msra.mxu0 0.0
  %1402 = vmatprep.subr.mxu0 0.0
  %1403 = vmatpush1.msra.mxu0 0.0
  %1404 = vmatprep.subr.mxu0 0.0
  %1405 = vmatpush1.msra.mxu0 0.0
  %1406 = vmatprep.subr.mxu0 0.0
  %1407 = vmatpush1.msra.mxu0 0.0
  %1408 = vmatprep.mubr.f32.mxu0 0.0
  %1409 = vmatmul.mubr.f32.gmra.mrb[0].mxu0 %v1342
  %v1410 = vpop.f32.mrb[0].mxu0
  %v1411 = vadd.f32 %v1336, %v1410
  %v1412 = vpop.f32.mrb[0].mxu0
  %1413 = vdwg.mxu0
  %v1414 = vadd.f32 %v1411, %v377
  %v1415 = vxor.u32 %v1414, 2147483648
  %v1416 = vmul.f32 %v1415, 1.442695
  %v1417 = vpow.pop %v1416
  %v1418 = vadd.f32 %v1417, 1.0
  %v1419 = vrcp.pop %v1418
  %v1420 = vmul.f32 1.0, %v1419
  %v1421 = vtanh.pop %v1414
  %v1422 = vmul.f32 %v1420, %v1087
  %1424 = vrot.lane.b32.xlu0 %v1421, 64
  %v1425 = vpop.permute.xlu0 %1424
  %v1427 = vmul.f32 %v1420, %v1425
  %1429 = vrot.lane.b32.xlu0 %v1427, 32
  %v1430 = vpop.permute.xlu0 %1429
  %v1432 = vadd.f32 %v1422, %v1430
  %v1433 = vtanh.pop %v1432
  %1435 = vrot.lane.b32.xlu0 %v1433, 64
  %v1436 = vpop.permute.xlu0 %1435
  %v1438 = vmul.f32 %v1420, %v1436
  %s1439 = scalar_lea.vmem %s0, 32
  %v1440 = vld [vmem:[%s1439] sm:$0xff]
  %1441 = vmatprep.subr.mxu0 0.0
  %1442 = vmatpush1.msra.mxu0 %v38
  %1443 = vmatprep.subr.mxu0 0.0
  %1444 = vmatpush1.msra.mxu0 %v39
  %1445 = vmatprep.subr.mxu0 0.0
  %1446 = vmatpush1.msra.mxu0 %v40
  %1447 = vmatprep.subr.mxu0 0.0
  %1448 = vmatpush1.msra.mxu0 %v41
  %1449 = vmatprep.subr.mxu0 0.0
  %1450 = vmatpush1.msra.mxu0 0.0
  %1451 = vmatprep.subr.mxu0 0.0
  %1452 = vmatpush1.msra.mxu0 0.0
  %1453 = vmatprep.subr.mxu0 0.0
  %1454 = vmatpush1.msra.mxu0 0.0
  %1455 = vmatprep.subr.mxu0 0.0
  %1456 = vmatpush1.msra.mxu0 0.0
  %1457 = vmatprep.subr.mxu0 0.0
  %1458 = vmatpush1.msra.mxu0 0.0
  %1459 = vmatprep.subr.mxu0 0.0
  %1460 = vmatpush1.msra.mxu0 0.0
  %1461 = vmatprep.subr.mxu0 0.0
  %1462 = vmatpush1.msra.mxu0 0.0
  %1463 = vmatprep.subr.mxu0 0.0
  %1464 = vmatpush1.msra.mxu0 0.0
  %1465 = vmatprep.subr.mxu0 0.0
  %1466 = vmatpush1.msra.mxu0 0.0
  %1467 = vmatprep.subr.mxu0 0.0
  %1468 = vmatpush1.msra.mxu0 0.0
  %1469 = vmatprep.subr.mxu0 0.0
  %1470 = vmatpush1.msra.mxu0 0.0
  %1471 = vmatprep.subr.mxu0 0.0
  %1472 = vmatpush1.msra.mxu0 0.0
  %1473 = vmatprep.subr.mxu0 0.0
  %1474 = vmatpush1.msra.mxu0 0.0
  %1475 = vmatprep.subr.mxu0 0.0
  %1476 = vmatpush1.msra.mxu0 0.0
  %1477 = vmatprep.subr.mxu0 0.0
  %1478 = vmatpush1.msra.mxu0 0.0
  %1479 = vmatprep.subr.mxu0 0.0
  %1480 = vmatpush1.msra.mxu0 0.0
  %1481 = vmatprep.subr.mxu0 0.0
  %1482 = vmatpush1.msra.mxu0 0.0
  %1483 = vmatprep.subr.mxu0 0.0
  %1484 = vmatpush1.msra.mxu0 0.0
  %1485 = vmatprep.subr.mxu0 0.0
  %1486 = vmatpush1.msra.mxu0 0.0
  %1487 = vmatprep.subr.mxu0 0.0
  %1488 = vmatpush1.msra.mxu0 0.0
  %1489 = vmatprep.subr.mxu0 0.0
  %1490 = vmatpush1.msra.mxu0 0.0
  %1491 = vmatprep.subr.mxu0 0.0
  %1492 = vmatpush1.msra.mxu0 0.0
  %1493 = vmatprep.subr.mxu0 0.0
  %1494 = vmatpush1.msra.mxu0 0.0
  %1495 = vmatprep.subr.mxu0 0.0
  %1496 = vmatpush1.msra.mxu0 0.0
  %1497 = vmatprep.subr.mxu0 0.0
  %1498 = vmatpush1.msra.mxu0 0.0
  %1499 = vmatprep.subr.mxu0 0.0
  %1500 = vmatpush1.msra.mxu0 0.0
  %1501 = vmatprep.subr.mxu0 0.0
  %1502 = vmatpush1.msra.mxu0 0.0
  %1503 = vmatprep.subr.mxu0 0.0
  %1504 = vmatpush1.msra.mxu0 0.0
  %1505 = vmatprep.mubr.f32.mxu0 0.0
  %1506 = vmatmul.mubr.f32.gmra.mrb[0].mxu0 %v1342
  %v1507 = vpop.f32.mrb[0].mxu0
  %v1508 = vadd.f32 0.0, %v1507
  %v1509 = vpop.f32.mrb[0].mxu0
  %1510 = vdwg.mxu0
  %v1512 = vsel %vm123, %v1440, 0
  %1514 = vmatprep.subr.mxu0 0.0
  %1515 = vmatpush1.msra.mxu0 %v32
  %1516 = vmatprep.subr.mxu0 0.0
  %1517 = vmatpush1.msra.mxu0 %v33
  %1518 = vmatprep.subr.mxu0 0.0
  %1519 = vmatpush1.msra.mxu0 0.0
  %1520 = vmatprep.subr.mxu0 0.0
  %1521 = vmatpush1.msra.mxu0 0.0
  %1522 = vmatprep.subr.mxu0 0.0
  %1523 = vmatpush1.msra.mxu0 0.0
  %1524 = vmatprep.subr.mxu0 0.0
  %1525 = vmatpush1.msra.mxu0 0.0
  %1526 = vmatprep.subr.mxu0 0.0
  %1527 = vmatpush1.msra.mxu0 0.0
  %1528 = vmatprep.subr.mxu0 0.0
  %1529 = vmatpush1.msra.mxu0 0.0
  %1530 = vmatprep.subr.mxu0 0.0
  %1531 = vmatpush1.msra.mxu0 0.0
  %1532 = vmatprep.subr.mxu0 0.0
  %1533 = vmatpush1.msra.mxu0 0.0
  %1534 = vmatprep.subr.mxu0 0.0
  %1535 = vmatpush1.msra.mxu0 0.0
  %1536 = vmatprep.subr.mxu0 0.0
  %1537 = vmatpush1.msra.mxu0 0.0
  %1538 = vmatprep.subr.mxu0 0.0
  %1539 = vmatpush1.msra.mxu0 0.0
  %1540 = vmatprep.subr.mxu0 0.0
  %1541 = vmatpush1.msra.mxu0 0.0
  %1542 = vmatprep.subr.mxu0 0.0
  %1543 = vmatpush1.msra.mxu0 0.0
  %1544 = vmatprep.subr.mxu0 0.0
  %1545 = vmatpush1.msra.mxu0 0.0
  %1546 = vmatprep.subr.mxu0 0.0
  %1547 = vmatpush1.msra.mxu0 0.0
  %1548 = vmatprep.subr.mxu0 0.0
  %1549 = vmatpush1.msra.mxu0 0.0
  %1550 = vmatprep.subr.mxu0 0.0
  %1551 = vmatpush1.msra.mxu0 0.0
  %1552 = vmatprep.subr.mxu0 0.0
  %1553 = vmatpush1.msra.mxu0 0.0
  %1554 = vmatprep.subr.mxu0 0.0
  %1555 = vmatpush1.msra.mxu0 0.0
  %1556 = vmatprep.subr.mxu0 0.0
  %1557 = vmatpush1.msra.mxu0 0.0
  %1558 = vmatprep.subr.mxu0 0.0
  %1559 = vmatpush1.msra.mxu0 0.0
  %1560 = vmatprep.subr.mxu0 0.0
  %1561 = vmatpush1.msra.mxu0 0.0
  %1562 = vmatprep.subr.mxu0 0.0
  %1563 = vmatpush1.msra.mxu0 0.0
  %1564 = vmatprep.subr.mxu0 0.0
  %1565 = vmatpush1.msra.mxu0 0.0
  %1566 = vmatprep.subr.mxu0 0.0
  %1567 = vmatpush1.msra.mxu0 0.0
  %1568 = vmatprep.subr.mxu0 0.0
  %1569 = vmatpush1.msra.mxu0 0.0
  %1570 = vmatprep.subr.mxu0 0.0
  %1571 = vmatpush1.msra.mxu0 0.0
  %1572 = vmatprep.subr.mxu0 0.0
  %1573 = vmatpush1.msra.mxu0 0.0
  %1574 = vmatprep.subr.mxu0 0.0
  %1575 = vmatpush1.msra.mxu0 0.0
  %1576 = vmatprep.subr.mxu0 0.0
  %1577 = vmatpush1.msra.mxu0 0.0
  %1578 = vmatprep.mubr.f32.mxu0 0.0
  %1579 = vmatmul.mubr.f32.gmra.mrb[0].mxu0 %v1512
  %v1580 = vpop.f32.mrb[0].mxu0
  %v1581 = vadd.f32 %v1508, %v1580
  %v1582 = vpop.f32.mrb[0].mxu0
  %1583 = vdwg.mxu0
  %v1584 = vadd.f32 %v1581, %v201
  %v1585 = vxor.u32 %v1584, 2147483648
  %v1586 = vmul.f32 %v1585, 1.442695
  %v1587 = vpow.pop %v1586
  %v1588 = vadd.f32 %v1587, 1.0
  %v1589 = vrcp.pop %v1588
  %v1590 = vmul.f32 1.0, %v1589
  %v1591 = vtanh.pop %v1584
  %v1592 = vmul.f32 %v1590, %v1257
  %1594 = vrot.lane.b32.xlu0 %v1591, 64
  %v1595 = vpop.permute.xlu0 %1594
  %v1597 = vmul.f32 %v1590, %v1595
  %1599 = vrot.lane.b32.xlu0 %v1597, 32
  %v1600 = vpop.permute.xlu0 %1599
  %v1602 = vadd.f32 %v1592, %v1600
  %v1603 = vtanh.pop %v1602
  %1605 = vrot.lane.b32.xlu0 %v1603, 64
  %v1606 = vpop.permute.xlu0 %1605
  %v1608 = vmul.f32 %v1590, %v1606
  %1610 = vrot.lane.b32.xlu0 %v1438, 32
  %v1611 = vpop.permute.xlu0 %1610
  %v1612 = vsel %vm49, %v1611, 0
  %1614 = vmatprep.subr.mxu0 0.0
  %1615 = vmatpush1.msra.mxu0 %v42
  %1616 = vmatprep.subr.mxu0 0.0
  %1617 = vmatpush1.msra.mxu0 %v43
  %1618 = vmatprep.subr.mxu0 0.0
  %1619 = vmatpush1.msra.mxu0 %v44
  %1620 = vmatprep.subr.mxu0 0.0
  %1621 = vmatpush1.msra.mxu0 %v45
  %1622 = vmatprep.subr.mxu0 0.0
  %1623 = vmatpush1.msra.mxu0 0.0
  %1624 = vmatprep.subr.mxu0 0.0
  %1625 = vmatpush1.msra.mxu0 0.0
  %1626 = vmatprep.subr.mxu0 0.0
  %1627 = vmatpush1.msra.mxu0 0.0
  %1628 = vmatprep.subr.mxu0 0.0
  %1629 = vmatpush1.msra.mxu0 0.0
  %1630 = vmatprep.subr.mxu0 0.0
  %1631 = vmatpush1.msra.mxu0 0.0
  %1632 = vmatprep.subr.mxu0 0.0
  %1633 = vmatpush1.msra.mxu0 0.0
  %1634 = vmatprep.subr.mxu0 0.0
  %1635 = vmatpush1.msra.mxu0 0.0
  %1636 = vmatprep.subr.mxu0 0.0
  %1637 = vmatpush1.msra.mxu0 0.0
  %1638 = vmatprep.subr.mxu0 0.0
  %1639 = vmatpush1.msra.mxu0 0.0
  %1640 = vmatprep.subr.mxu0 0.0
  %1641 = vmatpush1.msra.mxu0 0.0
  %1642 = vmatprep.subr.mxu0 0.0
  %1643 = vmatpush1.msra.mxu0 0.0
  %1644 = vmatprep.subr.mxu0 0.0
  %1645 = vmatpush1.msra.mxu0 0.0
  %1646 = vmatprep.subr.mxu0 0.0
  %1647 = vmatpush1.msra.mxu0 0.0
  %1648 = vmatprep.subr.mxu0 0.0
  %1649 = vmatpush1.msra.mxu0 0.0
  %1650 = vmatprep.subr.mxu0 0.0
  %1651 = vmatpush1.msra.mxu0 0.0
  %1652 = vmatprep.subr.mxu0 0.0
  %1653 = vmatpush1.msra.mxu0 0.0
  %1654 = vmatprep.subr.mxu0 0.0
  %1655 = vmatpush1.msra.mxu0 0.0
  %1656 = vmatprep.subr.mxu0 0.0
  %1657 = vmatpush1.msra.mxu0 0.0
  %1658 = vmatprep.subr.mxu0 0.0
  %1659 = vmatpush1.msra.mxu0 0.0
  %1660 = vmatprep.subr.mxu0 0.0
  %1661 = vmatpush1.msra.mxu0 0.0
  %1662 = vmatprep.subr.mxu0 0.0
  %1663 = vmatpush1.msra.mxu0 0.0
  %1664 = vmatprep.subr.mxu0 0.0
  %1665 = vmatpush1.msra.mxu0 0.0
  %1666 = vmatprep.subr.mxu0 0.0
  %1667 = vmatpush1.msra.mxu0 0.0
  %1668 = vmatprep.subr.mxu0 0.0
  %1669 = vmatpush1.msra.mxu0 0.0
  %1670 = vmatprep.subr.mxu0 0.0
  %1671 = vmatpush1.msra.mxu0 0.0
  %1672 = vmatprep.subr.mxu0 0.0
  %1673 = vmatpush1.msra.mxu0 0.0
  %1674 = vmatprep.subr.mxu0 0.0
  %1675 = vmatpush1.msra.mxu0 0.0
  %1676 = vmatprep.subr.mxu0 0.0
  %1677 = vmatpush1.msra.mxu0 0.0
  %1678 = vmatprep.mubr.f32.mxu0 0.0
  %1679 = vmatmul.mubr.f32.gmra.mrb[0].mxu0 %v1612
  %v1680 = vpop.f32.mrb[0].mxu0
  %v1681 = vadd.f32 0.0, %v1680
  %v1682 = vpop.f32.mrb[0].mxu0
  %1683 = vdwg.mxu0
  %1685 = vrot.lane.b32.xlu0 %v1608, 32
  %v1686 = vpop.permute.xlu0 %1685
  %v1687 = vsel %vm49, %v1686, 0
  %1689 = vmatprep.subr.mxu0 0.0
  %1690 = vmatpush1.msra.mxu0 %v34
  %1691 = vmatprep.subr.mxu0 0.0
  %1692 = vmatpush1.msra.mxu0 %v35
  %1693 = vmatprep.subr.mxu0 0.0
  %1694 = vmatpush1.msra.mxu0 %v36
  %1695 = vmatprep.subr.mxu0 0.0
  %1696 = vmatpush1.msra.mxu0 %v37
  %1697 = vmatprep.subr.mxu0 0.0
  %1698 = vmatpush1.msra.mxu0 0.0
  %1699 = vmatprep.subr.mxu0 0.0
  %1700 = vmatpush1.msra.mxu0 0.0
  %1701 = vmatprep.subr.mxu0 0.0
  %1702 = vmatpush1.msra.mxu0 0.0
  %1703 = vmatprep.subr.mxu0 0.0
  %1704 = vmatpush1.msra.mxu0 0.0
  %1705 = vmatprep.subr.mxu0 0.0
  %1706 = vmatpush1.msra.mxu0 0.0
  %1707 = vmatprep.subr.mxu0 0.0
  %1708 = vmatpush1.msra.mxu0 0.0
  %1709 = vmatprep.subr.mxu0 0.0
  %1710 = vmatpush1.msra.mxu0 0.0
  %1711 = vmatprep.subr.mxu0 0.0
  %1712 = vmatpush1.msra.mxu0 0.0
  %1713 = vmatprep.subr.mxu0 0.0
  %1714 = vmatpush1.msra.mxu0 0.0
  %1715 = vmatprep.subr.mxu0 0.0
  %1716 = vmatpush1.msra.mxu0 0.0
  %1717 = vmatprep.subr.mxu0 0.0
  %1718 = vmatpush1.msra.mxu0 0.0
  %1719 = vmatprep.subr.mxu0 0.0
  %1720 = vmatpush1.msra.mxu0 0.0
  %1721 = vmatprep.subr.mxu0 0.0
  %1722 = vmatpush1.msra.mxu0 0.0
  %1723 = vmatprep.subr.mxu0 0.0
  %1724 = vmatpush1.msra.mxu0 0.0
  %1725 = vmatprep.subr.mxu0 0.0
  %1726 = vmatpush1.msra.mxu0 0.0
  %1727 = vmatprep.subr.mxu0 0.0
  %1728 = vmatpush1.msra.mxu0 0.0
  %1729 = vmatprep.subr.mxu0 0.0
  %1730 = vmatpush1.msra.mxu0 0.0
  %1731 = vmatprep.subr.mxu0 0.0
  %1732 = vmatpush1.msra.mxu0 0.0
  %1733 = vmatprep.subr.mxu0 0.0
  %1734 = vmatpush1.msra.mxu0 0.0
  %1735 = vmatprep.subr.mxu0 0.0
  %1736 = vmatpush1.msra.mxu0 0.0
  %1737 = vmatprep.subr.mxu0 0.0
  %1738 = vmatpush1.msra.mxu0 0.0
  %1739 = vmatprep.subr.mxu0 0.0
  %1740 = vmatpush1.msra.mxu0 0.0
  %1741 = vmatprep.subr.mxu0 0.0
  %1742 = vmatpush1.msra.mxu0 0.0
  %1743 = vmatprep.subr.mxu0 0.0
  %1744 = vmatpush1.msra.mxu0 0.0
  %1745 = vmatprep.subr.mxu0 0.0
  %1746 = vmatpush1.msra.mxu0 0.0
  %1747 = vmatprep.subr.mxu0 0.0
  %1748 = vmatpush1.msra.mxu0 0.0
  %1749 = vmatprep.subr.mxu0 0.0
  %1750 = vmatpush1.msra.mxu0 0.0
  %1751 = vmatprep.subr.mxu0 0.0
  %1752 = vmatpush1.msra.mxu0 0.0
  %1753 = vmatprep.mubr.f32.mxu0 0.0
  %1754 = vmatmul.mubr.f32.gmra.mrb[0].mxu0 %v1687
  %v1755 = vpop.f32.mrb[0].mxu0
  %v1756 = vadd.f32 %v1681, %v1755
  %v1757 = vpop.f32.mrb[0].mxu0
  %1758 = vdwg.mxu0
  %v1759 = vadd.f32 %v1756, %v377
  %v1760 = vxor.u32 %v1759, 2147483648
  %v1761 = vmul.f32 %v1760, 1.442695
  %v1762 = vpow.pop %v1761
  %v1763 = vadd.f32 %v1762, 1.0
  %v1764 = vrcp.pop %v1763
  %v1765 = vmul.f32 1.0, %v1764
  %v1766 = vtanh.pop %v1759
  %v1767 = vmul.f32 %v1765, %v1432
  %1769 = vrot.lane.b32.xlu0 %v1766, 64
  %v1770 = vpop.permute.xlu0 %1769
  %v1772 = vmul.f32 %v1765, %v1770
  %1774 = vrot.lane.b32.xlu0 %v1772, 32
  %v1775 = vpop.permute.xlu0 %1774
  %v1777 = vadd.f32 %v1767, %v1775
  %v1778 = vtanh.pop %v1777
  %1780 = vrot.lane.b32.xlu0 %v1778, 64
  %v1781 = vpop.permute.xlu0 %1780
  %v1783 = vmul.f32 %v1765, %v1781
  %s1784 = scalar_lea.vmem %s0, 40
  %v1785 = vld [vmem:[%s1784] sm:$0xff]
  %1786 = vmatprep.subr.mxu0 0.0
  %1787 = vmatpush1.msra.mxu0 %v38
  %1788 = vmatprep.subr.mxu0 0.0
  %1789 = vmatpush1.msra.mxu0 %v39
  %1790 = vmatprep.subr.mxu0 0.0
  %1791 = vmatpush1.msra.mxu0 %v40
  %1792 = vmatprep.subr.mxu0 0.0
  %1793 = vmatpush1.msra.mxu0 %v41
  %1794 = vmatprep.subr.mxu0 0.0
  %1795 = vmatpush1.msra.mxu0 0.0
  %1796 = vmatprep.subr.mxu0 0.0
  %1797 = vmatpush1.msra.mxu0 0.0
  %1798 = vmatprep.subr.mxu0 0.0
  %1799 = vmatpush1.msra.mxu0 0.0
  %1800 = vmatprep.subr.mxu0 0.0
  %1801 = vmatpush1.msra.mxu0 0.0
  %1802 = vmatprep.subr.mxu0 0.0
  %1803 = vmatpush1.msra.mxu0 0.0
  %1804 = vmatprep.subr.mxu0 0.0
  %1805 = vmatpush1.msra.mxu0 0.0
  %1806 = vmatprep.subr.mxu0 0.0
  %1807 = vmatpush1.msra.mxu0 0.0
  %1808 = vmatprep.subr.mxu0 0.0
  %1809 = vmatpush1.msra.mxu0 0.0
  %1810 = vmatprep.subr.mxu0 0.0
  %1811 = vmatpush1.msra.mxu0 0.0
  %1812 = vmatprep.subr.mxu0 0.0
  %1813 = vmatpush1.msra.mxu0 0.0
  %1814 = vmatprep.subr.mxu0 0.0
  %1815 = vmatpush1.msra.mxu0 0.0
  %1816 = vmatprep.subr.mxu0 0.0
  %1817 = vmatpush1.msra.mxu0 0.0
  %1818 = vmatprep.subr.mxu0 0.0
  %1819 = vmatpush1.msra.mxu0 0.0
  %1820 = vmatprep.subr.mxu0 0.0
  %1821 = vmatpush1.msra.mxu0 0.0
  %1822 = vmatprep.subr.mxu0 0.0
  %1823 = vmatpush1.msra.mxu0 0.0
  %1824 = vmatprep.subr.mxu0 0.0
  %1825 = vmatpush1.msra.mxu0 0.0
  %1826 = vmatprep.subr.mxu0 0.0
  %1827 = vmatpush1.msra.mxu0 0.0
  %1828 = vmatprep.subr.mxu0 0.0
  %1829 = vmatpush1.msra.mxu0 0.0
  %1830 = vmatprep.subr.mxu0 0.0
  %1831 = vmatpush1.msra.mxu0 0.0
  %1832 = vmatprep.subr.mxu0 0.0
  %1833 = vmatpush1.msra.mxu0 0.0
  %1834 = vmatprep.subr.mxu0 0.0
  %1835 = vmatpush1.msra.mxu0 0.0
  %1836 = vmatprep.subr.mxu0 0.0
  %1837 = vmatpush1.msra.mxu0 0.0
  %1838 = vmatprep.subr.mxu0 0.0
  %1839 = vmatpush1.msra.mxu0 0.0
  %1840 = vmatprep.subr.mxu0 0.0
  %1841 = vmatpush1.msra.mxu0 0.0
  %1842 = vmatprep.subr.mxu0 0.0
  %1843 = vmatpush1.msra.mxu0 0.0
  %1844 = vmatprep.subr.mxu0 0.0
  %1845 = vmatpush1.msra.mxu0 0.0
  %1846 = vmatprep.subr.mxu0 0.0
  %1847 = vmatpush1.msra.mxu0 0.0
  %1848 = vmatprep.subr.mxu0 0.0
  %1849 = vmatpush1.msra.mxu0 0.0
  %1850 = vmatprep.mubr.f32.mxu0 0.0
  %1851 = vmatmul.mubr.f32.gmra.mrb[0].mxu0 %v1687
  %v1852 = vpop.f32.mrb[0].mxu0
  %v1853 = vadd.f32 0.0, %v1852
  %v1854 = vpop.f32.mrb[0].mxu0
  %1855 = vdwg.mxu0
  %v1857 = vsel %vm123, %v1785, 0
  %1859 = vmatprep.subr.mxu0 0.0
  %1860 = vmatpush1.msra.mxu0 %v32
  %1861 = vmatprep.subr.mxu0 0.0
  %1862 = vmatpush1.msra.mxu0 %v33
  %1863 = vmatprep.subr.mxu0 0.0
  %1864 = vmatpush1.msra.mxu0 0.0
  %1865 = vmatprep.subr.mxu0 0.0
  %1866 = vmatpush1.msra.mxu0 0.0
  %1867 = vmatprep.subr.mxu0 0.0
  %1868 = vmatpush1.msra.mxu0 0.0
  %1869 = vmatprep.subr.mxu0 0.0
  %1870 = vmatpush1.msra.mxu0 0.0
  %1871 = vmatprep.subr.mxu0 0.0
  %1872 = vmatpush1.msra.mxu0 0.0
  %1873 = vmatprep.subr.mxu0 0.0
  %1874 = vmatpush1.msra.mxu0 0.0
  %1875 = vmatprep.subr.mxu0 0.0
  %1876 = vmatpush1.msra.mxu0 0.0
  %1877 = vmatprep.subr.mxu0 0.0
  %1878 = vmatpush1.msra.mxu0 0.0
  %1879 = vmatprep.subr.mxu0 0.0
  %1880 = vmatpush1.msra.mxu0 0.0
  %1881 = vmatprep.subr.mxu0 0.0
  %1882 = vmatpush1.msra.mxu0 0.0
  %1883 = vmatprep.subr.mxu0 0.0
  %1884 = vmatpush1.msra.mxu0 0.0
  %1885 = vmatprep.subr.mxu0 0.0
  %1886 = vmatpush1.msra.mxu0 0.0
  %1887 = vmatprep.subr.mxu0 0.0
  %1888 = vmatpush1.msra.mxu0 0.0
  %1889 = vmatprep.subr.mxu0 0.0
  %1890 = vmatpush1.msra.mxu0 0.0
  %1891 = vmatprep.subr.mxu0 0.0
  %1892 = vmatpush1.msra.mxu0 0.0
  %1893 = vmatprep.subr.mxu0 0.0
  %1894 = vmatpush1.msra.mxu0 0.0
  %1895 = vmatprep.subr.mxu0 0.0
  %1896 = vmatpush1.msra.mxu0 0.0
  %1897 = vmatprep.subr.mxu0 0.0
  %1898 = vmatpush1.msra.mxu0 0.0
  %1899 = vmatprep.subr.mxu0 0.0
  %1900 = vmatpush1.msra.mxu0 0.0
  %1901 = vmatprep.subr.mxu0 0.0
  %1902 = vmatpush1.msra.mxu0 0.0
  %1903 = vmatprep.subr.mxu0 0.0
  %1904 = vmatpush1.msra.mxu0 0.0
  %1905 = vmatprep.subr.mxu0 0.0
  %1906 = vmatpush1.msra.mxu0 0.0
  %1907 = vmatprep.subr.mxu0 0.0
  %1908 = vmatpush1.msra.mxu0 0.0
  %1909 = vmatprep.subr.mxu0 0.0
  %1910 = vmatpush1.msra.mxu0 0.0
  %1911 = vmatprep.subr.mxu0 0.0
  %1912 = vmatpush1.msra.mxu0 0.0
  %1913 = vmatprep.subr.mxu0 0.0
  %1914 = vmatpush1.msra.mxu0 0.0
  %1915 = vmatprep.subr.mxu0 0.0
  %1916 = vmatpush1.msra.mxu0 0.0
  %1917 = vmatprep.subr.mxu0 0.0
  %1918 = vmatpush1.msra.mxu0 0.0
  %1919 = vmatprep.subr.mxu0 0.0
  %1920 = vmatpush1.msra.mxu0 0.0
  %1921 = vmatprep.subr.mxu0 0.0
  %1922 = vmatpush1.msra.mxu0 0.0
  %1923 = vmatprep.mubr.f32.mxu0 0.0
  %1924 = vmatmul.mubr.f32.gmra.mrb[0].mxu0 %v1857
  %v1925 = vpop.f32.mrb[0].mxu0
  %v1926 = vadd.f32 %v1853, %v1925
  %v1927 = vpop.f32.mrb[0].mxu0
  %1928 = vdwg.mxu0
  %v1929 = vadd.f32 %v1926, %v201
  %v1930 = vxor.u32 %v1929, 2147483648
  %v1931 = vmul.f32 %v1930, 1.442695
  %v1932 = vpow.pop %v1931
  %v1933 = vadd.f32 %v1932, 1.0
  %v1934 = vrcp.pop %v1933
  %v1935 = vmul.f32 1.0, %v1934
  %v1936 = vtanh.pop %v1929
  %v1937 = vmul.f32 %v1935, %v1602
  %1939 = vrot.lane.b32.xlu0 %v1936, 64
  %v1940 = vpop.permute.xlu0 %1939
  %v1942 = vmul.f32 %v1935, %v1940
  %1944 = vrot.lane.b32.xlu0 %v1942, 32
  %v1945 = vpop.permute.xlu0 %1944
  %v1947 = vadd.f32 %v1937, %v1945
  %v1948 = vtanh.pop %v1947
  %1950 = vrot.lane.b32.xlu0 %v1948, 64
  %v1951 = vpop.permute.xlu0 %1950
  %v1953 = vmul.f32 %v1935, %v1951
  %1955 = vrot.lane.b32.xlu0 %v1783, 32
  %v1956 = vpop.permute.xlu0 %1955
  %v1957 = vsel %vm49, %v1956, 0
  %1959 = vmatprep.subr.mxu0 0.0
  %1960 = vmatpush1.msra.mxu0 %v42
  %1961 = vmatprep.subr.mxu0 0.0
  %1962 = vmatpush1.msra.mxu0 %v43
  %1963 = vmatprep.subr.mxu0 0.0
  %1964 = vmatpush1.msra.mxu0 %v44
  %1965 = vmatprep.subr.mxu0 0.0
  %1966 = vmatpush1.msra.mxu0 %v45
  %1967 = vmatprep.subr.mxu0 0.0
  %1968 = vmatpush1.msra.mxu0 0.0
  %1969 = vmatprep.subr.mxu0 0.0
  %1970 = vmatpush1.msra.mxu0 0.0
  %1971 = vmatprep.subr.mxu0 0.0
  %1972 = vmatpush1.msra.mxu0 0.0
  %1973 = vmatprep.subr.mxu0 0.0
  %1974 = vmatpush1.msra.mxu0 0.0
  %1975 = vmatprep.subr.mxu0 0.0
  %1976 = vmatpush1.msra.mxu0 0.0
  %1977 = vmatprep.subr.mxu0 0.0
  %1978 = vmatpush1.msra.mxu0 0.0
  %1979 = vmatprep.subr.mxu0 0.0
  %1980 = vmatpush1.msra.mxu0 0.0
  %1981 = vmatprep.subr.mxu0 0.0
  %1982 = vmatpush1.msra.mxu0 0.0
  %1983 = vmatprep.subr.mxu0 0.0
  %1984 = vmatpush1.msra.mxu0 0.0
  %1985 = vmatprep.subr.mxu0 0.0
  %1986 = vmatpush1.msra.mxu0 0.0
  %1987 = vmatprep.subr.mxu0 0.0
  %1988 = vmatpush1.msra.mxu0 0.0
  %1989 = vmatprep.subr.mxu0 0.0
  %1990 = vmatpush1.msra.mxu0 0.0
  %1991 = vmatprep.subr.mxu0 0.0
  %1992 = vmatpush1.msra.mxu0 0.0
  %1993 = vmatprep.subr.mxu0 0.0
  %1994 = vmatpush1.msra.mxu0 0.0
  %1995 = vmatprep.subr.mxu0 0.0
  %1996 = vmatpush1.msra.mxu0 0.0
  %1997 = vmatprep.subr.mxu0 0.0
  %1998 = vmatpush1.msra.mxu0 0.0
  %1999 = vmatprep.subr.mxu0 0.0
  %2000 = vmatpush1.msra.mxu0 0.0
  %2001 = vmatprep.subr.mxu0 0.0
  %2002 = vmatpush1.msra.mxu0 0.0
  %2003 = vmatprep.subr.mxu0 0.0
  %2004 = vmatpush1.msra.mxu0 0.0
  %2005 = vmatprep.subr.mxu0 0.0
  %2006 = vmatpush1.msra.mxu0 0.0
  %2007 = vmatprep.subr.mxu0 0.0
  %2008 = vmatpush1.msra.mxu0 0.0
  %2009 = vmatprep.subr.mxu0 0.0
  %2010 = vmatpush1.msra.mxu0 0.0
  %2011 = vmatprep.subr.mxu0 0.0
  %2012 = vmatpush1.msra.mxu0 0.0
  %2013 = vmatprep.subr.mxu0 0.0
  %2014 = vmatpush1.msra.mxu0 0.0
  %2015 = vmatprep.subr.mxu0 0.0
  %2016 = vmatpush1.msra.mxu0 0.0
  %2017 = vmatprep.subr.mxu0 0.0
  %2018 = vmatpush1.msra.mxu0 0.0
  %2019 = vmatprep.subr.mxu0 0.0
  %2020 = vmatpush1.msra.mxu0 0.0
  %2021 = vmatprep.subr.mxu0 0.0
  %2022 = vmatpush1.msra.mxu0 0.0
  %2023 = vmatprep.mubr.f32.mxu0 0.0
  %2024 = vmatmul.mubr.f32.gmra.mrb[0].mxu0 %v1957
  %v2025 = vpop.f32.mrb[0].mxu0
  %v2026 = vadd.f32 0.0, %v2025
  %v2027 = vpop.f32.mrb[0].mxu0
  %2028 = vdwg.mxu0
  %2030 = vrot.lane.b32.xlu0 %v1953, 32
  %v2031 = vpop.permute.xlu0 %2030
  %v2032 = vsel %vm49, %v2031, 0
  %2034 = vmatprep.subr.mxu0 0.0
  %2035 = vmatpush1.msra.mxu0 %v34
  %2036 = vmatprep.subr.mxu0 0.0
  %2037 = vmatpush1.msra.mxu0 %v35
  %2038 = vmatprep.subr.mxu0 0.0
  %2039 = vmatpush1.msra.mxu0 %v36
  %2040 = vmatprep.subr.mxu0 0.0
  %2041 = vmatpush1.msra.mxu0 %v37
  %2042 = vmatprep.subr.mxu0 0.0
  %2043 = vmatpush1.msra.mxu0 0.0
  %2044 = vmatprep.subr.mxu0 0.0
  %2045 = vmatpush1.msra.mxu0 0.0
  %2046 = vmatprep.subr.mxu0 0.0
  %2047 = vmatpush1.msra.mxu0 0.0
  %2048 = vmatprep.subr.mxu0 0.0
  %2049 = vmatpush1.msra.mxu0 0.0
  %2050 = vmatprep.subr.mxu0 0.0
  %2051 = vmatpush1.msra.mxu0 0.0
  %2052 = vmatprep.subr.mxu0 0.0
  %2053 = vmatpush1.msra.mxu0 0.0
  %2054 = vmatprep.subr.mxu0 0.0
  %2055 = vmatpush1.msra.mxu0 0.0
  %2056 = vmatprep.subr.mxu0 0.0
  %2057 = vmatpush1.msra.mxu0 0.0
  %2058 = vmatprep.subr.mxu0 0.0
  %2059 = vmatpush1.msra.mxu0 0.0
  %2060 = vmatprep.subr.mxu0 0.0
  %2061 = vmatpush1.msra.mxu0 0.0
  %2062 = vmatprep.subr.mxu0 0.0
  %2063 = vmatpush1.msra.mxu0 0.0
  %2064 = vmatprep.subr.mxu0 0.0
  %2065 = vmatpush1.msra.mxu0 0.0
  %2066 = vmatprep.subr.mxu0 0.0
  %2067 = vmatpush1.msra.mxu0 0.0
  %2068 = vmatprep.subr.mxu0 0.0
  %2069 = vmatpush1.msra.mxu0 0.0
  %2070 = vmatprep.subr.mxu0 0.0
  %2071 = vmatpush1.msra.mxu0 0.0
  %2072 = vmatprep.subr.mxu0 0.0
  %2073 = vmatpush1.msra.mxu0 0.0
  %2074 = vmatprep.subr.mxu0 0.0
  %2075 = vmatpush1.msra.mxu0 0.0
  %2076 = vmatprep.subr.mxu0 0.0
  %2077 = vmatpush1.msra.mxu0 0.0
  %2078 = vmatprep.subr.mxu0 0.0
  %2079 = vmatpush1.msra.mxu0 0.0
  %2080 = vmatprep.subr.mxu0 0.0
  %2081 = vmatpush1.msra.mxu0 0.0
  %2082 = vmatprep.subr.mxu0 0.0
  %2083 = vmatpush1.msra.mxu0 0.0
  %2084 = vmatprep.subr.mxu0 0.0
  %2085 = vmatpush1.msra.mxu0 0.0
  %2086 = vmatprep.subr.mxu0 0.0
  %2087 = vmatpush1.msra.mxu0 0.0
  %2088 = vmatprep.subr.mxu0 0.0
  %2089 = vmatpush1.msra.mxu0 0.0
  %2090 = vmatprep.subr.mxu0 0.0
  %2091 = vmatpush1.msra.mxu0 0.0
  %2092 = vmatprep.subr.mxu0 0.0
  %2093 = vmatpush1.msra.mxu0 0.0
  %2094 = vmatprep.subr.mxu0 0.0
  %2095 = vmatpush1.msra.mxu0 0.0
  %2096 = vmatprep.subr.mxu0 0.0
  %2097 = vmatpush1.msra.mxu0 0.0
  %2098 = vmatprep.mubr.f32.mxu0 0.0
  %2099 = vmatmul.mubr.f32.gmra.mrb[0].mxu0 %v2032
  %v2100 = vpop.f32.mrb[0].mxu0
  %v2101 = vadd.f32 %v2026, %v2100
  %v2102 = vpop.f32.mrb[0].mxu0
  %2103 = vdwg.mxu0
  %v2104 = vadd.f32 %v2101, %v377
  %v2105 = vxor.u32 %v2104, 2147483648
  %v2106 = vmul.f32 %v2105, 1.442695
  %v2107 = vpow.pop %v2106
  %v2108 = vadd.f32 %v2107, 1.0
  %v2109 = vrcp.pop %v2108
  %v2110 = vmul.f32 1.0, %v2109
  %v2111 = vtanh.pop %v2104
  %v2112 = vmul.f32 %v2110, %v1777
  %2114 = vrot.lane.b32.xlu0 %v2111, 64
  %v2115 = vpop.permute.xlu0 %2114
  %v2117 = vmul.f32 %v2110, %v2115
  %2119 = vrot.lane.b32.xlu0 %v2117, 32
  %v2120 = vpop.permute.xlu0 %2119
  %v2122 = vadd.f32 %v2112, %v2120
  %v2123 = vtanh.pop %v2122
  %2125 = vrot.lane.b32.xlu0 %v2123, 64
  %v2126 = vpop.permute.xlu0 %2125
  %v2128 = vmul.f32 %v2110, %v2126
  %s2129 = scalar_lea.vmem %s0, 48
  %v2130 = vld [vmem:[%s2129] sm:$0xff]
  %2131 = vmatprep.subr.mxu0 0.0
  %2132 = vmatpush1.msra.mxu0 %v38
  %2133 = vmatprep.subr.mxu0 0.0
  %2134 = vmatpush1.msra.mxu0 %v39
  %2135 = vmatprep.subr.mxu0 0.0
  %2136 = vmatpush1.msra.mxu0 %v40
  %2137 = vmatprep.subr.mxu0 0.0
  %2138 = vmatpush1.msra.mxu0 %v41
  %2139 = vmatprep.subr.mxu0 0.0
  %2140 = vmatpush1.msra.mxu0 0.0
  %2141 = vmatprep.subr.mxu0 0.0
  %2142 = vmatpush1.msra.mxu0 0.0
  %2143 = vmatprep.subr.mxu0 0.0
  %2144 = vmatpush1.msra.mxu0 0.0
  %2145 = vmatprep.subr.mxu0 0.0
  %2146 = vmatpush1.msra.mxu0 0.0
  %2147 = vmatprep.subr.mxu0 0.0
  %2148 = vmatpush1.msra.mxu0 0.0
  %2149 = vmatprep.subr.mxu0 0.0
  %2150 = vmatpush1.msra.mxu0 0.0
  %2151 = vmatprep.subr.mxu0 0.0
  %2152 = vmatpush1.msra.mxu0 0.0
  %2153 = vmatprep.subr.mxu0 0.0
  %2154 = vmatpush1.msra.mxu0 0.0
  %2155 = vmatprep.subr.mxu0 0.0
  %2156 = vmatpush1.msra.mxu0 0.0
  %2157 = vmatprep.subr.mxu0 0.0
  %2158 = vmatpush1.msra.mxu0 0.0
  %2159 = vmatprep.subr.mxu0 0.0
  %2160 = vmatpush1.msra.mxu0 0.0
  %2161 = vmatprep.subr.mxu0 0.0
  %2162 = vmatpush1.msra.mxu0 0.0
  %2163 = vmatprep.subr.mxu0 0.0
  %2164 = vmatpush1.msra.mxu0 0.0
  %2165 = vmatprep.subr.mxu0 0.0
  %2166 = vmatpush1.msra.mxu0 0.0
  %2167 = vmatprep.subr.mxu0 0.0
  %2168 = vmatpush1.msra.mxu0 0.0
  %2169 = vmatprep.subr.mxu0 0.0
  %2170 = vmatpush1.msra.mxu0 0.0
  %2171 = vmatprep.subr.mxu0 0.0
  %2172 = vmatpush1.msra.mxu0 0.0
  %2173 = vmatprep.subr.mxu0 0.0
  %2174 = vmatpush1.msra.mxu0 0.0
  %2175 = vmatprep.subr.mxu0 0.0
  %2176 = vmatpush1.msra.mxu0 0.0
  %2177 = vmatprep.subr.mxu0 0.0
  %2178 = vmatpush1.msra.mxu0 0.0
  %2179 = vmatprep.subr.mxu0 0.0
  %2180 = vmatpush1.msra.mxu0 0.0
  %2181 = vmatprep.subr.mxu0 0.0
  %2182 = vmatpush1.msra.mxu0 0.0
  %2183 = vmatprep.subr.mxu0 0.0
  %2184 = vmatpush1.msra.mxu0 0.0
  %2185 = vmatprep.subr.mxu0 0.0
  %2186 = vmatpush1.msra.mxu0 0.0
  %2187 = vmatprep.subr.mxu0 0.0
  %2188 = vmatpush1.msra.mxu0 0.0
  %2189 = vmatprep.subr.mxu0 0.0
  %2190 = vmatpush1.msra.mxu0 0.0
  %2191 = vmatprep.subr.mxu0 0.0
  %2192 = vmatpush1.msra.mxu0 0.0
  %2193 = vmatprep.subr.mxu0 0.0
  %2194 = vmatpush1.msra.mxu0 0.0
  %2195 = vmatprep.mubr.f32.mxu0 0.0
  %2196 = vmatmul.mubr.f32.gmra.mrb[0].mxu0 %v2032
  %v2197 = vpop.f32.mrb[0].mxu0
  %v2198 = vadd.f32 0.0, %v2197
  %v2199 = vpop.f32.mrb[0].mxu0
  %2200 = vdwg.mxu0
  %v2202 = vsel %vm123, %v2130, 0
  %2204 = vmatprep.subr.mxu0 0.0
  %2205 = vmatpush1.msra.mxu0 %v32
  %2206 = vmatprep.subr.mxu0 0.0
  %2207 = vmatpush1.msra.mxu0 %v33
  %2208 = vmatprep.subr.mxu0 0.0
  %2209 = vmatpush1.msra.mxu0 0.0
  %2210 = vmatprep.subr.mxu0 0.0
  %2211 = vmatpush1.msra.mxu0 0.0
  %2212 = vmatprep.subr.mxu0 0.0
  %2213 = vmatpush1.msra.mxu0 0.0
  %2214 = vmatprep.subr.mxu0 0.0
  %2215 = vmatpush1.msra.mxu0 0.0
  %2216 = vmatprep.subr.mxu0 0.0
  %2217 = vmatpush1.msra.mxu0 0.0
  %2218 = vmatprep.subr.mxu0 0.0
  %2219 = vmatpush1.msra.mxu0 0.0
  %2220 = vmatprep.subr.mxu0 0.0
  %2221 = vmatpush1.msra.mxu0 0.0
  %2222 = vmatprep.subr.mxu0 0.0
  %2223 = vmatpush1.msra.mxu0 0.0
  %2224 = vmatprep.subr.mxu0 0.0
  %2225 = vmatpush1.msra.mxu0 0.0
  %2226 = vmatprep.subr.mxu0 0.0
  %2227 = vmatpush1.msra.mxu0 0.0
  %2228 = vmatprep.subr.mxu0 0.0
  %2229 = vmatpush1.msra.mxu0 0.0
  %2230 = vmatprep.subr.mxu0 0.0
  %2231 = vmatpush1.msra.mxu0 0.0
  %2232 = vmatprep.subr.mxu0 0.0
  %2233 = vmatpush1.msra.mxu0 0.0
  %2234 = vmatprep.subr.mxu0 0.0
  %2235 = vmatpush1.msra.mxu0 0.0
  %2236 = vmatprep.subr.mxu0 0.0
  %2237 = vmatpush1.msra.mxu0 0.0
  %2238 = vmatprep.subr.mxu0 0.0
  %2239 = vmatpush1.msra.mxu0 0.0
  %2240 = vmatprep.subr.mxu0 0.0
  %2241 = vmatpush1.msra.mxu0 0.0
  %2242 = vmatprep.subr.mxu0 0.0
  %2243 = vmatpush1.msra.mxu0 0.0
  %2244 = vmatprep.subr.mxu0 0.0
  %2245 = vmatpush1.msra.mxu0 0.0
  %2246 = vmatprep.subr.mxu0 0.0
  %2247 = vmatpush1.msra.mxu0 0.0
  %2248 = vmatprep.subr.mxu0 0.0
  %2249 = vmatpush1.msra.mxu0 0.0
  %2250 = vmatprep.subr.mxu0 0.0
  %2251 = vmatpush1.msra.mxu0 0.0
  %2252 = vmatprep.subr.mxu0 0.0
  %2253 = vmatpush1.msra.mxu0 0.0
  %2254 = vmatprep.subr.mxu0 0.0
  %2255 = vmatpush1.msra.mxu0 0.0
  %2256 = vmatprep.subr.mxu0 0.0
  %2257 = vmatpush1.msra.mxu0 0.0
  %2258 = vmatprep.subr.mxu0 0.0
  %2259 = vmatpush1.msra.mxu0 0.0
  %2260 = vmatprep.subr.mxu0 0.0
  %2261 = vmatpush1.msra.mxu0 0.0
  %2262 = vmatprep.subr.mxu0 0.0
  %2263 = vmatpush1.msra.mxu0 0.0
  %2264 = vmatprep.subr.mxu0 0.0
  %2265 = vmatpush1.msra.mxu0 0.0
  %2266 = vmatprep.subr.mxu0 0.0
  %2267 = vmatpush1.msra.mxu0 0.0
  %2268 = vmatprep.mubr.f32.mxu0 0.0
  %2269 = vmatmul.mubr.f32.gmra.mrb[0].mxu0 %v2202
  %v2270 = vpop.f32.mrb[0].mxu0
  %v2271 = vadd.f32 %v2198, %v2270
  %v2272 = vpop.f32.mrb[0].mxu0
  %2273 = vdwg.mxu0
  %v2274 = vadd.f32 %v2271, %v201
  %v2275 = vxor.u32 %v2274, 2147483648
  %v2276 = vmul.f32 %v2275, 1.442695
  %v2277 = vpow.pop %v2276
  %v2278 = vadd.f32 %v2277, 1.0
  %v2279 = vrcp.pop %v2278
  %v2280 = vmul.f32 1.0, %v2279
  %v2281 = vtanh.pop %v2274
  %v2282 = vmul.f32 %v2280, %v1947
  %2284 = vrot.lane.b32.xlu0 %v2281, 64
  %v2285 = vpop.permute.xlu0 %2284
  %v2287 = vmul.f32 %v2280, %v2285
  %2289 = vrot.lane.b32.xlu0 %v2287, 32
  %v2290 = vpop.permute.xlu0 %2289
  %v2292 = vadd.f32 %v2282, %v2290
  %v2293 = vtanh.pop %v2292
  %2295 = vrot.lane.b32.xlu0 %v2293, 64
  %v2296 = vpop.permute.xlu0 %2295
  %v2298 = vmul.f32 %v2280, %v2296
  %2300 = vrot.lane.b32.xlu0 %v2128, 32
  %v2301 = vpop.permute.xlu0 %2300
  %v2302 = vsel %vm49, %v2301, 0
  %2304 = vmatprep.subr.mxu0 0.0
  %2305 = vmatpush1.msra.mxu0 %v42
  %2306 = vmatprep.subr.mxu0 0.0
  %2307 = vmatpush1.msra.mxu0 %v43
  %2308 = vmatprep.subr.mxu0 0.0
  %2309 = vmatpush1.msra.mxu0 %v44
  %2310 = vmatprep.subr.mxu0 0.0
  %2311 = vmatpush1.msra.mxu0 %v45
  %2312 = vmatprep.subr.mxu0 0.0
  %2313 = vmatpush1.msra.mxu0 0.0
  %2314 = vmatprep.subr.mxu0 0.0
  %2315 = vmatpush1.msra.mxu0 0.0
  %2316 = vmatprep.subr.mxu0 0.0
  %2317 = vmatpush1.msra.mxu0 0.0
  %2318 = vmatprep.subr.mxu0 0.0
  %2319 = vmatpush1.msra.mxu0 0.0
  %2320 = vmatprep.subr.mxu0 0.0
  %2321 = vmatpush1.msra.mxu0 0.0
  %2322 = vmatprep.subr.mxu0 0.0
  %2323 = vmatpush1.msra.mxu0 0.0
  %2324 = vmatprep.subr.mxu0 0.0
  %2325 = vmatpush1.msra.mxu0 0.0
  %2326 = vmatprep.subr.mxu0 0.0
  %2327 = vmatpush1.msra.mxu0 0.0
  %2328 = vmatprep.subr.mxu0 0.0
  %2329 = vmatpush1.msra.mxu0 0.0
  %2330 = vmatprep.subr.mxu0 0.0
  %2331 = vmatpush1.msra.mxu0 0.0
  %2332 = vmatprep.subr.mxu0 0.0
  %2333 = vmatpush1.msra.mxu0 0.0
  %2334 = vmatprep.subr.mxu0 0.0
  %2335 = vmatpush1.msra.mxu0 0.0
  %2336 = vmatprep.subr.mxu0 0.0
  %2337 = vmatpush1.msra.mxu0 0.0
  %2338 = vmatprep.subr.mxu0 0.0
  %2339 = vmatpush1.msra.mxu0 0.0
  %2340 = vmatprep.subr.mxu0 0.0
  %2341 = vmatpush1.msra.mxu0 0.0
  %2342 = vmatprep.subr.mxu0 0.0
  %2343 = vmatpush1.msra.mxu0 0.0
  %2344 = vmatprep.subr.mxu0 0.0
  %2345 = vmatpush1.msra.mxu0 0.0
  %2346 = vmatprep.subr.mxu0 0.0
  %2347 = vmatpush1.msra.mxu0 0.0
  %2348 = vmatprep.subr.mxu0 0.0
  %2349 = vmatpush1.msra.mxu0 0.0
  %2350 = vmatprep.subr.mxu0 0.0
  %2351 = vmatpush1.msra.mxu0 0.0
  %2352 = vmatprep.subr.mxu0 0.0
  %2353 = vmatpush1.msra.mxu0 0.0
  %2354 = vmatprep.subr.mxu0 0.0
  %2355 = vmatpush1.msra.mxu0 0.0
  %2356 = vmatprep.subr.mxu0 0.0
  %2357 = vmatpush1.msra.mxu0 0.0
  %2358 = vmatprep.subr.mxu0 0.0
  %2359 = vmatpush1.msra.mxu0 0.0
  %2360 = vmatprep.subr.mxu0 0.0
  %2361 = vmatpush1.msra.mxu0 0.0
  %2362 = vmatprep.subr.mxu0 0.0
  %2363 = vmatpush1.msra.mxu0 0.0
  %2364 = vmatprep.subr.mxu0 0.0
  %2365 = vmatpush1.msra.mxu0 0.0
  %2366 = vmatprep.subr.mxu0 0.0
  %2367 = vmatpush1.msra.mxu0 0.0
  %2368 = vmatprep.mubr.f32.mxu0 0.0
  %2369 = vmatmul.mubr.f32.gmra.mrb[0].mxu0 %v2302
  %v2370 = vpop.f32.mrb[0].mxu0
  %v2371 = vadd.f32 0.0, %v2370
  %v2372 = vpop.f32.mrb[0].mxu0
  %2373 = vdwg.mxu0
  %2375 = vrot.lane.b32.xlu0 %v2298, 32
  %v2376 = vpop.permute.xlu0 %2375
  %v2377 = vsel %vm49, %v2376, 0
  %2379 = vmatprep.subr.mxu0 0.0
  %2380 = vmatpush1.msra.mxu0 %v34
  %2381 = vmatprep.subr.mxu0 0.0
  %2382 = vmatpush1.msra.mxu0 %v35
  %2383 = vmatprep.subr.mxu0 0.0
  %2384 = vmatpush1.msra.mxu0 %v36
  %2385 = vmatprep.subr.mxu0 0.0
  %2386 = vmatpush1.msra.mxu0 %v37
  %2387 = vmatprep.subr.mxu0 0.0
  %2388 = vmatpush1.msra.mxu0 0.0
  %2389 = vmatprep.subr.mxu0 0.0
  %2390 = vmatpush1.msra.mxu0 0.0
  %2391 = vmatprep.subr.mxu0 0.0
  %2392 = vmatpush1.msra.mxu0 0.0
  %2393 = vmatprep.subr.mxu0 0.0
  %2394 = vmatpush1.msra.mxu0 0.0
  %2395 = vmatprep.subr.mxu0 0.0
  %2396 = vmatpush1.msra.mxu0 0.0
  %2397 = vmatprep.subr.mxu0 0.0
  %2398 = vmatpush1.msra.mxu0 0.0
  %2399 = vmatprep.subr.mxu0 0.0
  %2400 = vmatpush1.msra.mxu0 0.0
  %2401 = vmatprep.subr.mxu0 0.0
  %2402 = vmatpush1.msra.mxu0 0.0
  %2403 = vmatprep.subr.mxu0 0.0
  %2404 = vmatpush1.msra.mxu0 0.0
  %2405 = vmatprep.subr.mxu0 0.0
  %2406 = vmatpush1.msra.mxu0 0.0
  %2407 = vmatprep.subr.mxu0 0.0
  %2408 = vmatpush1.msra.mxu0 0.0
  %2409 = vmatprep.subr.mxu0 0.0
  %2410 = vmatpush1.msra.mxu0 0.0
  %2411 = vmatprep.subr.mxu0 0.0
  %2412 = vmatpush1.msra.mxu0 0.0
  %2413 = vmatprep.subr.mxu0 0.0
  %2414 = vmatpush1.msra.mxu0 0.0
  %2415 = vmatprep.subr.mxu0 0.0
  %2416 = vmatpush1.msra.mxu0 0.0
  %2417 = vmatprep.subr.mxu0 0.0
  %2418 = vmatpush1.msra.mxu0 0.0
  %2419 = vmatprep.subr.mxu0 0.0
  %2420 = vmatpush1.msra.mxu0 0.0
  %2421 = vmatprep.subr.mxu0 0.0
  %2422 = vmatpush1.msra.mxu0 0.0
  %2423 = vmatprep.subr.mxu0 0.0
  %2424 = vmatpush1.msra.mxu0 0.0
  %2425 = vmatprep.subr.mxu0 0.0
  %2426 = vmatpush1.msra.mxu0 0.0
  %2427 = vmatprep.subr.mxu0 0.0
  %2428 = vmatpush1.msra.mxu0 0.0
  %2429 = vmatprep.subr.mxu0 0.0
  %2430 = vmatpush1.msra.mxu0 0.0
  %2431 = vmatprep.subr.mxu0 0.0
  %2432 = vmatpush1.msra.mxu0 0.0
  %2433 = vmatprep.subr.mxu0 0.0
  %2434 = vmatpush1.msra.mxu0 0.0
  %2435 = vmatprep.subr.mxu0 0.0
  %2436 = vmatpush1.msra.mxu0 0.0
  %2437 = vmatprep.subr.mxu0 0.0
  %2438 = vmatpush1.msra.mxu0 0.0
  %2439 = vmatprep.subr.mxu0 0.0
  %2440 = vmatpush1.msra.mxu0 0.0
  %2441 = vmatprep.subr.mxu0 0.0
  %2442 = vmatpush1.msra.mxu0 0.0
  %2443 = vmatprep.mubr.f32.mxu0 0.0
  %2444 = vmatmul.mubr.f32.gmra.mrb[0].mxu0 %v2377
  %v2445 = vpop.f32.mrb[0].mxu0
  %v2446 = vadd.f32 %v2371, %v2445
  %v2447 = vpop.f32.mrb[0].mxu0
  %2448 = vdwg.mxu0
  %v2449 = vadd.f32 %v2446, %v377
  %v2450 = vxor.u32 %v2449, 2147483648
  %v2451 = vmul.f32 %v2450, 1.442695
  %v2452 = vpow.pop %v2451
  %v2453 = vadd.f32 %v2452, 1.0
  %v2454 = vrcp.pop %v2453
  %v2455 = vmul.f32 1.0, %v2454
  %v2456 = vtanh.pop %v2449
  %v2457 = vmul.f32 %v2455, %v2122
  %2459 = vrot.lane.b32.xlu0 %v2456, 64
  %v2460 = vpop.permute.xlu0 %2459
  %v2462 = vmul.f32 %v2455, %v2460
  %2464 = vrot.lane.b32.xlu0 %v2462, 32
  %v2465 = vpop.permute.xlu0 %2464
  %v2467 = vadd.f32 %v2457, %v2465
  %v2468 = vtanh.pop %v2467
  %2470 = vrot.lane.b32.xlu0 %v2468, 64
  %v2471 = vpop.permute.xlu0 %2470
  %v2473 = vmul.f32 %v2455, %v2471
  %s2474 = scalar_lea.vmem %s0, 56
  %v2475 = vld [vmem:[%s2474] sm:$0xff]
  %2476 = vmatprep.subr.mxu0 0.0
  %2477 = vmatpush1.msra.mxu0 %v38
  %2478 = vmatprep.subr.mxu0 0.0
  %2479 = vmatpush1.msra.mxu0 %v39
  %2480 = vmatprep.subr.mxu0 0.0
  %2481 = vmatpush1.msra.mxu0 %v40
  %2482 = vmatprep.subr.mxu0 0.0
  %2483 = vmatpush1.msra.mxu0 %v41
  %2484 = vmatprep.subr.mxu0 0.0
  %2485 = vmatpush1.msra.mxu0 0.0
  %2486 = vmatprep.subr.mxu0 0.0
  %2487 = vmatpush1.msra.mxu0 0.0
  %2488 = vmatprep.subr.mxu0 0.0
  %2489 = vmatpush1.msra.mxu0 0.0
  %2490 = vmatprep.subr.mxu0 0.0
  %2491 = vmatpush1.msra.mxu0 0.0
  %2492 = vmatprep.subr.mxu0 0.0
  %2493 = vmatpush1.msra.mxu0 0.0
  %2494 = vmatprep.subr.mxu0 0.0
  %2495 = vmatpush1.msra.mxu0 0.0
  %2496 = vmatprep.subr.mxu0 0.0
  %2497 = vmatpush1.msra.mxu0 0.0
  %2498 = vmatprep.subr.mxu0 0.0
  %2499 = vmatpush1.msra.mxu0 0.0
  %2500 = vmatprep.subr.mxu0 0.0
  %2501 = vmatpush1.msra.mxu0 0.0
  %2502 = vmatprep.subr.mxu0 0.0
  %2503 = vmatpush1.msra.mxu0 0.0
  %2504 = vmatprep.subr.mxu0 0.0
  %2505 = vmatpush1.msra.mxu0 0.0
  %2506 = vmatprep.subr.mxu0 0.0
  %2507 = vmatpush1.msra.mxu0 0.0
  %2508 = vmatprep.subr.mxu0 0.0
  %2509 = vmatpush1.msra.mxu0 0.0
  %2510 = vmatprep.subr.mxu0 0.0
  %2511 = vmatpush1.msra.mxu0 0.0
  %2512 = vmatprep.subr.mxu0 0.0
  %2513 = vmatpush1.msra.mxu0 0.0
  %2514 = vmatprep.subr.mxu0 0.0
  %2515 = vmatpush1.msra.mxu0 0.0
  %2516 = vmatprep.subr.mxu0 0.0
  %2517 = vmatpush1.msra.mxu0 0.0
  %2518 = vmatprep.subr.mxu0 0.0
  %2519 = vmatpush1.msra.mxu0 0.0
  %2520 = vmatprep.subr.mxu0 0.0
  %2521 = vmatpush1.msra.mxu0 0.0
  %2522 = vmatprep.subr.mxu0 0.0
  %2523 = vmatpush1.msra.mxu0 0.0
  %2524 = vmatprep.subr.mxu0 0.0
  %2525 = vmatpush1.msra.mxu0 0.0
  %2526 = vmatprep.subr.mxu0 0.0
  %2527 = vmatpush1.msra.mxu0 0.0
  %2528 = vmatprep.subr.mxu0 0.0
  %2529 = vmatpush1.msra.mxu0 0.0
  %2530 = vmatprep.subr.mxu0 0.0
  %2531 = vmatpush1.msra.mxu0 0.0
  %2532 = vmatprep.subr.mxu0 0.0
  %2533 = vmatpush1.msra.mxu0 0.0
  %2534 = vmatprep.subr.mxu0 0.0
  %2535 = vmatpush1.msra.mxu0 0.0
  %2536 = vmatprep.subr.mxu0 0.0
  %2537 = vmatpush1.msra.mxu0 0.0
  %2538 = vmatprep.subr.mxu0 0.0
  %2539 = vmatpush1.msra.mxu0 0.0
  %2540 = vmatprep.mubr.f32.mxu0 0.0
  %2541 = vmatmul.mubr.f32.gmra.mrb[0].mxu0 %v2377
  %v2542 = vpop.f32.mrb[0].mxu0
  %v2543 = vadd.f32 0.0, %v2542
  %v2544 = vpop.f32.mrb[0].mxu0
  %2545 = vdwg.mxu0
  %v2547 = vsel %vm123, %v2475, 0
  %2549 = vmatprep.subr.mxu0 0.0
  %2550 = vmatpush1.msra.mxu0 %v32
  %2551 = vmatprep.subr.mxu0 0.0
  %2552 = vmatpush1.msra.mxu0 %v33
  %2553 = vmatprep.subr.mxu0 0.0
  %2554 = vmatpush1.msra.mxu0 0.0
  %2555 = vmatprep.subr.mxu0 0.0
  %2556 = vmatpush1.msra.mxu0 0.0
  %2557 = vmatprep.subr.mxu0 0.0
  %2558 = vmatpush1.msra.mxu0 0.0
  %2559 = vmatprep.subr.mxu0 0.0
  %2560 = vmatpush1.msra.mxu0 0.0
  %2561 = vmatprep.subr.mxu0 0.0
  %2562 = vmatpush1.msra.mxu0 0.0
  %2563 = vmatprep.subr.mxu0 0.0
  %2564 = vmatpush1.msra.mxu0 0.0
  %2565 = vmatprep.subr.mxu0 0.0
  %2566 = vmatpush1.msra.mxu0 0.0
  %2567 = vmatprep.subr.mxu0 0.0
  %2568 = vmatpush1.msra.mxu0 0.0
  %2569 = vmatprep.subr.mxu0 0.0
  %2570 = vmatpush1.msra.mxu0 0.0
  %2571 = vmatprep.subr.mxu0 0.0
  %2572 = vmatpush1.msra.mxu0 0.0
  %2573 = vmatprep.subr.mxu0 0.0
  %2574 = vmatpush1.msra.mxu0 0.0
  %2575 = vmatprep.subr.mxu0 0.0
  %2576 = vmatpush1.msra.mxu0 0.0
  %2577 = vmatprep.subr.mxu0 0.0
  %2578 = vmatpush1.msra.mxu0 0.0
  %2579 = vmatprep.subr.mxu0 0.0
  %2580 = vmatpush1.msra.mxu0 0.0
  %2581 = vmatprep.subr.mxu0 0.0
  %2582 = vmatpush1.msra.mxu0 0.0
  %2583 = vmatprep.subr.mxu0 0.0
  %2584 = vmatpush1.msra.mxu0 0.0
  %2585 = vmatprep.subr.mxu0 0.0
  %2586 = vmatpush1.msra.mxu0 0.0
  %2587 = vmatprep.subr.mxu0 0.0
  %2588 = vmatpush1.msra.mxu0 0.0
  %2589 = vmatprep.subr.mxu0 0.0
  %2590 = vmatpush1.msra.mxu0 0.0
  %2591 = vmatprep.subr.mxu0 0.0
  %2592 = vmatpush1.msra.mxu0 0.0
  %2593 = vmatprep.subr.mxu0 0.0
  %2594 = vmatpush1.msra.mxu0 0.0
  %2595 = vmatprep.subr.mxu0 0.0
  %2596 = vmatpush1.msra.mxu0 0.0
  %2597 = vmatprep.subr.mxu0 0.0
  %2598 = vmatpush1.msra.mxu0 0.0
  %2599 = vmatprep.subr.mxu0 0.0
  %2600 = vmatpush1.msra.mxu0 0.0
  %2601 = vmatprep.subr.mxu0 0.0
  %2602 = vmatpush1.msra.mxu0 0.0
  %2603 = vmatprep.subr.mxu0 0.0
  %2604 = vmatpush1.msra.mxu0 0.0
  %2605 = vmatprep.subr.mxu0 0.0
  %2606 = vmatpush1.msra.mxu0 0.0
  %2607 = vmatprep.subr.mxu0 0.0
  %2608 = vmatpush1.msra.mxu0 0.0
  %2609 = vmatprep.subr.mxu0 0.0
  %2610 = vmatpush1.msra.mxu0 0.0
  %2611 = vmatprep.subr.mxu0 0.0
  %2612 = vmatpush1.msra.mxu0 0.0
  %2613 = vmatprep.mubr.f32.mxu0 0.0
  %2614 = vmatmul.mubr.f32.gmra.mrb[0].mxu0 %v2547
  %v2615 = vpop.f32.mrb[0].mxu0
  %v2616 = vadd.f32 %v2543, %v2615
  %v2617 = vpop.f32.mrb[0].mxu0
  %2618 = vdwg.mxu0
  %v2619 = vadd.f32 %v2616, %v201
  %v2620 = vxor.u32 %v2619, 2147483648
  %v2621 = vmul.f32 %v2620, 1.442695
  %v2622 = vpow.pop %v2621
  %v2623 = vadd.f32 %v2622, 1.0
  %v2624 = vrcp.pop %v2623
  %v2625 = vmul.f32 1.0, %v2624
  %v2626 = vtanh.pop %v2619
  %v2627 = vmul.f32 %v2625, %v2292
  %2629 = vrot.lane.b32.xlu0 %v2626, 64
  %v2630 = vpop.permute.xlu0 %2629
  %v2632 = vmul.f32 %v2625, %v2630
  %2634 = vrot.lane.b32.xlu0 %v2632, 32
  %v2635 = vpop.permute.xlu0 %2634
  %v2637 = vadd.f32 %v2627, %v2635
  %v2638 = vtanh.pop %v2637
  %2640 = vrot.lane.b32.xlu0 %v2638, 64
  %v2641 = vpop.permute.xlu0 %2640
  %v2643 = vmul.f32 %v2625, %v2641
  %2645 = vrot.lane.b32.xlu0 %v2473, 32
  %v2646 = vpop.permute.xlu0 %2645
  %v2647 = vsel %vm49, %v2646, 0
  %2649 = vmatprep.subr.mxu0 0.0
  %2650 = vmatpush1.msra.mxu0 %v42
  %2651 = vmatprep.subr.mxu0 0.0
  %2652 = vmatpush1.msra.mxu0 %v43
  %2653 = vmatprep.subr.mxu0 0.0
  %2654 = vmatpush1.msra.mxu0 %v44
  %2655 = vmatprep.subr.mxu0 0.0
  %2656 = vmatpush1.msra.mxu0 %v45
  %2657 = vmatprep.subr.mxu0 0.0
  %2658 = vmatpush1.msra.mxu0 0.0
  %2659 = vmatprep.subr.mxu0 0.0
  %2660 = vmatpush1.msra.mxu0 0.0
  %2661 = vmatprep.subr.mxu0 0.0
  %2662 = vmatpush1.msra.mxu0 0.0
  %2663 = vmatprep.subr.mxu0 0.0
  %2664 = vmatpush1.msra.mxu0 0.0
  %2665 = vmatprep.subr.mxu0 0.0
  %2666 = vmatpush1.msra.mxu0 0.0
  %2667 = vmatprep.subr.mxu0 0.0
  %2668 = vmatpush1.msra.mxu0 0.0
  %2669 = vmatprep.subr.mxu0 0.0
  %2670 = vmatpush1.msra.mxu0 0.0
  %2671 = vmatprep.subr.mxu0 0.0
  %2672 = vmatpush1.msra.mxu0 0.0
  %2673 = vmatprep.subr.mxu0 0.0
  %2674 = vmatpush1.msra.mxu0 0.0
  %2675 = vmatprep.subr.mxu0 0.0
  %2676 = vmatpush1.msra.mxu0 0.0
  %2677 = vmatprep.subr.mxu0 0.0
  %2678 = vmatpush1.msra.mxu0 0.0
  %2679 = vmatprep.subr.mxu0 0.0
  %2680 = vmatpush1.msra.mxu0 0.0
  %2681 = vmatprep.subr.mxu0 0.0
  %2682 = vmatpush1.msra.mxu0 0.0
  %2683 = vmatprep.subr.mxu0 0.0
  %2684 = vmatpush1.msra.mxu0 0.0
  %2685 = vmatprep.subr.mxu0 0.0
  %2686 = vmatpush1.msra.mxu0 0.0
  %2687 = vmatprep.subr.mxu0 0.0
  %2688 = vmatpush1.msra.mxu0 0.0
  %2689 = vmatprep.subr.mxu0 0.0
  %2690 = vmatpush1.msra.mxu0 0.0
  %2691 = vmatprep.subr.mxu0 0.0
  %2692 = vmatpush1.msra.mxu0 0.0
  %2693 = vmatprep.subr.mxu0 0.0
  %2694 = vmatpush1.msra.mxu0 0.0
  %2695 = vmatprep.subr.mxu0 0.0
  %2696 = vmatpush1.msra.mxu0 0.0
  %2697 = vmatprep.subr.mxu0 0.0
  %2698 = vmatpush1.msra.mxu0 0.0
  %2699 = vmatprep.subr.mxu0 0.0
  %2700 = vmatpush1.msra.mxu0 0.0
  %2701 = vmatprep.subr.mxu0 0.0
  %2702 = vmatpush1.msra.mxu0 0.0
  %2703 = vmatprep.subr.mxu0 0.0
  %2704 = vmatpush1.msra.mxu0 0.0
  %2705 = vmatprep.subr.mxu0 0.0
  %2706 = vmatpush1.msra.mxu0 0.0
  %2707 = vmatprep.subr.mxu0 0.0
  %2708 = vmatpush1.msra.mxu0 0.0
  %2709 = vmatprep.subr.mxu0 0.0
  %2710 = vmatpush1.msra.mxu0 0.0
  %2711 = vmatprep.subr.mxu0 0.0
  %2712 = vmatpush1.msra.mxu0 0.0
  %2713 = vmatprep.mubr.f32.mxu0 0.0
  %2714 = vmatmul.mubr.f32.gmra.mrb[0].mxu0 %v2647
  %v2715 = vpop.f32.mrb[0].mxu0
  %v2716 = vadd.f32 0.0, %v2715
  %v2717 = vpop.f32.mrb[0].mxu0
  %2718 = vdwg.mxu0
  %2720 = vrot.lane.b32.xlu0 %v2643, 32
  %v2721 = vpop.permute.xlu0 %2720
  %v2722 = vsel %vm49, %v2721, 0
  %2724 = vmatprep.subr.mxu0 0.0
  %2725 = vmatpush1.msra.mxu0 %v34
  %2726 = vmatprep.subr.mxu0 0.0
  %2727 = vmatpush1.msra.mxu0 %v35
  %2728 = vmatprep.subr.mxu0 0.0
  %2729 = vmatpush1.msra.mxu0 %v36
  %2730 = vmatprep.subr.mxu0 0.0
  %2731 = vmatpush1.msra.mxu0 %v37
  %2732 = vmatprep.subr.mxu0 0.0
  %2733 = vmatpush1.msra.mxu0 0.0
  %2734 = vmatprep.subr.mxu0 0.0
  %2735 = vmatpush1.msra.mxu0 0.0
  %2736 = vmatprep.subr.mxu0 0.0
  %2737 = vmatpush1.msra.mxu0 0.0
  %2738 = vmatprep.subr.mxu0 0.0
  %2739 = vmatpush1.msra.mxu0 0.0
  %2740 = vmatprep.subr.mxu0 0.0
  %2741 = vmatpush1.msra.mxu0 0.0
  %2742 = vmatprep.subr.mxu0 0.0
  %2743 = vmatpush1.msra.mxu0 0.0
  %2744 = vmatprep.subr.mxu0 0.0
  %2745 = vmatpush1.msra.mxu0 0.0
  %2746 = vmatprep.subr.mxu0 0.0
  %2747 = vmatpush1.msra.mxu0 0.0
  %2748 = vmatprep.subr.mxu0 0.0
  %2749 = vmatpush1.msra.mxu0 0.0
  %2750 = vmatprep.subr.mxu0 0.0
  %2751 = vmatpush1.msra.mxu0 0.0
  %2752 = vmatprep.subr.mxu0 0.0
  %2753 = vmatpush1.msra.mxu0 0.0
  %2754 = vmatprep.subr.mxu0 0.0
  %2755 = vmatpush1.msra.mxu0 0.0
  %2756 = vmatprep.subr.mxu0 0.0
  %2757 = vmatpush1.msra.mxu0 0.0
  %2758 = vmatprep.subr.mxu0 0.0
  %2759 = vmatpush1.msra.mxu0 0.0
  %2760 = vmatprep.subr.mxu0 0.0
  %2761 = vmatpush1.msra.mxu0 0.0
  %2762 = vmatprep.subr.mxu0 0.0
  %2763 = vmatpush1.msra.mxu0 0.0
  %2764 = vmatprep.subr.mxu0 0.0
  %2765 = vmatpush1.msra.mxu0 0.0
  %2766 = vmatprep.subr.mxu0 0.0
  %2767 = vmatpush1.msra.mxu0 0.0
  %2768 = vmatprep.subr.mxu0 0.0
  %2769 = vmatpush1.msra.mxu0 0.0
  %2770 = vmatprep.subr.mxu0 0.0
  %2771 = vmatpush1.msra.mxu0 0.0
  %2772 = vmatprep.subr.mxu0 0.0
  %2773 = vmatpush1.msra.mxu0 0.0
  %2774 = vmatprep.subr.mxu0 0.0
  %2775 = vmatpush1.msra.mxu0 0.0
  %2776 = vmatprep.subr.mxu0 0.0
  %2777 = vmatpush1.msra.mxu0 0.0
  %2778 = vmatprep.subr.mxu0 0.0
  %2779 = vmatpush1.msra.mxu0 0.0
  %2780 = vmatprep.subr.mxu0 0.0
  %2781 = vmatpush1.msra.mxu0 0.0
  %2782 = vmatprep.subr.mxu0 0.0
  %2783 = vmatpush1.msra.mxu0 0.0
  %2784 = vmatprep.subr.mxu0 0.0
  %2785 = vmatpush1.msra.mxu0 0.0
  %2786 = vmatprep.subr.mxu0 0.0
  %2787 = vmatpush1.msra.mxu0 0.0
  %2788 = vmatprep.mubr.f32.mxu0 0.0
  %2789 = vmatmul.mubr.f32.gmra.mrb[0].mxu0 %v2722
  %v2790 = vpop.f32.mrb[0].mxu0
  %v2791 = vadd.f32 %v2716, %v2790
  %v2792 = vpop.f32.mrb[0].mxu0
  %2793 = vdwg.mxu0
  %v2794 = vadd.f32 %v2791, %v377
  %v2795 = vxor.u32 %v2794, 2147483648
  %v2796 = vmul.f32 %v2795, 1.442695
  %v2797 = vpow.pop %v2796
  %v2798 = vadd.f32 %v2797, 1.0
  %v2799 = vrcp.pop %v2798
  %v2800 = vmul.f32 1.0, %v2799
  %v2801 = vtanh.pop %v2794
  %v2802 = vmul.f32 %v2800, %v2467
  %2804 = vrot.lane.b32.xlu0 %v2801, 64
  %v2805 = vpop.permute.xlu0 %2804
  %v2807 = vmul.f32 %v2800, %v2805
  %2809 = vrot.lane.b32.xlu0 %v2807, 32
  %v2810 = vpop.permute.xlu0 %2809
  %v2812 = vadd.f32 %v2802, %v2810
  %v2813 = vtanh.pop %v2812
  %2815 = vrot.lane.b32.xlu0 %v2813, 64
  %v2816 = vpop.permute.xlu0 %2815
  %v2818 = vmul.f32 %v2800, %v2816
  %v2819 = vld [vmem:[%s7] sm:$0xff]
  %v2820 = vld [vmem:[%s7 + $0x8] sm:$0xff]
  %v2821 = vld [vmem:[%s7 + $0x10] sm:$0xff]
  %v2822 = vld [vmem:[%s7 + $0x18] sm:$0xff]
  %v2823 = vld [vmem:[%s8] sm:$0x1]
  %v2825 = vlaneseq
  %v2826 = vshrl.u32 %v2825, 7
  %v2827 = vsub.s32 0, %v2826
  %v2828 = vrot.slane %v2823, %v2827
  %2831 = vrot.lane.b32.xlu0 %v2818, 32
  %v2832 = vpop.permute.xlu0 %2831
  %v2833 = vsel %vm49, %v2832, 0
  %2835 = vmatprep.subr.mxu0 0.0
  %2836 = vmatpush1.msra.mxu0 %v2819
  %2837 = vmatprep.subr.mxu0 0.0
  %2838 = vmatpush1.msra.mxu0 %v2820
  %2839 = vmatprep.subr.mxu0 0.0
  %2840 = vmatpush1.msra.mxu0 %v2821
  %2841 = vmatprep.subr.mxu0 0.0
  %2842 = vmatpush1.msra.mxu0 %v2822
  %2843 = vmatprep.subr.mxu0 0.0
  %2844 = vmatpush1.msra.mxu0 0.0
  %2845 = vmatprep.subr.mxu0 0.0
  %2846 = vmatpush1.msra.mxu0 0.0
  %2847 = vmatprep.subr.mxu0 0.0
  %2848 = vmatpush1.msra.mxu0 0.0
  %2849 = vmatprep.subr.mxu0 0.0
  %2850 = vmatpush1.msra.mxu0 0.0
  %2851 = vmatprep.subr.mxu0 0.0
  %2852 = vmatpush1.msra.mxu0 0.0
  %2853 = vmatprep.subr.mxu0 0.0
  %2854 = vmatpush1.msra.mxu0 0.0
  %2855 = vmatprep.subr.mxu0 0.0
  %2856 = vmatpush1.msra.mxu0 0.0
  %2857 = vmatprep.subr.mxu0 0.0
  %2858 = vmatpush1.msra.mxu0 0.0
  %2859 = vmatprep.subr.mxu0 0.0
  %2860 = vmatpush1.msra.mxu0 0.0
  %2861 = vmatprep.subr.mxu0 0.0
  %2862 = vmatpush1.msra.mxu0 0.0
  %2863 = vmatprep.subr.mxu0 0.0
  %2864 = vmatpush1.msra.mxu0 0.0
  %2865 = vmatprep.subr.mxu0 0.0
  %2866 = vmatpush1.msra.mxu0 0.0
  %2867 = vmatprep.subr.mxu0 0.0
  %2868 = vmatpush1.msra.mxu0 0.0
  %2869 = vmatprep.subr.mxu0 0.0
  %2870 = vmatpush1.msra.mxu0 0.0
  %2871 = vmatprep.subr.mxu0 0.0
  %2872 = vmatpush1.msra.mxu0 0.0
  %2873 = vmatprep.subr.mxu0 0.0
  %2874 = vmatpush1.msra.mxu0 0.0
  %2875 = vmatprep.subr.mxu0 0.0
  %2876 = vmatpush1.msra.mxu0 0.0
  %2877 = vmatprep.subr.mxu0 0.0
  %2878 = vmatpush1.msra.mxu0 0.0
  %2879 = vmatprep.subr.mxu0 0.0
  %2880 = vmatpush1.msra.mxu0 0.0
  %2881 = vmatprep.subr.mxu0 0.0
  %2882 = vmatpush1.msra.mxu0 0.0
  %2883 = vmatprep.subr.mxu0 0.0
  %2884 = vmatpush1.msra.mxu0 0.0
  %2885 = vmatprep.subr.mxu0 0.0
  %2886 = vmatpush1.msra.mxu0 0.0
  %2887 = vmatprep.subr.mxu0 0.0
  %2888 = vmatpush1.msra.mxu0 0.0
  %2889 = vmatprep.subr.mxu0 0.0
  %2890 = vmatpush1.msra.mxu0 0.0
  %2891 = vmatprep.subr.mxu0 0.0
  %2892 = vmatpush1.msra.mxu0 0.0
  %2893 = vmatprep.subr.mxu0 0.0
  %2894 = vmatpush1.msra.mxu0 0.0
  %2895 = vmatprep.subr.mxu0 0.0
  %2896 = vmatpush1.msra.mxu0 0.0
  %2897 = vmatprep.subr.mxu0 0.0
  %2898 = vmatpush1.msra.mxu0 0.0
  %2899 = vmatprep.mubr.f32.mxu0 0.0
  %2900 = vmatmul.mubr.f32.gmra.mrb[0].mxu0 %v2833
  %v2901 = vpop.f32.mrb[0].mxu0
  %v2902 = vadd.f32 %v2828, %v2901
  %v2903 = vpop.f32.mrb[0].mxu0
  %2904 = vdwg.mxu0
  %vm2905 = vcmask 80896
  %2906 = vst.msk [vmem:[%s9] sm:$0xff] %vm2905, %v2902
  // Predicated region
  $region38: #{simple_lstm_forward.1} parent=0 // pred_check
    _
  $region39: #{simple_lstm_forward.1} parent=0 // pred_check_branch
    %2908 = sbr.rel (0) target = $region41
  $region40: #{simple_lstm_forward.1} parent=0 // pred_region
    _
  $region41: #{simple_lstm_forward.1} parent=0 // pred_fallthru
    _
  // Predicated region
  $region42: #{simple_lstm_forward.1} parent=0 // pred_check
    _
  $region43: #{simple_lstm_forward.1} parent=0 // pred_check_branch
    %2910 = sbr.rel (0) target = $region45
  $region44: #{simple_lstm_forward.1} parent=0 // pred_region
    _
  $region45: #{simple_lstm_forward.1} parent=0 // pred_fallthru
    _

</llo_original>
